<compile_context>
chip_gen: v7x
topology: tpu7x:2x2x1
jax: 0.10.0
libtpu: 0.0.40
codegen_flags: <defaults>
</compile_context>

<pallas_src>
import math
import functools

import jax
import jax.numpy as jnp
from jax.experimental import pallas as pl
from jax.experimental.pallas import tpu as pltpu


# ----------------------------- Pallas kernel --------------------------------

def _layernorm(x, gamma, beta, eps=1e-5):
    mu = jnp.mean(x, axis=-1, keepdims=True)
    var = jnp.mean((x - mu) ** 2, axis=-1, keepdims=True)
    return (x - mu) * jax.lax.rsqrt(var + eps) * gamma + beta


def fused_encoder_kernel(x_ref, maskb_ref,
                         wqkv_ref, bqkv_ref, wo_ref, bo_ref,
                         w1_ref, b1_ref, w2_ref, b2_ref,
                         g1_ref, be1_ref, g2_ref, be2_ref,
                         wc_ref, bc_ref,
                         o_ref, h_ref, *, num_heads, batch, seq):
    """One grid step == one encoder layer; last step also runs the classifier."""
    layer = pl.program_id(0)
    n_layers = pl.num_programs(0)

    H = num_heads
    B = batch
    S = seq

    # Seed the persistent activation scratch on the first layer.
    @pl.when(layer == 0)
    def _():
        h_ref[...] = x_ref[...]

    x = h_ref[...]                                   # (B*S, D) f32, resident in VMEM
    N, D = x.shape
    dh = D // H
    scale = 1.0 / math.sqrt(dh)

    x_bf = x.astype(jnp.bfloat16)

    # ---- fused QKV projection: one lane-dense (N, D) @ (D, 3D) matmul ----
    qkv = jnp.dot(x_bf, wqkv_ref[0],
                  preferred_element_type=jnp.float32) + bqkv_ref[0]   # (N, 3D) f32
    q2 = qkv[:, :D]                                  # (N, D) static 128-lane slices
    k2 = qkv[:, D:2 * D]
    v2 = qkv[:, 2 * D:]

    mask_bias = maskb_ref[...]                       # (B, 1, S) additive key-mask bias

    # ---- attention: per-head lane slices, batched over B with 3D einsums ----
    ctx_heads = []
    for h in range(H):                               # static Python loop, H = 4
        lo, hi = h * dh, (h + 1) * dh
        qh = q2[:, lo:hi].reshape(B, S, dh).astype(jnp.bfloat16)      # (B, S, dh)
        kh = k2[:, lo:hi].reshape(B, S, dh).astype(jnp.bfloat16)
        vh = v2[:, lo:hi].reshape(B, S, dh).astype(jnp.bfloat16)

        s = jnp.einsum('bqe,bke->bqk', qh, kh,
                       preferred_element_type=jnp.float32) * scale    # (B, S, S)
        s = s + mask_bias                                             # broadcast over queries
        s = s - jnp.max(s, axis=-1, keepdims=True)
        p = jnp.exp(s)
        p = p * pl.reciprocal(jnp.sum(p, axis=-1, keepdims=True), approx=False)
        ctx_heads.append(
            jnp.einsum('bqk,bke->bqe', p.astype(jnp.bfloat16), vh,
                       preferred_element_type=jnp.float32))           # (B, S, dh)

    ctx = jnp.concatenate(ctx_heads, axis=-1).reshape(N, D)           # (N, D) f32

    # ---- output projection: head reduction folded into the MXU K dim ----
    attn = jnp.dot(ctx.astype(jnp.bfloat16), wo_ref[0],
                   preferred_element_type=jnp.float32) + bo_ref[0]    # (N, D)

    x1 = _layernorm(x + attn, g1_ref[0], be1_ref[0])

    # ---- FFN ----
    ff = jnp.dot(x1.astype(jnp.bfloat16), w1_ref[0],
                 preferred_element_type=jnp.float32) + b1_ref[0]
    ff = jnp.maximum(ff, 0.0)
    ff = jnp.dot(ff.astype(jnp.bfloat16), w2_ref[0],
                 preferred_element_type=jnp.float32) + b2_ref[0]

    x2 = _layernorm(x1 + ff, g2_ref[0], be2_ref[0])
    h_ref[...] = x2                                  # stays in VMEM for the next layer

    # ---- classifier folded into the last layer step ----
    @pl.when(layer == n_layers - 1)
    def _():
        o_ref[...] = (jnp.dot(x2.astype(jnp.bfloat16), wc_ref[...],
                              preferred_element_type=jnp.float32)
                      + bc_ref[...]).astype(o_ref.dtype)


# ------------------------------- wrapper --------------------------------------

def fused_encoder_classifier(x2d, mask_bias, params, *, num_heads, batch, seq):
    N, D = x2d.shape
    L = params["wqkv"].shape[0]
    d_ff = params["w1"].shape[2]
    tags_pad = params["wc_pad"].shape[1]
    H = num_heads
    S = seq
    B = batch
    dh = D // H

    def per_layer(shape):                    # layer-stacked weight: block index follows l
        nd = len(shape)
        return pl.BlockSpec((1,) + shape, lambda l, _nd=nd: (l,) + (0,) * _nd)

    def const(shape):                        # resident across all layer steps
        nd = len(shape)
        return pl.BlockSpec(shape, lambda l, _nd=nd: (0,) * _nd)

    in_specs = [
        const((N, D)),                       # x2d
        const((B, 1, S)),                    # mask bias
        per_layer((D, 3 * D)), per_layer((1, 3 * D)),    # fused Wqkv, bqkv
        per_layer((D, D)), per_layer((1, D)),            # Wo, bo
        per_layer((D, d_ff)), per_layer((1, d_ff)),      # W1, b1
        per_layer((d_ff, D)), per_layer((1, D)),         # W2, b2
        per_layer((1, D)), per_layer((1, D)),            # gamma1, beta1
        per_layer((1, D)), per_layer((1, D)),            # gamma2, beta2
        const((D, tags_pad)), const((1, tags_pad)),      # classifier (lane-dense padded)
    ]

    flops = int(L * (2 * N * D * 3 * D              # fused QKV
                     + 4 * B * H * S * S * dh       # scores + context
                     + 2 * N * D * D                # output projection
                     + 4 * N * D * d_ff)            # FFN
                + 2 * N * D * tags_pad)             # classifier
    bytes_accessed = int(2 * L * (3 * D * D + D * D + 2 * D * d_ff)   # bf16 weights
                         + 2 * D * tags_pad
                         + 4 * (N * D + N * tags_pad + B * S))
    cost = pl.CostEstimate(flops=flops,
                           transcendentals=int(L * B * H * S * S),
                           bytes_accessed=bytes_accessed)

    kernel = functools.partial(fused_encoder_kernel,
                               num_heads=num_heads, batch=batch, seq=seq)
    return pl.pallas_call(
        kernel,
        out_shape=jax.ShapeDtypeStruct((N, tags_pad), jnp.float32),
        grid=(L,),
        in_specs=in_specs,
        out_specs=pl.BlockSpec((N, tags_pad), lambda l: (0, 0)),
        scratch_shapes=[pltpu.VMEM((N, D), jnp.float32)],
        compiler_params=pltpu.CompilerParams(dimension_semantics=("arbitrary",)),
        cost_estimate=cost,
    )(x2d, mask_bias,
      params["wqkv"], params["bqkv"], params["wo"], params["bo"],
      params["w1"], params["b1"], params["w2"], params["b2"],
      params["g1"], params["be1"], params["g2"], params["be2"],
      params["wc_pad"], params["bc_pad"])


# ----------------------------- model definition ------------------------------

def sinusoidal_pe(seq_len, d_model):
    pos = jnp.arange(seq_len, dtype=jnp.float32)[:, None]
    i = jnp.arange(0, d_model, 2, dtype=jnp.float32)[None, :]
    div = jnp.exp(-math.log(10000.0) * i / d_model)
    pe = jnp.zeros((seq_len, d_model), jnp.float32)
    pe = pe.at[:, 0::2].set(jnp.sin(pos * div))
    pe = pe.at[:, 1::2].set(jnp.cos(pos * div))
    return pe


def init_params(key, vocab_size, num_tags, d_model, d_ff, num_layers, num_heads):
    tags_pad = max(128, ((num_tags + 127) // 128) * 128)   # lane-dense classifier width

    keys = jax.random.split(key, 2 + num_layers)
    wc = 0.02 * jax.random.normal(keys[1], (d_model, num_tags), jnp.float32)
    wc_pad = jnp.zeros((d_model, tags_pad), jnp.float32).at[:, :num_tags].set(wc)

    wqkv_l, wo_l, w1_l, w2_l = [], [], [], []
    for l in range(num_layers):
        lk = jax.random.split(keys[2 + l], 6)
        wq = 0.02 * jax.random.normal(lk[0], (d_model, d_model), jnp.float32)
        wk = 0.02 * jax.random.normal(lk[1], (d_model, d_model), jnp.float32)
        wv = 0.02 * jax.random.normal(lk[2], (d_model, d_model), jnp.float32)
        wo = 0.02 * jax.random.normal(lk[3], (d_model, d_model), jnp.float32)
        w1 = 0.02 * jax.random.normal(lk[4], (d_model, d_ff), jnp.float32)
        w2 = 0.02 * jax.random.normal(lk[5], (d_ff, d_model), jnp.float32)
        # Fused QKV weight (D, 3D): Q/K/V each a contiguous 128-lane block, heads are the
        # natural column sub-blocks (same layout as nn.Linear -> no in-kernel permutes).
        wqkv_l.append(jnp.concatenate([wq, wk, wv], axis=1))
        wo_l.append(wo)
        w1_l.append(w1)
        w2_l.append(w2)

    L = num_layers
    params = {
        "emb": 0.02 * jax.random.normal(keys[0], (vocab_size, d_model), jnp.float32),
        "num_tags": num_tags,
        # layer-stacked (leading L axis), bf16 weights / f32 biases & LN params
        "wqkv": jnp.stack(wqkv_l).astype(jnp.bfloat16),          # (L, D, 3D)
        "bqkv": jnp.zeros((L, 1, 3 * d_model), jnp.float32),
        "wo": jnp.stack(wo_l).astype(jnp.bfloat16),              # (L, D, D)
        "bo": jnp.zeros((L, 1, d_model), jnp.float32),
        "w1": jnp.stack(w1_l).astype(jnp.bfloat16),              # (L, D, d_ff)
        "b1": jnp.zeros((L, 1, d_ff), jnp.float32),
        "w2": jnp.stack(w2_l).astype(jnp.bfloat16),              # (L, d_ff, D)
        "b2": jnp.zeros((L, 1, d_model), jnp.float32),
        "g1": jnp.ones((L, 1, d_model), jnp.float32),
        "be1": jnp.zeros((L, 1, d_model), jnp.float32),
        "g2": jnp.ones((L, 1, d_model), jnp.float32),
        "be2": jnp.zeros((L, 1, d_model), jnp.float32),
        "wc_pad": wc_pad.astype(jnp.bfloat16),                   # (D, tags_pad)
        "bc_pad": jnp.zeros((1, tags_pad), jnp.float32),
    }
    return params


def bert_ner_forward(params, token_ids, mask=None, *, num_heads):
    # token_ids: (B, S) int32 ; mask: (B, S) bool (True = attend) or None
    B, S = token_ids.shape
    D = params["emb"].shape[1]
    num_tags = params["num_tags"]

    # Glue (embedding gather + positional encoding) in plain JAX.
    h = jnp.take(params["emb"], token_ids, axis=0) * math.sqrt(D)    # (B, S, D)
    h = (h + sinusoidal_pe(S, D)[None]).astype(jnp.float32)

    if mask is None:
        mask_bias = jnp.zeros((B, 1, S), jnp.float32)
    else:
        mask_bias = jnp.where(mask[:, None, :], 0.0, -1e9).astype(jnp.float32)

    x2d = h.reshape(B * S, D)
    # One fused Pallas call: all encoder layers + classifier.  Dropout = identity.
    logits_pad = fused_encoder_classifier(x2d, mask_bias, params,
                                          num_heads=num_heads, batch=B, seq=S)
    return logits_pad[:, :num_tags].reshape(B, S, num_tags)


# ---------------------------------- main --------------------------------------

if __name__ == "__main__":
    # Small shapes consistent with the module; d_model chosen lane-dense (128).
    vocab_size, num_tags = 50, 9
    d_model, num_heads, d_ff, num_layers = 128, 4, 256, 2
    batch, seq = 2, 8

    key = jax.random.PRNGKey(0)
    pkey, xkey = jax.random.split(key)
    params = init_params(pkey, vocab_size, num_tags, d_model, d_ff, num_layers, num_heads)

    token_ids = jax.random.randint(xkey, (batch, seq), 0, vocab_size, jnp.int32)
    mask = jnp.ones((batch, seq), jnp.bool_)   # all tokens valid

    out = bert_ner_forward(params, token_ids, mask, num_heads=num_heads)
    jax.block_until_ready(out)
    assert out.shape == (batch, seq, num_tags)
    assert bool(jnp.all(jnp.isfinite(out)))
    print("KERNEL_OK")
</pallas_src>

<mosaic_0001>
module attributes {stable_mosaic.version = 11 : i64} {
  func.func @fused_encoder_kernel(%arg0: i32, %arg1: memref<16x128xf32, #tpu.memory_space<vmem>>, %arg2: memref<2x1x8xf32, #tpu.memory_space<vmem>>, %arg3: memref<1x128x384xbf16, #tpu.memory_space<vmem>>, %arg4: memref<1x1x384xf32, #tpu.memory_space<vmem>>, %arg5: memref<1x128x128xbf16, #tpu.memory_space<vmem>>, %arg6: memref<1x1x128xf32, #tpu.memory_space<vmem>>, %arg7: memref<1x128x256xbf16, #tpu.memory_space<vmem>>, %arg8: memref<1x1x256xf32, #tpu.memory_space<vmem>>, %arg9: memref<1x256x128xbf16, #tpu.memory_space<vmem>>, %arg10: memref<1x1x128xf32, #tpu.memory_space<vmem>>, %arg11: memref<1x1x128xf32, #tpu.memory_space<vmem>>, %arg12: memref<1x1x128xf32, #tpu.memory_space<vmem>>, %arg13: memref<1x1x128xf32, #tpu.memory_space<vmem>>, %arg14: memref<1x1x128xf32, #tpu.memory_space<vmem>>, %arg15: memref<128x128xbf16, #tpu.memory_space<vmem>>, %arg16: memref<1x128xf32, #tpu.memory_space<vmem>>, %arg17: memref<16x128xf32, #tpu.memory_space<vmem>>, %arg18: memref<16x128xf32, #tpu.memory_space<vmem>>) attributes {dimension_semantics = [#tpu.dimension_semantics<arbitrary>], iteration_bounds = array<i64: 2>, scalar_prefetch = 0 : i64, scratch_operands = 1 : i64, tpu.core_type = #tpu.core_type<tc>, window_params = [{pipeline_mode = #tpu.pipeline_mode<synchronous>, transform_indices = @transform_0, window_bounds = array<i64: 16, 128>}, {pipeline_mode = #tpu.pipeline_mode<synchronous>, transform_indices = @transform_1, window_bounds = array<i64: 2, 1, 8>}, {transform_indices = @transform_2, window_bounds = array<i64: 1, 128, 384>}, {transform_indices = @transform_3, window_bounds = array<i64: 1, 1, 384>}, {transform_indices = @transform_4, window_bounds = array<i64: 1, 128, 128>}, {transform_indices = @transform_5, window_bounds = array<i64: 1, 1, 128>}, {transform_indices = @transform_6, window_bounds = array<i64: 1, 128, 256>}, {transform_indices = @transform_7, window_bounds = array<i64: 1, 1, 256>}, {transform_indices = @transform_8, window_bounds = array<i64: 1, 256, 128>}, {transform_indices = @transform_9, window_bounds = array<i64: 1, 1, 128>}, {transform_indices = @transform_10, window_bounds = array<i64: 1, 1, 128>}, {transform_indices = @transform_11, window_bounds = array<i64: 1, 1, 128>}, {transform_indices = @transform_12, window_bounds = array<i64: 1, 1, 128>}, {transform_indices = @transform_13, window_bounds = array<i64: 1, 1, 128>}, {pipeline_mode = #tpu.pipeline_mode<synchronous>, transform_indices = @transform_14, window_bounds = array<i64: 128, 128>}, {pipeline_mode = #tpu.pipeline_mode<synchronous>, transform_indices = @transform_15, window_bounds = array<i64: 1, 128>}, {pipeline_mode = #tpu.pipeline_mode<synchronous>, transform_indices = @transform_16, window_bounds = array<i64: 16, 128>}]} {
    %c0_i32 = arith.constant 0 : i32
    %0 = arith.cmpi eq, %arg0, %c0_i32 : i32
    %1 = arith.extui %0 : i1 to i32
    %c0_i32_0 = arith.constant 0 : i32
    %2 = arith.cmpi ne, %1, %c0_i32_0 : i32
    scf.if %2 {
      %c0_78 = arith.constant 0 : index
      %c0_79 = arith.constant 0 : index
      %206 = vector.load %arg1[%c0_78, %c0_79] : memref<16x128xf32, #tpu.memory_space<vmem>>, vector<16x128xf32>
      %c0_80 = arith.constant 0 : index
      %c0_81 = arith.constant 0 : index
      %207 = vector.load %arg18[%c0_80, %c0_81] : memref<16x128xf32, #tpu.memory_space<vmem>>, vector<16x128xf32>
      tpu.vector_store %arg18[%c0_80, %c0_81], %206 {strides = array<i32>} : memref<16x128xf32, #tpu.memory_space<vmem>>, vector<16x128xf32>,
    } else {
    }
    %c0 = arith.constant 0 : index
    %c0_1 = arith.constant 0 : index
    %3 = vector.load %arg18[%c0, %c0_1] : memref<16x128xf32, #tpu.memory_space<vmem>>, vector<16x128xf32>
    %4 = arith.truncf %3 : vector<16x128xf32> to vector<16x128xbf16>
    %c0_2 = arith.constant 0 : index
    %c0_3 = arith.constant 0 : index
    %c0_4 = arith.constant 0 : index
    %5 = vector.load %arg3[%c0_2, %c0_3, %c0_4] : memref<1x128x384xbf16, #tpu.memory_space<vmem>>, vector<1x128x384xbf16>
    %6 = vector.shape_cast %5 : vector<1x128x384xbf16> to vector<128x384xbf16>
    %cst = arith.constant dense<0.000000e+00> : vector<16x384xf32>
    %7 = tpu.matmul %4, %6, %cst {dimension_numbers = #tpu.dot_dimension_numbers<[1], [0], [0], [1], [0, 0, 1, 1], [], []>} : vector<16x128xbf16>, vector<128x384xbf16>, vector<16x384xf32> -> vector<16x384xf32>
    %c0_5 = arith.constant 0 : index
    %c0_6 = arith.constant 0 : index
    %c0_7 = arith.constant 0 : index
    %8 = vector.load %arg4[%c0_5, %c0_6, %c0_7] : memref<1x1x384xf32, #tpu.memory_space<vmem>>, vector<1x1x384xf32>
    %9 = vector.shape_cast %8 : vector<1x1x384xf32> to vector<1x384xf32>
    %10 = vector.broadcast %9 : vector<1x384xf32> to vector<16x384xf32>
    %11 = arith.addf %7, %10 : vector<16x384xf32>
    %12 = vector.extract_strided_slice %11 {offsets = [0, 0], sizes = [16, 128], strides = [1, 1]} : vector<16x384xf32> to vector<16x128xf32>
    %13 = vector.extract_strided_slice %11 {offsets = [0, 128], sizes = [16, 128], strides = [1, 1]} : vector<16x384xf32> to vector<16x128xf32>
    %14 = vector.extract_strided_slice %11 {offsets = [0, 256], sizes = [16, 128], strides = [1, 1]} : vector<16x384xf32> to vector<16x128xf32>
    %c0_8 = arith.constant 0 : index
    %c0_9 = arith.constant 0 : index
    %c0_10 = arith.constant 0 : index
    %15 = vector.load %arg2[%c0_8, %c0_9, %c0_10] : memref<2x1x8xf32, #tpu.memory_space<vmem>>, vector<2x1x8xf32>
    %16 = vector.extract_strided_slice %12 {offsets = [0, 0], sizes = [16, 32], strides = [1, 1]} : vector<16x128xf32> to vector<16x32xf32>
    %17 = vector.shape_cast %16 : vector<16x32xf32> to vector<2x8x32xf32>
    %18 = arith.truncf %17 : vector<2x8x32xf32> to vector<2x8x32xbf16>
    %19 = vector.extract_strided_slice %13 {offsets = [0, 0], sizes = [16, 32], strides = [1, 1]} : vector<16x128xf32> to vector<16x32xf32>
    %20 = vector.shape_cast %19 : vector<16x32xf32> to vector<2x8x32xf32>
    %21 = arith.truncf %20 : vector<2x8x32xf32> to vector<2x8x32xbf16>
    %22 = vector.extract_strided_slice %14 {offsets = [0, 0], sizes = [16, 32], strides = [1, 1]} : vector<16x128xf32> to vector<16x32xf32>
    %23 = vector.shape_cast %22 : vector<16x32xf32> to vector<2x8x32xf32>
    %24 = arith.truncf %23 : vector<2x8x32xf32> to vector<2x8x32xbf16>
    "tpu.trace_start"() <{level = 10 : i32, message = "bqe,bke->bqk"}> : () -> ()
    %cst_11 = arith.constant dense<0.000000e+00> : vector<2x8x8xf32>
    %25 = tpu.matmul %18, %21, %cst_11 {dimension_numbers = #tpu.dot_dimension_numbers<[2], [2], [1], [1], [0, 0, 0, 1, 1, 1], [0], [0]>} : vector<2x8x32xbf16>, vector<2x8x32xbf16>, vector<2x8x8xf32> -> vector<2x8x8xf32>
    "tpu.trace_stop"() : () -> ()
    %cst_12 = arith.constant 0.176776692 : f32
    %26 = vector.broadcast %cst_12 : f32 to vector<2x8x8xf32>
    %27 = arith.mulf %25, %26 : vector<2x8x8xf32>
    %28 = vector.broadcast %15 : vector<2x1x8xf32> to vector<2x8x8xf32>
    %29 = arith.addf %27, %28 : vector<2x8x8xf32>
    %cst_13 = arith.constant dense<0xFF800000> : vector<2x8xf32>
    %30 = vector.multi_reduction <maximumf>, %29, %cst_13 [2] : vector<2x8x8xf32> to vector<2x8xf32>
    %31 = vector.shape_cast %30 : vector<2x8xf32> to vector<2x8x1xf32>
    %32 = vector.broadcast %31 : vector<2x8x1xf32> to vector<2x8x8xf32>
    %33 = arith.subf %29, %32 : vector<2x8x8xf32>
    %34 = math.exp %33 : vector<2x8x8xf32>
    %cst_14 = arith.constant dense<0.000000e+00> : vector<2x8xf32>
    %35 = vector.multi_reduction <add>, %34, %cst_14 [2] : vector<2x8x8xf32> to vector<2x8xf32>
    %36 = vector.shape_cast %35 : vector<2x8xf32> to vector<2x8x1xf32>
    %37 = tpu.reciprocal %36 : vector<2x8x1xf32> -> vector<2x8x1xf32>
    %38 = vector.broadcast %37 : vector<2x8x1xf32> to vector<2x8x8xf32>
    %39 = arith.mulf %34, %38 : vector<2x8x8xf32>
    %40 = arith.truncf %39 : vector<2x8x8xf32> to vector<2x8x8xbf16>
    "tpu.trace_start"() <{level = 10 : i32, message = "bqk,bke->bqe"}> : () -> ()
    %cst_15 = arith.constant dense<0.000000e+00> : vector<2x8x32xf32>
    %41 = tpu.matmul %40, %24, %cst_15 {dimension_numbers = #tpu.dot_dimension_numbers<[2], [1], [1], [2], [0, 0, 0, 1, 1, 2], [0], [0]>} : vector<2x8x8xbf16>, vector<2x8x32xbf16>, vector<2x8x32xf32> -> vector<2x8x32xf32>
    "tpu.trace_stop"() : () -> ()
    %42 = vector.extract_strided_slice %12 {offsets = [0, 32], sizes = [16, 32], strides = [1, 1]} : vector<16x128xf32> to vector<16x32xf32>
    %43 = vector.shape_cast %42 : vector<16x32xf32> to vector<2x8x32xf32>
    %44 = arith.truncf %43 : vector<2x8x32xf32> to vector<2x8x32xbf16>
    %45 = vector.extract_strided_slice %13 {offsets = [0, 32], sizes = [16, 32], strides = [1, 1]} : vector<16x128xf32> to vector<16x32xf32>
    %46 = vector.shape_cast %45 : vector<16x32xf32> to vector<2x8x32xf32>
    %47 = arith.truncf %46 : vector<2x8x32xf32> to vector<2x8x32xbf16>
    %48 = vector.extract_strided_slice %14 {offsets = [0, 32], sizes = [16, 32], strides = [1, 1]} : vector<16x128xf32> to vector<16x32xf32>
    %49 = vector.shape_cast %48 : vector<16x32xf32> to vector<2x8x32xf32>
    %50 = arith.truncf %49 : vector<2x8x32xf32> to vector<2x8x32xbf16>
    "tpu.trace_start"() <{level = 10 : i32, message = "bqe,bke->bqk"}> : () -> ()
    %cst_16 = arith.constant dense<0.000000e+00> : vector<2x8x8xf32>
    %51 = tpu.matmul %44, %47, %cst_16 {dimension_numbers = #tpu.dot_dimension_numbers<[2], [2], [1], [1], [0, 0, 0, 1, 1, 1], [0], [0]>} : vector<2x8x32xbf16>, vector<2x8x32xbf16>, vector<2x8x8xf32> -> vector<2x8x8xf32>
    "tpu.trace_stop"() : () -> ()
    %cst_17 = arith.constant 0.176776692 : f32
    %52 = vector.broadcast %cst_17 : f32 to vector<2x8x8xf32>
    %53 = arith.mulf %51, %52 : vector<2x8x8xf32>
    %54 = vector.broadcast %15 : vector<2x1x8xf32> to vector<2x8x8xf32>
    %55 = arith.addf %53, %54 : vector<2x8x8xf32>
    %cst_18 = arith.constant dense<0xFF800000> : vector<2x8xf32>
    %56 = vector.multi_reduction <maximumf>, %55, %cst_18 [2] : vector<2x8x8xf32> to vector<2x8xf32>
    %57 = vector.shape_cast %56 : vector<2x8xf32> to vector<2x8x1xf32>
    %58 = vector.broadcast %57 : vector<2x8x1xf32> to vector<2x8x8xf32>
    %59 = arith.subf %55, %58 : vector<2x8x8xf32>
    %60 = math.exp %59 : vector<2x8x8xf32>
    %cst_19 = arith.constant dense<0.000000e+00> : vector<2x8xf32>
    %61 = vector.multi_reduction <add>, %60, %cst_19 [2] : vector<2x8x8xf32> to vector<2x8xf32>
    %62 = vector.shape_cast %61 : vector<2x8xf32> to vector<2x8x1xf32>
    %63 = tpu.reciprocal %62 : vector<2x8x1xf32> -> vector<2x8x1xf32>
    %64 = vector.broadcast %63 : vector<2x8x1xf32> to vector<2x8x8xf32>
    %65 = arith.mulf %60, %64 : vector<2x8x8xf32>
    %66 = arith.truncf %65 : vector<2x8x8xf32> to vector<2x8x8xbf16>
    "tpu.trace_start"() <{level = 10 : i32, message = "bqk,bke->bqe"}> : () -> ()
    %cst_20 = arith.constant dense<0.000000e+00> : vector<2x8x32xf32>
    %67 = tpu.matmul %66, %50, %cst_20 {dimension_numbers = #tpu.dot_dimension_numbers<[2], [1], [1], [2], [0, 0, 0, 1, 1, 2], [0], [0]>} : vector<2x8x8xbf16>, vector<2x8x32xbf16>, vector<2x8x32xf32> -> vector<2x8x32xf32>
    "tpu.trace_stop"() : () -> ()
    %68 = vector.extract_strided_slice %12 {offsets = [0, 64], sizes = [16, 32], strides = [1, 1]} : vector<16x128xf32> to vector<16x32xf32>
    %69 = vector.shape_cast %68 : vector<16x32xf32> to vector<2x8x32xf32>
    %70 = arith.truncf %69 : vector<2x8x32xf32> to vector<2x8x32xbf16>
    %71 = vector.extract_strided_slice %13 {offsets = [0, 64], sizes = [16, 32], strides = [1, 1]} : vector<16x128xf32> to vector<16x32xf32>
    %72 = vector.shape_cast %71 : vector<16x32xf32> to vector<2x8x32xf32>
    %73 = arith.truncf %72 : vector<2x8x32xf32> to vector<2x8x32xbf16>
    %74 = vector.extract_strided_slice %14 {offsets = [0, 64], sizes = [16, 32], strides = [1, 1]} : vector<16x128xf32> to vector<16x32xf32>
    %75 = vector.shape_cast %74 : vector<16x32xf32> to vector<2x8x32xf32>
    %76 = arith.truncf %75 : vector<2x8x32xf32> to vector<2x8x32xbf16>
    "tpu.trace_start"() <{level = 10 : i32, message = "bqe,bke->bqk"}> : () -> ()
    %cst_21 = arith.constant dense<0.000000e+00> : vector<2x8x8xf32>
    %77 = tpu.matmul %70, %73, %cst_21 {dimension_numbers = #tpu.dot_dimension_numbers<[2], [2], [1], [1], [0, 0, 0, 1, 1, 1], [0], [0]>} : vector<2x8x32xbf16>, vector<2x8x32xbf16>, vector<2x8x8xf32> -> vector<2x8x8xf32>
    "tpu.trace_stop"() : () -> ()
    %cst_22 = arith.constant 0.176776692 : f32
    %78 = vector.broadcast %cst_22 : f32 to vector<2x8x8xf32>
    %79 = arith.mulf %77, %78 : vector<2x8x8xf32>
    %80 = vector.broadcast %15 : vector<2x1x8xf32> to vector<2x8x8xf32>
    %81 = arith.addf %79, %80 : vector<2x8x8xf32>
    %cst_23 = arith.constant dense<0xFF800000> : vector<2x8xf32>
    %82 = vector.multi_reduction <maximumf>, %81, %cst_23 [2] : vector<2x8x8xf32> to vector<2x8xf32>
    %83 = vector.shape_cast %82 : vector<2x8xf32> to vector<2x8x1xf32>
    %84 = vector.broadcast %83 : vector<2x8x1xf32> to vector<2x8x8xf32>
    %85 = arith.subf %81, %84 : vector<2x8x8xf32>
    %86 = math.exp %85 : vector<2x8x8xf32>
    %cst_24 = arith.constant dense<0.000000e+00> : vector<2x8xf32>
    %87 = vector.multi_reduction <add>, %86, %cst_24 [2] : vector<2x8x8xf32> to vector<2x8xf32>
    %88 = vector.shape_cast %87 : vector<2x8xf32> to vector<2x8x1xf32>
    %89 = tpu.reciprocal %88 : vector<2x8x1xf32> -> vector<2x8x1xf32>
    %90 = vector.broadcast %89 : vector<2x8x1xf32> to vector<2x8x8xf32>
    %91 = arith.mulf %86, %90 : vector<2x8x8xf32>
    %92 = arith.truncf %91 : vector<2x8x8xf32> to vector<2x8x8xbf16>
    "tpu.trace_start"() <{level = 10 : i32, message = "bqk,bke->bqe"}> : () -> ()
    %cst_25 = arith.constant dense<0.000000e+00> : vector<2x8x32xf32>
    %93 = tpu.matmul %92, %76, %cst_25 {dimension_numbers = #tpu.dot_dimension_numbers<[2], [1], [1], [2], [0, 0, 0, 1, 1, 2], [0], [0]>} : vector<2x8x8xbf16>, vector<2x8x32xbf16>, vector<2x8x32xf32> -> vector<2x8x32xf32>
    "tpu.trace_stop"() : () -> ()
    %94 = vector.extract_strided_slice %12 {offsets = [0, 96], sizes = [16, 32], strides = [1, 1]} : vector<16x128xf32> to vector<16x32xf32>
    %95 = vector.shape_cast %94 : vector<16x32xf32> to vector<2x8x32xf32>
    %96 = arith.truncf %95 : vector<2x8x32xf32> to vector<2x8x32xbf16>
    %97 = vector.extract_strided_slice %13 {offsets = [0, 96], sizes = [16, 32], strides = [1, 1]} : vector<16x128xf32> to vector<16x32xf32>
    %98 = vector.shape_cast %97 : vector<16x32xf32> to vector<2x8x32xf32>
    %99 = arith.truncf %98 : vector<2x8x32xf32> to vector<2x8x32xbf16>
    %100 = vector.extract_strided_slice %14 {offsets = [0, 96], sizes = [16, 32], strides = [1, 1]} : vector<16x128xf32> to vector<16x32xf32>
    %101 = vector.shape_cast %100 : vector<16x32xf32> to vector<2x8x32xf32>
    %102 = arith.truncf %101 : vector<2x8x32xf32> to vector<2x8x32xbf16>
    "tpu.trace_start"() <{level = 10 : i32, message = "bqe,bke->bqk"}> : () -> ()
    %cst_26 = arith.constant dense<0.000000e+00> : vector<2x8x8xf32>
    %103 = tpu.matmul %96, %99, %cst_26 {dimension_numbers = #tpu.dot_dimension_numbers<[2], [2], [1], [1], [0, 0, 0, 1, 1, 1], [0], [0]>} : vector<2x8x32xbf16>, vector<2x8x32xbf16>, vector<2x8x8xf32> -> vector<2x8x8xf32>
    "tpu.trace_stop"() : () -> ()
    %cst_27 = arith.constant 0.176776692 : f32
    %104 = vector.broadcast %cst_27 : f32 to vector<2x8x8xf32>
    %105 = arith.mulf %103, %104 : vector<2x8x8xf32>
    %106 = vector.broadcast %15 : vector<2x1x8xf32> to vector<2x8x8xf32>
    %107 = arith.addf %105, %106 : vector<2x8x8xf32>
    %cst_28 = arith.constant dense<0xFF800000> : vector<2x8xf32>
    %108 = vector.multi_reduction <maximumf>, %107, %cst_28 [2] : vector<2x8x8xf32> to vector<2x8xf32>
    %109 = vector.shape_cast %108 : vector<2x8xf32> to vector<2x8x1xf32>
    %110 = vector.broadcast %109 : vector<2x8x1xf32> to vector<2x8x8xf32>
    %111 = arith.subf %107, %110 : vector<2x8x8xf32>
    %112 = math.exp %111 : vector<2x8x8xf32>
    %cst_29 = arith.constant dense<0.000000e+00> : vector<2x8xf32>
    %113 = vector.multi_reduction <add>, %112, %cst_29 [2] : vector<2x8x8xf32> to vector<2x8xf32>
    %114 = vector.shape_cast %113 : vector<2x8xf32> to vector<2x8x1xf32>
    %115 = tpu.reciprocal %114 : vector<2x8x1xf32> -> vector<2x8x1xf32>
    %116 = vector.broadcast %115 : vector<2x8x1xf32> to vector<2x8x8xf32>
    %117 = arith.mulf %112, %116 : vector<2x8x8xf32>
    %118 = arith.truncf %117 : vector<2x8x8xf32> to vector<2x8x8xbf16>
    "tpu.trace_start"() <{level = 10 : i32, message = "bqk,bke->bqe"}> : () -> ()
    %cst_30 = arith.constant dense<0.000000e+00> : vector<2x8x32xf32>
    %119 = tpu.matmul %118, %102, %cst_30 {dimension_numbers = #tpu.dot_dimension_numbers<[2], [1], [1], [2], [0, 0, 0, 1, 1, 2], [0], [0]>} : vector<2x8x8xbf16>, vector<2x8x32xbf16>, vector<2x8x32xf32> -> vector<2x8x32xf32>
    "tpu.trace_stop"() : () -> ()
    %120 = tpu.concatenate %41, %67, %93, %119 in 2 : vector<2x8x32xf32>, vector<2x8x32xf32>, vector<2x8x32xf32>, vector<2x8x32xf32> -> vector<2x8x128xf32>
    %121 = vector.shape_cast %120 : vector<2x8x128xf32> to vector<16x128xf32>
    %122 = arith.truncf %121 : vector<16x128xf32> to vector<16x128xbf16>
    %c0_31 = arith.constant 0 : index
    %c0_32 = arith.constant 0 : index
    %c0_33 = arith.constant 0 : index
    %123 = vector.load %arg5[%c0_31, %c0_32, %c0_33] : memref<1x128x128xbf16, #tpu.memory_space<vmem>>, vector<1x128x128xbf16>
    %124 = vector.shape_cast %123 : vector<1x128x128xbf16> to vector<128x128xbf16>
    %cst_34 = arith.constant dense<0.000000e+00> : vector<16x128xf32>
    %125 = tpu.matmul %122, %124, %cst_34 {dimension_numbers = #tpu.dot_dimension_numbers<[1], [0], [0], [1], [0, 0, 1, 1], [], []>} : vector<16x128xbf16>, vector<128x128xbf16>, vector<16x128xf32> -> vector<16x128xf32>
    %c0_35 = arith.constant 0 : index
    %c0_36 = arith.constant 0 : index
    %c0_37 = arith.constant 0 : index
    %126 = vector.load %arg6[%c0_35, %c0_36, %c0_37] : memref<1x1x128xf32, #tpu.memory_space<vmem>>, vector<1x1x128xf32>
    %127 = vector.shape_cast %126 : vector<1x1x128xf32> to vector<1x128xf32>
    %128 = vector.broadcast %127 : vector<1x128xf32> to vector<16x128xf32>
    %129 = arith.addf %125, %128 : vector<16x128xf32>
    %130 = arith.addf %3, %129 : vector<16x128xf32>
    %c0_38 = arith.constant 0 : index
    %c0_39 = arith.constant 0 : index
    %c0_40 = arith.constant 0 : index
    %131 = vector.load %arg11[%c0_38, %c0_39, %c0_40] : memref<1x1x128xf32, #tpu.memory_space<vmem>>, vector<1x1x128xf32>
    %132 = vector.shape_cast %131 : vector<1x1x128xf32> to vector<1x128xf32>
    %c0_41 = arith.constant 0 : index
    %c0_42 = arith.constant 0 : index
    %c0_43 = arith.constant 0 : index
    %133 = vector.load %arg12[%c0_41, %c0_42, %c0_43] : memref<1x1x128xf32, #tpu.memory_space<vmem>>, vector<1x1x128xf32>
    %134 = vector.shape_cast %133 : vector<1x1x128xf32> to vector<1x128xf32>
    %cst_44 = arith.constant dense<0.000000e+00> : vector<16xf32>
    %135 = vector.multi_reduction <add>, %130, %cst_44 [1] : vector<16x128xf32> to vector<16xf32>
    %136 = vector.shape_cast %135 : vector<16xf32> to vector<16x1xf32>
    %cst_45 = arith.constant 1.280000e+02 : f32
    %137 = vector.broadcast %cst_45 : f32 to vector<16x1xf32>
    %138 = arith.divf %136, %137 : vector<16x1xf32>
    %139 = vector.broadcast %138 : vector<16x1xf32> to vector<16x128xf32>
    %140 = arith.subf %130, %139 : vector<16x128xf32>
    %141 = arith.mulf %140, %140 : vector<16x128xf32>
    %cst_46 = arith.constant dense<0.000000e+00> : vector<16xf32>
    %142 = vector.multi_reduction <add>, %141, %cst_46 [1] : vector<16x128xf32> to vector<16xf32>
    %143 = vector.shape_cast %142 : vector<16xf32> to vector<16x1xf32>
    %cst_47 = arith.constant 1.280000e+02 : f32
    %144 = vector.broadcast %cst_47 : f32 to vector<16x1xf32>
    %145 = arith.divf %143, %144 : vector<16x1xf32>
    %146 = vector.broadcast %138 : vector<16x1xf32> to vector<16x128xf32>
    %147 = arith.subf %130, %146 : vector<16x128xf32>
    %cst_48 = arith.constant 9.99999974E-6 : f32
    %148 = vector.broadcast %cst_48 : f32 to vector<16x1xf32>
    %149 = arith.addf %145, %148 : vector<16x1xf32>
    %150 = math.rsqrt %149 : vector<16x1xf32>
    %151 = vector.broadcast %150 : vector<16x1xf32> to vector<16x128xf32>
    %152 = arith.mulf %147, %151 : vector<16x128xf32>
    %153 = vector.broadcast %132 : vector<1x128xf32> to vector<16x128xf32>
    %154 = arith.mulf %152, %153 : vector<16x128xf32>
    %155 = vector.broadcast %134 : vector<1x128xf32> to vector<16x128xf32>
    %156 = arith.addf %154, %155 : vector<16x128xf32>
    %157 = arith.truncf %156 : vector<16x128xf32> to vector<16x128xbf16>
    %c0_49 = arith.constant 0 : index
    %c0_50 = arith.constant 0 : index
    %c0_51 = arith.constant 0 : index
    %158 = vector.load %arg7[%c0_49, %c0_50, %c0_51] : memref<1x128x256xbf16, #tpu.memory_space<vmem>>, vector<1x128x256xbf16>
    %159 = vector.shape_cast %158 : vector<1x128x256xbf16> to vector<128x256xbf16>
    %cst_52 = arith.constant dense<0.000000e+00> : vector<16x256xf32>
    %160 = tpu.matmul %157, %159, %cst_52 {dimension_numbers = #tpu.dot_dimension_numbers<[1], [0], [0], [1], [0, 0, 1, 1], [], []>} : vector<16x128xbf16>, vector<128x256xbf16>, vector<16x256xf32> -> vector<16x256xf32>
    %c0_53 = arith.constant 0 : index
    %c0_54 = arith.constant 0 : index
    %c0_55 = arith.constant 0 : index
    %161 = vector.load %arg8[%c0_53, %c0_54, %c0_55] : memref<1x1x256xf32, #tpu.memory_space<vmem>>, vector<1x1x256xf32>
    %162 = vector.shape_cast %161 : vector<1x1x256xf32> to vector<1x256xf32>
    %163 = vector.broadcast %162 : vector<1x256xf32> to vector<16x256xf32>
    %164 = arith.addf %160, %163 : vector<16x256xf32>
    %cst_56 = arith.constant 0.000000e+00 : f32
    %165 = vector.broadcast %cst_56 : f32 to vector<16x256xf32>
    %166 = arith.maximumf %164, %165 : vector<16x256xf32>
    %167 = arith.truncf %166 : vector<16x256xf32> to vector<16x256xbf16>
    %c0_57 = arith.constant 0 : index
    %c0_58 = arith.constant 0 : index
    %c0_59 = arith.constant 0 : index
    %168 = vector.load %arg9[%c0_57, %c0_58, %c0_59] : memref<1x256x128xbf16, #tpu.memory_space<vmem>>, vector<1x256x128xbf16>
    %169 = vector.shape_cast %168 : vector<1x256x128xbf16> to vector<256x128xbf16>
    %cst_60 = arith.constant dense<0.000000e+00> : vector<16x128xf32>
    %170 = tpu.matmul %167, %169, %cst_60 {dimension_numbers = #tpu.dot_dimension_numbers<[1], [0], [0], [1], [0, 0, 1, 1], [], []>} : vector<16x256xbf16>, vector<256x128xbf16>, vector<16x128xf32> -> vector<16x128xf32>
    %c0_61 = arith.constant 0 : index
    %c0_62 = arith.constant 0 : index
    %c0_63 = arith.constant 0 : index
    %171 = vector.load %arg10[%c0_61, %c0_62, %c0_63] : memref<1x1x128xf32, #tpu.memory_space<vmem>>, vector<1x1x128xf32>
    %172 = vector.shape_cast %171 : vector<1x1x128xf32> to vector<1x128xf32>
    %173 = vector.broadcast %172 : vector<1x128xf32> to vector<16x128xf32>
    %174 = arith.addf %170, %173 : vector<16x128xf32>
    %175 = arith.addf %156, %174 : vector<16x128xf32>
    %c0_64 = arith.constant 0 : index
    %c0_65 = arith.constant 0 : index
    %c0_66 = arith.constant 0 : index
    %176 = vector.load %arg13[%c0_64, %c0_65, %c0_66] : memref<1x1x128xf32, #tpu.memory_space<vmem>>, vector<1x1x128xf32>
    %177 = vector.shape_cast %176 : vector<1x1x128xf32> to vector<1x128xf32>
    %c0_67 = arith.constant 0 : index
    %c0_68 = arith.constant 0 : index
    %c0_69 = arith.constant 0 : index
    %178 = vector.load %arg14[%c0_67, %c0_68, %c0_69] : memref<1x1x128xf32, #tpu.memory_space<vmem>>, vector<1x1x128xf32>
    %179 = vector.shape_cast %178 : vector<1x1x128xf32> to vector<1x128xf32>
    %cst_70 = arith.constant dense<0.000000e+00> : vector<16xf32>
    %180 = vector.multi_reduction <add>, %175, %cst_70 [1] : vector<16x128xf32> to vector<16xf32>
    %181 = vector.shape_cast %180 : vector<16xf32> to vector<16x1xf32>
    %cst_71 = arith.constant 1.280000e+02 : f32
    %182 = vector.broadcast %cst_71 : f32 to vector<16x1xf32>
    %183 = arith.divf %181, %182 : vector<16x1xf32>
    %184 = vector.broadcast %183 : vector<16x1xf32> to vector<16x128xf32>
    %185 = arith.subf %175, %184 : vector<16x128xf32>
    %186 = arith.mulf %185, %185 : vector<16x128xf32>
    %cst_72 = arith.constant dense<0.000000e+00> : vector<16xf32>
    %187 = vector.multi_reduction <add>, %186, %cst_72 [1] : vector<16x128xf32> to vector<16xf32>
    %188 = vector.shape_cast %187 : vector<16xf32> to vector<16x1xf32>
    %cst_73 = arith.constant 1.280000e+02 : f32
    %189 = vector.broadcast %cst_73 : f32 to vector<16x1xf32>
    %190 = arith.divf %188, %189 : vector<16x1xf32>
    %191 = vector.broadcast %183 : vector<16x1xf32> to vector<16x128xf32>
    %192 = arith.subf %175, %191 : vector<16x128xf32>
    %cst_74 = arith.constant 9.99999974E-6 : f32
    %193 = vector.broadcast %cst_74 : f32 to vector<16x1xf32>
    %194 = arith.addf %190, %193 : vector<16x1xf32>
    %195 = math.rsqrt %194 : vector<16x1xf32>
    %196 = vector.broadcast %195 : vector<16x1xf32> to vector<16x128xf32>
    %197 = arith.mulf %192, %196 : vector<16x128xf32>
    %198 = vector.broadcast %177 : vector<1x128xf32> to vector<16x128xf32>
    %199 = arith.mulf %197, %198 : vector<16x128xf32>
    %200 = vector.broadcast %179 : vector<1x128xf32> to vector<16x128xf32>
    %201 = arith.addf %199, %200 : vector<16x128xf32>
    %c0_75 = arith.constant 0 : index
    %c0_76 = arith.constant 0 : index
    %202 = vector.load %arg18[%c0_75, %c0_76] : memref<16x128xf32, #tpu.memory_space<vmem>>, vector<16x128xf32>
    tpu.vector_store %arg18[%c0_75, %c0_76], %201 {strides = array<i32>} : memref<16x128xf32, #tpu.memory_space<vmem>>, vector<16x128xf32>,
    %c1_i32 = arith.constant 1 : i32
    %203 = arith.cmpi eq, %arg0, %c1_i32 : i32
    %204 = arith.extui %203 : i1 to i32
    %c0_i32_77 = arith.constant 0 : i32
    %205 = arith.cmpi ne, %204, %c0_i32_77 : i32
    scf.if %205 {
      %206 = arith.truncf %201 : vector<16x128xf32> to vector<16x128xbf16>
      %c0_78 = arith.constant 0 : index
      %c0_79 = arith.constant 0 : index
      %207 = vector.load %arg15[%c0_78, %c0_79] : memref<128x128xbf16, #tpu.memory_space<vmem>>, vector<128x128xbf16>
      %cst_80 = arith.constant dense<0.000000e+00> : vector<16x128xf32>
      %208 = tpu.matmul %206, %207, %cst_80 {dimension_numbers = #tpu.dot_dimension_numbers<[1], [0], [0], [1], [0, 0, 1, 1], [], []>} : vector<16x128xbf16>, vector<128x128xbf16>, vector<16x128xf32> -> vector<16x128xf32>
      %c0_81 = arith.constant 0 : index
      %c0_82 = arith.constant 0 : index
      %209 = vector.load %arg16[%c0_81, %c0_82] : memref<1x128xf32, #tpu.memory_space<vmem>>, vector<1x128xf32>
      %210 = vector.broadcast %209 : vector<1x128xf32> to vector<16x128xf32>
      %211 = arith.addf %208, %210 : vector<16x128xf32>
      %c0_83 = arith.constant 0 : index
      %c0_84 = arith.constant 0 : index
      %212 = vector.load %arg17[%c0_83, %c0_84] : memref<16x128xf32, #tpu.memory_space<vmem>>, vector<16x128xf32>
      tpu.vector_store %arg17[%c0_83, %c0_84], %211 {strides = array<i32>} : memref<16x128xf32, #tpu.memory_space<vmem>>, vector<16x128xf32>,
    } else {
    }
    return
  }
  func.func @transform_0(%arg0: i32) -> (i32, i32) {
    %c0_i32 = arith.constant 0 : i32
    %c0_i32_0 = arith.constant 0 : i32
    %c0_i32_1 = arith.constant 0 : i32
    return %c0_i32, %c0_i32_0 : i32, i32
  }
  func.func @transform_1(%arg0: i32) -> (i32, i32, i32) {
    %c0_i32 = arith.constant 0 : i32
    %c0_i32_0 = arith.constant 0 : i32
    %c0_i32_1 = arith.constant 0 : i32
    %c0_i32_2 = arith.constant 0 : i32
    return %c0_i32, %c0_i32_0, %c0_i32_1 : i32, i32, i32
  }
  func.func @transform_2(%arg0: i32) -> (i32, i32, i32) {
    %c0_i32 = arith.constant 0 : i32
    %c0_i32_0 = arith.constant 0 : i32
    %c0_i32_1 = arith.constant 0 : i32
    return %arg0, %c0_i32, %c0_i32_0 : i32, i32, i32
  }
  func.func @transform_3(%arg0: i32) -> (i32, i32, i32) {
    %c0_i32 = arith.constant 0 : i32
    %c0_i32_0 = arith.constant 0 : i32
    %c0_i32_1 = arith.constant 0 : i32
    return %arg0, %c0_i32, %c0_i32_0 : i32, i32, i32
  }
  func.func @transform_4(%arg0: i32) -> (i32, i32, i32) {
    %c0_i32 = arith.constant 0 : i32
    %c0_i32_0 = arith.constant 0 : i32
    %c0_i32_1 = arith.constant 0 : i32
    return %arg0, %c0_i32, %c0_i32_0 : i32, i32, i32
  }
  func.func @transform_5(%arg0: i32) -> (i32, i32, i32) {
    %c0_i32 = arith.constant 0 : i32
    %c0_i32_0 = arith.constant 0 : i32
    %c0_i32_1 = arith.constant 0 : i32
    return %arg0, %c0_i32, %c0_i32_0 : i32, i32, i32
  }
  func.func @transform_6(%arg0: i32) -> (i32, i32, i32) {
    %c0_i32 = arith.constant 0 : i32
    %c0_i32_0 = arith.constant 0 : i32
    %c0_i32_1 = arith.constant 0 : i32
    return %arg0, %c0_i32, %c0_i32_0 : i32, i32, i32
  }
  func.func @transform_7(%arg0: i32) -> (i32, i32, i32) {
    %c0_i32 = arith.constant 0 : i32
    %c0_i32_0 = arith.constant 0 : i32
    %c0_i32_1 = arith.constant 0 : i32
    return %arg0, %c0_i32, %c0_i32_0 : i32, i32, i32
  }
  func.func @transform_8(%arg0: i32) -> (i32, i32, i32) {
    %c0_i32 = arith.constant 0 : i32
    %c0_i32_0 = arith.constant 0 : i32
    %c0_i32_1 = arith.constant 0 : i32
    return %arg0, %c0_i32, %c0_i32_0 : i32, i32, i32
  }
  func.func @transform_9(%arg0: i32) -> (i32, i32, i32) {
    %c0_i32 = arith.constant 0 : i32
    %c0_i32_0 = arith.constant 0 : i32
    %c0_i32_1 = arith.constant 0 : i32
    return %arg0, %c0_i32, %c0_i32_0 : i32, i32, i32
  }
  func.func @transform_10(%arg0: i32) -> (i32, i32, i32) {
    %c0_i32 = arith.constant 0 : i32
    %c0_i32_0 = arith.constant 0 : i32
    %c0_i32_1 = arith.constant 0 : i32
    return %arg0, %c0_i32, %c0_i32_0 : i32, i32, i32
  }
  func.func @transform_11(%arg0: i32) -> (i32, i32, i32) {
    %c0_i32 = arith.constant 0 : i32
    %c0_i32_0 = arith.constant 0 : i32
    %c0_i32_1 = arith.constant 0 : i32
    return %arg0, %c0_i32, %c0_i32_0 : i32, i32, i32
  }
  func.func @transform_12(%arg0: i32) -> (i32, i32, i32) {
    %c0_i32 = arith.constant 0 : i32
    %c0_i32_0 = arith.constant 0 : i32
    %c0_i32_1 = arith.constant 0 : i32
    return %arg0, %c0_i32, %c0_i32_0 : i32, i32, i32
  }
  func.func @transform_13(%arg0: i32) -> (i32, i32, i32) {
    %c0_i32 = arith.constant 0 : i32
    %c0_i32_0 = arith.constant 0 : i32
    %c0_i32_1 = arith.constant 0 : i32
    return %arg0, %c0_i32, %c0_i32_0 : i32, i32, i32
  }
  func.func @transform_14(%arg0: i32) -> (i32, i32) {
    %c0_i32 = arith.constant 0 : i32
    %c0_i32_0 = arith.constant 0 : i32
    %c0_i32_1 = arith.constant 0 : i32
    return %c0_i32, %c0_i32_0 : i32, i32
  }
  func.func @transform_15(%arg0: i32) -> (i32, i32) {
    %c0_i32 = arith.constant 0 : i32
    %c0_i32_0 = arith.constant 0 : i32
    %c0_i32_1 = arith.constant 0 : i32
    return %c0_i32, %c0_i32_0 : i32, i32
  }
  func.func @transform_16(%arg0: i32) -> (i32, i32) {
    %c0_i32 = arith.constant 0 : i32
    %c0_i32_0 = arith.constant 0 : i32
    %c0_i32_1 = arith.constant 0 : i32
    return %c0_i32, %c0_i32_0 : i32, i32
  }
}

</mosaic_0001>

<llo_original>
// kernel: tpu_custom_call.1
$region0: #{tpu_custom_call.1}
  #allocation0 [shape = 'u32[]', space=smem, size = 0x4, offset = 0x4, fixed_abs, tag = 'smem constant byte address 0x4 - core index']
  #allocation1 [shape = 'u32[144,128]{1,0:T(1,128)}', space=vmem, size = 0x12000, scoped, tag = 'internal scratch']
  #allocation2 [shape = 'f32[16,128]{1,0:T(8,128)}', space=vmem, size = 0x2000, scoped, tag = 'scratch operand']
  %s0 = inlined_call_operand.hbm [shape: f32[16,128], index: 0, kind: input, shape index: {}]
  %s1 = inlined_call_operand.hbm [shape: f32[2,1,8], index: 1, kind: input, shape index: {}]
  %s2 = inlined_call_operand.hbm [shape: bf16[2,128,384], index: 2, kind: input, shape index: {}]
  %s3 = inlined_call_operand.vmem [shape: f32[2,1,384], index: 3, kind: input, shape index: {}]
  %s4 = inlined_call_operand.hbm [shape: bf16[2,128,128], index: 4, kind: input, shape index: {}]
  %s5 = inlined_call_operand.vmem [shape: f32[2,1,128], index: 5, kind: input, shape index: {}]
  %s6 = inlined_call_operand.hbm [shape: bf16[2,128,256], index: 6, kind: input, shape index: {}]
  %s7 = inlined_call_operand.vmem [shape: f32[2,1,256], index: 7, kind: input, shape index: {}]
  %s8 = inlined_call_operand.hbm [shape: bf16[2,256,128], index: 8, kind: input, shape index: {}]
  %s9 = inlined_call_operand.vmem [shape: f32[2,1,128], index: 9, kind: input, shape index: {}]
  %s10 = inlined_call_operand.vmem [shape: f32[2,1,128], index: 10, kind: input, shape index: {}]
  %s11 = inlined_call_operand.vmem [shape: f32[2,1,128], index: 11, kind: input, shape index: {}]
  %s12 = inlined_call_operand.vmem [shape: f32[2,1,128], index: 12, kind: input, shape index: {}]
  %s13 = inlined_call_operand.vmem [shape: f32[2,1,128], index: 13, kind: input, shape index: {}]
  %s14 = inlined_call_operand.hbm [shape: bf16[128,128], index: 14, kind: input, shape index: {}]
  %s15 = inlined_call_operand.vmem [shape: f32[1,128], index: 15, kind: input, shape index: {}]
  %s16 = inlined_call_operand.hbm [shape: f32[16,128], index: 16, kind: output, shape index: {}]
  %s17 = sld [smem:[#allocation0]]
  $region133: #{tpu_custom_call.1} parent=0
    _
  %s19 = ssub.s32 1, %s17
  %s20 = scalar_select 0, %s19, %s17
  $region1: #{tpu_custom_call.1} parent=0
    #allocation3 [shape = 'u8[8192]{0}', space=vmem, size = 0x2000, scoped, tag = 'input window, operand 0, single buffered']
    #allocation4 [shape = 's32[2]{0}', space=sflag, size = 0x8, scoped, tag = 'scoped memory for tpu_custom_call.1']
    #allocation5 [shape = 's32[2]{0}', space=sflag, size = 0x8, scoped, tag = 'scoped memory for tpu_custom_call.1']
    #allocation6 [shape = 'u8[1024]{0}', space=vmem, size = 0x400, scoped, tag = 'input window, operand 1, single buffered']
    #allocation7 [shape = 's32[1]{0}', space=sflag, size = 0x4, scoped, tag = 'scoped memory for tpu_custom_call.1']
    #allocation8 [shape = 'u8[196608]{0}', space=vmem, size = 0x30000, scoped, tag = 'input window, operand 2']
    #allocation9 [shape = 'u8[65536]{0}', space=vmem, size = 0x10000, scoped, tag = 'input window, operand 4']
    #allocation10 [shape = 'u8[131072]{0}', space=vmem, size = 0x20000, scoped, tag = 'input window, operand 6']
    #allocation11 [shape = 'u8[131072]{0}', space=vmem, size = 0x20000, scoped, tag = 'input window, operand 8']
    #allocation12 [shape = 'u8[32768]{0}', space=vmem, size = 0x8000, scoped, tag = 'input window, operand 14, single buffered']
    #allocation13 [shape = 'u8[8192]{0}', space=vmem, size = 0x2000, scoped, tag = 'output window, operand 0, single buffered']
    %21 = vsyncpa [#allocation4], 0
    %22 = vsyncpa [#allocation7], 0
    %23 = vsyncpa [#allocation5], 0
    loop: start=0, step=1, limit=4
    $region2: #{tpu_custom_call.1} parent=1 // loop_pre_header
      _
    $region3: #{tpu_custom_call.1} parent=1 // loop_header
      %s25 = sphi 0, %s29
      %p26 = scmp.ge.s32.totalorder %s25, 4
      %s33 = sphi 0, %s33
      %s35 = sphi 0, %s33
      %s36 = sphi 0, %s35
      %s50 = sphi 0, %s36
      %s54 = sphi 0, %s54
      %s56 = sphi 0, %s54
      %s57 = sphi 0, %s56
      %s71 = sphi 0, %s57
      %s77 = sphi 0, %s79
      %s80 = sphi 0, %s77
      %s81 = sphi 0, %s80
      %s97 = sphi 0, %s81
      %s103 = sphi 0, %s105
      %s106 = sphi 0, %s103
      %s107 = sphi 0, %s106
      %s123 = sphi 0, %s107
      %s129 = sphi 0, %s131
      %s132 = sphi 0, %s129
      %s133 = sphi 0, %s132
      %s149 = sphi 0, %s133
      %s155 = sphi 0, %s157
      %s158 = sphi 0, %s155
      %s159 = sphi 0, %s158
      %s175 = sphi 0, %s159
      %s181 = sphi 0, %s183
      %s184 = sphi 0, %s181
      %s185 = sphi 0, %s184
      %s201 = sphi 0, %s185
      %s207 = sphi 0, %s209
      %s210 = sphi 0, %s207
      %s211 = sphi 0, %s210
      %s227 = sphi 0, %s211
      %s233 = sphi 0, %s235
      %s236 = sphi 0, %s233
      %s237 = sphi 0, %s236
      %s253 = sphi 0, %s237
      %s259 = sphi 0, %s261
      %s262 = sphi 0, %s259
      %s263 = sphi 0, %s262
      %s279 = sphi 0, %s263
      %s285 = sphi 0, %s287
      %s288 = sphi 0, %s285
      %s289 = sphi 0, %s288
      %s305 = sphi 0, %s289
      %s311 = sphi 0, %s313
      %s314 = sphi 0, %s311
      %s315 = sphi 0, %s314
      %s331 = sphi 0, %s315
      %s337 = sphi 0, %s339
      %s340 = sphi 0, %s337
      %s341 = sphi 0, %s340
      %s357 = sphi 0, %s341
      %s363 = sphi 0, %s365
      %s366 = sphi 0, %s363
      %s367 = sphi 0, %s366
      %s383 = sphi 0, %s367
      %s387 = sphi 0, %s387
      %s389 = sphi 0, %s387
      %s390 = sphi 0, %s389
      %s404 = sphi 0, %s390
      %s408 = sphi 0, %s408
      %s410 = sphi 0, %s408
      %s411 = sphi 0, %s410
      %s425 = sphi 0, %s411
      %s429 = sphi 0, %s429
      %s431 = sphi 0, %s429
      %s432 = sphi 0, %s431
      %s446 = sphi 0, %s432
    $region4: #{tpu_custom_call.1} parent=1 // loop_header_branch
      %28 = sbr.rel (%p26) target = $region8
    $region5: #{tpu_custom_call.1} parent=1 // loop_body
      %s30 = ssub.s32 %s25, 1
      %s31 = ssub.s32 %s25, 2
      %s32 = sadd.s32 %s25, 1
      %s34 = sadd.s32 %s33, 1
      %p37 = scmp.eq.s32.totalorder %s25, 1
      %p38 = scmp.ne.s32.totalorder %s33, %s35
      %p39 = scmp.eq.s32.totalorder %s25, 0
      %p40 = por %p38, %p39
      %p41 = scmp.ne.s32.totalorder %s33, %s35
      %p42 = scmp.eq.s32.totalorder %s30, 1
      %p43 = por %p41, %p42
      %p44 = scmp.ne.s32.totalorder %s35, %s36
      %p45 = scmp.eq.s32.totalorder %s30, 0
      %p46 = por %p44, %p45
      %p47 = scmp.ne.s32.totalorder %s35, %s36
      %p48 = scmp.eq.s32.totalorder %s31, 1
      %p49 = por %p47, %p48
      %p51 = scmp.ne.s32.totalorder %s36, %s50
      %p52 = scmp.eq.s32.totalorder %s31, 0
      %p53 = por %p51, %p52
      %s55 = sadd.s32 %s54, 1
      %p58 = scmp.eq.s32.totalorder %s25, 1
      %p59 = scmp.ne.s32.totalorder %s54, %s56
      %p60 = scmp.eq.s32.totalorder %s25, 0
      %p61 = por %p59, %p60
      %p62 = scmp.ne.s32.totalorder %s54, %s56
      %p63 = scmp.eq.s32.totalorder %s30, 1
      %p64 = por %p62, %p63
      %p65 = scmp.ne.s32.totalorder %s56, %s57
      %p66 = scmp.eq.s32.totalorder %s30, 0
      %p67 = por %p65, %p66
      %p68 = scmp.ne.s32.totalorder %s56, %s57
      %p69 = scmp.eq.s32.totalorder %s31, 1
      %p70 = por %p68, %p69
      %p72 = scmp.ne.s32.totalorder %s57, %s71
      %p73 = scmp.eq.s32.totalorder %s31, 0
      %p74 = por %p72, %p73
      %s75 = ssub.s32 %s25, %s32
      %p76 = scmp.eq.s32.totalorder %s75, 0
      %s78 = sadd.s32 %s77, 1
      %s79 = scalar_select %p76, %s77, %s78
      %p82 = pneg %p76
      %p83 = scmp.eq.s32.totalorder %s25, 1
      %p84 = por %p82, %p83
      %p85 = scmp.ne.s32.totalorder %s77, %s80
      %p86 = scmp.eq.s32.totalorder %s25, 0
      %p87 = por %p85, %p86
      %p88 = scmp.ne.s32.totalorder %s77, %s80
      %p89 = scmp.eq.s32.totalorder %s30, 1
      %p90 = por %p88, %p89
      %p91 = scmp.ne.s32.totalorder %s80, %s81
      %p92 = scmp.eq.s32.totalorder %s30, 0
      %p93 = por %p91, %p92
      %p94 = scmp.ne.s32.totalorder %s80, %s81
      %p95 = scmp.eq.s32.totalorder %s31, 1
      %p96 = por %p94, %p95
      %p98 = scmp.ne.s32.totalorder %s81, %s97
      %p99 = scmp.eq.s32.totalorder %s31, 0
      %p100 = por %p98, %p99
      %s101 = ssub.s32 %s25, %s32
      %p102 = scmp.eq.s32.totalorder %s101, 0
      %s104 = sadd.s32 %s103, 1
      %s105 = scalar_select %p102, %s103, %s104
      %p108 = pneg %p102
      %p109 = scmp.eq.s32.totalorder %s25, 1
      %p110 = por %p108, %p109
      %p111 = scmp.ne.s32.totalorder %s103, %s106
      %p112 = scmp.eq.s32.totalorder %s25, 0
      %p113 = por %p111, %p112
      %p114 = scmp.ne.s32.totalorder %s103, %s106
      %p115 = scmp.eq.s32.totalorder %s30, 1
      %p116 = por %p114, %p115
      %p117 = scmp.ne.s32.totalorder %s106, %s107
      %p118 = scmp.eq.s32.totalorder %s30, 0
      %p119 = por %p117, %p118
      %p120 = scmp.ne.s32.totalorder %s106, %s107
      %p121 = scmp.eq.s32.totalorder %s31, 1
      %p122 = por %p120, %p121
      %p124 = scmp.ne.s32.totalorder %s107, %s123
      %p125 = scmp.eq.s32.totalorder %s31, 0
      %p126 = por %p124, %p125
      %s127 = ssub.s32 %s25, %s32
      %p128 = scmp.eq.s32.totalorder %s127, 0
      %s130 = sadd.s32 %s129, 1
      %s131 = scalar_select %p128, %s129, %s130
      %p134 = pneg %p128
      %p135 = scmp.eq.s32.totalorder %s25, 1
      %p136 = por %p134, %p135
      %p137 = scmp.ne.s32.totalorder %s129, %s132
      %p138 = scmp.eq.s32.totalorder %s25, 0
      %p139 = por %p137, %p138
      %p140 = scmp.ne.s32.totalorder %s129, %s132
      %p141 = scmp.eq.s32.totalorder %s30, 1
      %p142 = por %p140, %p141
      %p143 = scmp.ne.s32.totalorder %s132, %s133
      %p144 = scmp.eq.s32.totalorder %s30, 0
      %p145 = por %p143, %p144
      %p146 = scmp.ne.s32.totalorder %s132, %s133
      %p147 = scmp.eq.s32.totalorder %s31, 1
      %p148 = por %p146, %p147
      %p150 = scmp.ne.s32.totalorder %s133, %s149
      %p151 = scmp.eq.s32.totalorder %s31, 0
      %p152 = por %p150, %p151
      %s153 = ssub.s32 %s25, %s32
      %p154 = scmp.eq.s32.totalorder %s153, 0
      %s156 = sadd.s32 %s155, 1
      %s157 = scalar_select %p154, %s155, %s156
      %p160 = pneg %p154
      %p161 = scmp.eq.s32.totalorder %s25, 1
      %p162 = por %p160, %p161
      %p163 = scmp.ne.s32.totalorder %s155, %s158
      %p164 = scmp.eq.s32.totalorder %s25, 0
      %p165 = por %p163, %p164
      %p166 = scmp.ne.s32.totalorder %s155, %s158
      %p167 = scmp.eq.s32.totalorder %s30, 1
      %p168 = por %p166, %p167
      %p169 = scmp.ne.s32.totalorder %s158, %s159
      %p170 = scmp.eq.s32.totalorder %s30, 0
      %p171 = por %p169, %p170
      %p172 = scmp.ne.s32.totalorder %s158, %s159
      %p173 = scmp.eq.s32.totalorder %s31, 1
      %p174 = por %p172, %p173
      %p176 = scmp.ne.s32.totalorder %s159, %s175
      %p177 = scmp.eq.s32.totalorder %s31, 0
      %p178 = por %p176, %p177
      %s179 = ssub.s32 %s25, %s32
      %p180 = scmp.eq.s32.totalorder %s179, 0
      %s182 = sadd.s32 %s181, 1
      %s183 = scalar_select %p180, %s181, %s182
      %p186 = pneg %p180
      %p187 = scmp.eq.s32.totalorder %s25, 1
      %p188 = por %p186, %p187
      %p189 = scmp.ne.s32.totalorder %s181, %s184
      %p190 = scmp.eq.s32.totalorder %s25, 0
      %p191 = por %p189, %p190
      %p192 = scmp.ne.s32.totalorder %s181, %s184
      %p193 = scmp.eq.s32.totalorder %s30, 1
      %p194 = por %p192, %p193
      %p195 = scmp.ne.s32.totalorder %s184, %s185
      %p196 = scmp.eq.s32.totalorder %s30, 0
      %p197 = por %p195, %p196
      %p198 = scmp.ne.s32.totalorder %s184, %s185
      %p199 = scmp.eq.s32.totalorder %s31, 1
      %p200 = por %p198, %p199
      %p202 = scmp.ne.s32.totalorder %s185, %s201
      %p203 = scmp.eq.s32.totalorder %s31, 0
      %p204 = por %p202, %p203
      %s205 = ssub.s32 %s25, %s32
      %p206 = scmp.eq.s32.totalorder %s205, 0
      %s208 = sadd.s32 %s207, 1
      %s209 = scalar_select %p206, %s207, %s208
      %p212 = pneg %p206
      %p213 = scmp.eq.s32.totalorder %s25, 1
      %p214 = por %p212, %p213
      %p215 = scmp.ne.s32.totalorder %s207, %s210
      %p216 = scmp.eq.s32.totalorder %s25, 0
      %p217 = por %p215, %p216
      %p218 = scmp.ne.s32.totalorder %s207, %s210
      %p219 = scmp.eq.s32.totalorder %s30, 1
      %p220 = por %p218, %p219
      %p221 = scmp.ne.s32.totalorder %s210, %s211
      %p222 = scmp.eq.s32.totalorder %s30, 0
      %p223 = por %p221, %p222
      %p224 = scmp.ne.s32.totalorder %s210, %s211
      %p225 = scmp.eq.s32.totalorder %s31, 1
      %p226 = por %p224, %p225
      %p228 = scmp.ne.s32.totalorder %s211, %s227
      %p229 = scmp.eq.s32.totalorder %s31, 0
      %p230 = por %p228, %p229
      %s231 = ssub.s32 %s25, %s32
      %p232 = scmp.eq.s32.totalorder %s231, 0
      %s234 = sadd.s32 %s233, 1
      %s235 = scalar_select %p232, %s233, %s234
      %p238 = pneg %p232
      %p239 = scmp.eq.s32.totalorder %s25, 1
      %p240 = por %p238, %p239
      %p241 = scmp.ne.s32.totalorder %s233, %s236
      %p242 = scmp.eq.s32.totalorder %s25, 0
      %p243 = por %p241, %p242
      %p244 = scmp.ne.s32.totalorder %s233, %s236
      %p245 = scmp.eq.s32.totalorder %s30, 1
      %p246 = por %p244, %p245
      %p247 = scmp.ne.s32.totalorder %s236, %s237
      %p248 = scmp.eq.s32.totalorder %s30, 0
      %p249 = por %p247, %p248
      %p250 = scmp.ne.s32.totalorder %s236, %s237
      %p251 = scmp.eq.s32.totalorder %s31, 1
      %p252 = por %p250, %p251
      %p254 = scmp.ne.s32.totalorder %s237, %s253
      %p255 = scmp.eq.s32.totalorder %s31, 0
      %p256 = por %p254, %p255
      %s257 = ssub.s32 %s25, %s32
      %p258 = scmp.eq.s32.totalorder %s257, 0
      %s260 = sadd.s32 %s259, 1
      %s261 = scalar_select %p258, %s259, %s260
      %p264 = pneg %p258
      %p265 = scmp.eq.s32.totalorder %s25, 1
      %p266 = por %p264, %p265
      %p267 = scmp.ne.s32.totalorder %s259, %s262
      %p268 = scmp.eq.s32.totalorder %s25, 0
      %p269 = por %p267, %p268
      %p270 = scmp.ne.s32.totalorder %s259, %s262
      %p271 = scmp.eq.s32.totalorder %s30, 1
      %p272 = por %p270, %p271
      %p273 = scmp.ne.s32.totalorder %s262, %s263
      %p274 = scmp.eq.s32.totalorder %s30, 0
      %p275 = por %p273, %p274
      %p276 = scmp.ne.s32.totalorder %s262, %s263
      %p277 = scmp.eq.s32.totalorder %s31, 1
      %p278 = por %p276, %p277
      %p280 = scmp.ne.s32.totalorder %s263, %s279
      %p281 = scmp.eq.s32.totalorder %s31, 0
      %p282 = por %p280, %p281
      %s283 = ssub.s32 %s25, %s32
      %p284 = scmp.eq.s32.totalorder %s283, 0
      %s286 = sadd.s32 %s285, 1
      %s287 = scalar_select %p284, %s285, %s286
      %p290 = pneg %p284
      %p291 = scmp.eq.s32.totalorder %s25, 1
      %p292 = por %p290, %p291
      %p293 = scmp.ne.s32.totalorder %s285, %s288
      %p294 = scmp.eq.s32.totalorder %s25, 0
      %p295 = por %p293, %p294
      %p296 = scmp.ne.s32.totalorder %s285, %s288
      %p297 = scmp.eq.s32.totalorder %s30, 1
      %p298 = por %p296, %p297
      %p299 = scmp.ne.s32.totalorder %s288, %s289
      %p300 = scmp.eq.s32.totalorder %s30, 0
      %p301 = por %p299, %p300
      %p302 = scmp.ne.s32.totalorder %s288, %s289
      %p303 = scmp.eq.s32.totalorder %s31, 1
      %p304 = por %p302, %p303
      %p306 = scmp.ne.s32.totalorder %s289, %s305
      %p307 = scmp.eq.s32.totalorder %s31, 0
      %p308 = por %p306, %p307
      %s309 = ssub.s32 %s25, %s32
      %p310 = scmp.eq.s32.totalorder %s309, 0
      %s312 = sadd.s32 %s311, 1
      %s313 = scalar_select %p310, %s311, %s312
      %p316 = pneg %p310
      %p317 = scmp.eq.s32.totalorder %s25, 1
      %p318 = por %p316, %p317
      %p319 = scmp.ne.s32.totalorder %s311, %s314
      %p320 = scmp.eq.s32.totalorder %s25, 0
      %p321 = por %p319, %p320
      %p322 = scmp.ne.s32.totalorder %s311, %s314
      %p323 = scmp.eq.s32.totalorder %s30, 1
      %p324 = por %p322, %p323
      %p325 = scmp.ne.s32.totalorder %s314, %s315
      %p326 = scmp.eq.s32.totalorder %s30, 0
      %p327 = por %p325, %p326
      %p328 = scmp.ne.s32.totalorder %s314, %s315
      %p329 = scmp.eq.s32.totalorder %s31, 1
      %p330 = por %p328, %p329
      %p332 = scmp.ne.s32.totalorder %s315, %s331
      %p333 = scmp.eq.s32.totalorder %s31, 0
      %p334 = por %p332, %p333
      %s335 = ssub.s32 %s25, %s32
      %p336 = scmp.eq.s32.totalorder %s335, 0
      %s338 = sadd.s32 %s337, 1
      %s339 = scalar_select %p336, %s337, %s338
      %p342 = pneg %p336
      %p343 = scmp.eq.s32.totalorder %s25, 1
      %p344 = por %p342, %p343
      %p345 = scmp.ne.s32.totalorder %s337, %s340
      %p346 = scmp.eq.s32.totalorder %s25, 0
      %p347 = por %p345, %p346
      %p348 = scmp.ne.s32.totalorder %s337, %s340
      %p349 = scmp.eq.s32.totalorder %s30, 1
      %p350 = por %p348, %p349
      %p351 = scmp.ne.s32.totalorder %s340, %s341
      %p352 = scmp.eq.s32.totalorder %s30, 0
      %p353 = por %p351, %p352
      %p354 = scmp.ne.s32.totalorder %s340, %s341
      %p355 = scmp.eq.s32.totalorder %s31, 1
      %p356 = por %p354, %p355
      %p358 = scmp.ne.s32.totalorder %s341, %s357
      %p359 = scmp.eq.s32.totalorder %s31, 0
      %p360 = por %p358, %p359
      %s361 = ssub.s32 %s25, %s32
      %p362 = scmp.eq.s32.totalorder %s361, 0
      %s364 = sadd.s32 %s363, 1
      %s365 = scalar_select %p362, %s363, %s364
      %p368 = pneg %p362
      %p369 = scmp.eq.s32.totalorder %s25, 1
      %p370 = por %p368, %p369
      %p371 = scmp.ne.s32.totalorder %s363, %s366
      %p372 = scmp.eq.s32.totalorder %s25, 0
      %p373 = por %p371, %p372
      %p374 = scmp.ne.s32.totalorder %s363, %s366
      %p375 = scmp.eq.s32.totalorder %s30, 1
      %p376 = por %p374, %p375
      %p377 = scmp.ne.s32.totalorder %s366, %s367
      %p378 = scmp.eq.s32.totalorder %s30, 0
      %p379 = por %p377, %p378
      %p380 = scmp.ne.s32.totalorder %s366, %s367
      %p381 = scmp.eq.s32.totalorder %s31, 1
      %p382 = por %p380, %p381
      %p384 = scmp.ne.s32.totalorder %s367, %s383
      %p385 = scmp.eq.s32.totalorder %s31, 0
      %p386 = por %p384, %p385
      %s388 = sadd.s32 %s387, 1
      %p391 = scmp.eq.s32.totalorder %s25, 1
      %p392 = scmp.ne.s32.totalorder %s387, %s389
      %p393 = scmp.eq.s32.totalorder %s25, 0
      %p394 = por %p392, %p393
      %p395 = scmp.ne.s32.totalorder %s387, %s389
      %p396 = scmp.eq.s32.totalorder %s30, 1
      %p397 = por %p395, %p396
      %p398 = scmp.ne.s32.totalorder %s389, %s390
      %p399 = scmp.eq.s32.totalorder %s30, 0
      %p400 = por %p398, %p399
      %p401 = scmp.ne.s32.totalorder %s389, %s390
      %p402 = scmp.eq.s32.totalorder %s31, 1
      %p403 = por %p401, %p402
      %p405 = scmp.ne.s32.totalorder %s390, %s404
      %p406 = scmp.eq.s32.totalorder %s31, 0
      %p407 = por %p405, %p406
      %s409 = sadd.s32 %s408, 1
      %p412 = scmp.eq.s32.totalorder %s25, 1
      %p413 = scmp.ne.s32.totalorder %s408, %s410
      %p414 = scmp.eq.s32.totalorder %s25, 0
      %p415 = por %p413, %p414
      %p416 = scmp.ne.s32.totalorder %s408, %s410
      %p417 = scmp.eq.s32.totalorder %s30, 1
      %p418 = por %p416, %p417
      %p419 = scmp.ne.s32.totalorder %s410, %s411
      %p420 = scmp.eq.s32.totalorder %s30, 0
      %p421 = por %p419, %p420
      %p422 = scmp.ne.s32.totalorder %s410, %s411
      %p423 = scmp.eq.s32.totalorder %s31, 1
      %p424 = por %p422, %p423
      %p426 = scmp.ne.s32.totalorder %s411, %s425
      %p427 = scmp.eq.s32.totalorder %s31, 0
      %p428 = por %p426, %p427
      %s430 = sadd.s32 %s429, 1
      %p433 = scmp.eq.s32.totalorder %s25, 1
      %p434 = scmp.ne.s32.totalorder %s429, %s431
      %p435 = scmp.eq.s32.totalorder %s25, 0
      %p436 = por %p434, %p435
      %p437 = scmp.ne.s32.totalorder %s429, %s431
      %p438 = scmp.eq.s32.totalorder %s30, 1
      %p439 = por %p437, %p438
      %p440 = scmp.ne.s32.totalorder %s431, %s432
      %p441 = scmp.eq.s32.totalorder %s30, 0
      %p442 = por %p440, %p441
      %p443 = scmp.ne.s32.totalorder %s431, %s432
      %p444 = scmp.eq.s32.totalorder %s31, 1
      %p445 = por %p443, %p444
      %p447 = scmp.ne.s32.totalorder %s432, %s446
      %p448 = scmp.eq.s32.totalorder %s31, 0
      %p449 = por %p447, %p448
      %p450 = scmp.le.s32.totalorder 1, %s25
      %p451 = scmp.lt.s32.totalorder %s25, 3
      %p452 = pnand %p450, %p451
      %p453 = pneg %p452
      // Predicated region
      $region9: #{tpu_custom_call.1} parent=5 // pred_check
        _
      $region10: #{tpu_custom_call.1} parent=5 // pred_check_branch
        %455 = sbr.rel (%p452) target = $region12
      $region11: #{tpu_custom_call.1} parent=5 // pred_region
        %s456 = ssub.s32 %s25, 1
        // Predicated region
        $region13: #{tpu_custom_call.1} parent=11 // pred_check
          %p457 = pneg %p46
        $region14: #{tpu_custom_call.1} parent=11 // pred_check_branch
          %459 = sbr.rel (%p457) target = $region16
        $region15: #{tpu_custom_call.1} parent=11 // pred_region
          %s461 = ssub.s32 256, 256
          %462 = vsyncadd [#allocation4], %s461
          %s463 = sshll.u32 [#allocation3], 4
          %s464 = int_to_ptr.vmem [resolvable:$true] %s463
          %469 = dma.hbm_to_vmem [thread:$0]  %s0, 256, %s464, [#allocation4], 128, 128, 8
        $region16: #{tpu_custom_call.1} parent=11 // pred_fallthru
          _
        // Predicated region
        $region17: #{tpu_custom_call.1} parent=11 // pred_check
          %p470 = pneg %p67
        $region18: #{tpu_custom_call.1} parent=11 // pred_check_branch
          %472 = sbr.rel (%p470) target = $region20
        $region19: #{tpu_custom_call.1} parent=11 // pred_region
          %s474 = ssub.s32 32, 32
          %475 = vsyncadd [#allocation7], %s474
          %s476 = sshll.u32 [#allocation6], 4
          %s477 = int_to_ptr.vmem [resolvable:$true] %s476
          %482 = dma.hbm_to_vmem [thread:$0]  %s1, 32, %s477, [#allocation7], 16, 16, 1
        $region20: #{tpu_custom_call.1} parent=11 // pred_fallthru
          _
        // Predicated region
        $region21: #{tpu_custom_call.1} parent=11 // pred_check
          %p483 = pneg %p400
        $region22: #{tpu_custom_call.1} parent=11 // pred_check_branch
          %485 = sbr.rel (%p483) target = $region24
        $region23: #{tpu_custom_call.1} parent=11 // pred_region
          %s487 = ssub.s32 1024, 1024
          %488 = vsyncadd [#allocation7], %s487
          %s489 = sshll.u32 [#allocation12], 4
          %s490 = int_to_ptr.vmem [resolvable:$true] %s489
          %495 = dma.hbm_to_vmem [thread:$0]  %s14, 1024, %s490, [#allocation7], 64, 64, 4
        $region24: #{tpu_custom_call.1} parent=11 // pred_fallthru
          _
        // Predicated region
        $region25: #{tpu_custom_call.1} parent=11 // pred_check
          %p496 = pneg %p421
        $region26: #{tpu_custom_call.1} parent=11 // pred_check_branch
          %498 = sbr.rel (%p496) target = $region28
        $region27: #{tpu_custom_call.1} parent=11 // pred_region
          _
        $region28: #{tpu_custom_call.1} parent=11 // pred_fallthru
          _
      $region12: #{tpu_custom_call.1} parent=5 // pred_fallthru
        _
      %p499 = scmp.lt.s32.totalorder %s25, 2
      // Predicated region
      $region29: #{tpu_custom_call.1} parent=5 // pred_check
        %p500 = pneg %p499
      $region30: #{tpu_custom_call.1} parent=5 // pred_check_branch
        %502 = sbr.rel (%p500) target = $region32
      $region31: #{tpu_custom_call.1} parent=5 // pred_region
        // Predicated region
        $region33: #{tpu_custom_call.1} parent=31 // pred_check
          %p503 = pneg %p87
        $region34: #{tpu_custom_call.1} parent=31 // pred_check_branch
          %505 = sbr.rel (%p503) target = $region36
        $region35: #{tpu_custom_call.1} parent=31 // pred_region
          %s506 = sand.u32 %s25, 1
          %s507 = scalar_lea.sflag [#allocation4], %s506
          %s508 = sand.u32 %s77, 1
          %s509 = smul.addr %s508, 192
          %s510 = scalar_lea.vmem [#allocation8], %s509
          %s512 = ssub.s32 3072, 3072
          %513 = vsyncadd %s507, %s512
          %s514 = smul.addr %s25, 48
          %s515 = smul.addr %s514, 64
          %s516 = scalar_lea.hbm %s2, %s515
          %s517 = sshll.u32 %s510, 4
          %s518 = int_to_ptr.vmem [resolvable:$true] %s517
          %523 = dma.hbm_to_vmem [thread:$0]  %s516, 3072, %s518, %s507, 192, 192, 12
        $region36: #{tpu_custom_call.1} parent=31 // pred_fallthru
          _
        // Predicated region
        $region37: #{tpu_custom_call.1} parent=31 // pred_check
          %p524 = pneg %p113
        $region38: #{tpu_custom_call.1} parent=31 // pred_check_branch
          %526 = sbr.rel (%p524) target = $region40
        $region39: #{tpu_custom_call.1} parent=31 // pred_region
          %p527 = scmp.lt.s32.totalorder %s25, 1
          %s528 = scalar_select %p527, %s25, 1
          %s529 = smul.addr %s528, 3
          %s530 = scalar_lea.vmem %s3, %s529
        $region40: #{tpu_custom_call.1} parent=31 // pred_fallthru
          _
        // Predicated region
        $region41: #{tpu_custom_call.1} parent=31 // pred_check
          %p531 = pneg %p139
        $region42: #{tpu_custom_call.1} parent=31 // pred_check_branch
          %533 = sbr.rel (%p531) target = $region44
        $region43: #{tpu_custom_call.1} parent=31 // pred_region
          %s534 = sand.u32 %s25, 1
          %s535 = scalar_lea.sflag [#allocation4], %s534
          %s536 = sand.u32 %s129, 1
          %s537 = smul.addr %s536, 64
          %s538 = scalar_lea.vmem [#allocation9], %s537
          %s540 = ssub.s32 1024, 1024
          %541 = vsyncadd %s535, %s540
          %s542 = smul.addr %s25, 16
          %s543 = smul.addr %s542, 64
          %s544 = scalar_lea.hbm %s4, %s543
          %s545 = sshll.u32 %s538, 4
          %s546 = int_to_ptr.vmem [resolvable:$true] %s545
          %551 = dma.hbm_to_vmem [thread:$0]  %s544, 1024, %s546, %s535, 64, 64, 4
        $region44: #{tpu_custom_call.1} parent=31 // pred_fallthru
          _
        // Predicated region
        $region45: #{tpu_custom_call.1} parent=31 // pred_check
          %p552 = pneg %p165
        $region46: #{tpu_custom_call.1} parent=31 // pred_check_branch
          %554 = sbr.rel (%p552) target = $region48
        $region47: #{tpu_custom_call.1} parent=31 // pred_region
          %p555 = scmp.lt.s32.totalorder %s25, 1
          %s556 = scalar_select %p555, %s25, 1
          %s557 = scalar_lea.vmem %s5, %s556
        $region48: #{tpu_custom_call.1} parent=31 // pred_fallthru
          _
        // Predicated region
        $region49: #{tpu_custom_call.1} parent=31 // pred_check
          %p558 = pneg %p191
        $region50: #{tpu_custom_call.1} parent=31 // pred_check_branch
          %560 = sbr.rel (%p558) target = $region52
        $region51: #{tpu_custom_call.1} parent=31 // pred_region
          %s561 = sand.u32 %s25, 1
          %s562 = scalar_lea.sflag [#allocation4], %s561
          %s563 = sand.u32 %s181, 1
          %s564 = smul.addr %s563, 128
          %s565 = scalar_lea.vmem [#allocation10], %s564
          %s567 = ssub.s32 2048, 2048
          %568 = vsyncadd %s562, %s567
          %s569 = smul.addr %s25, 32
          %s570 = smul.addr %s569, 64
          %s571 = scalar_lea.hbm %s6, %s570
          %s572 = sshll.u32 %s565, 4
          %s573 = int_to_ptr.vmem [resolvable:$true] %s572
          %578 = dma.hbm_to_vmem [thread:$0]  %s571, 2048, %s573, %s562, 128, 128, 8
        $region52: #{tpu_custom_call.1} parent=31 // pred_fallthru
          _
        // Predicated region
        $region53: #{tpu_custom_call.1} parent=31 // pred_check
          %p579 = pneg %p217
        $region54: #{tpu_custom_call.1} parent=31 // pred_check_branch
          %581 = sbr.rel (%p579) target = $region56
        $region55: #{tpu_custom_call.1} parent=31 // pred_region
          %p582 = scmp.lt.s32.totalorder %s25, 1
          %s583 = scalar_select %p582, %s25, 1
          %s584 = smul.addr %s583, 2
          %s585 = scalar_lea.vmem %s7, %s584
        $region56: #{tpu_custom_call.1} parent=31 // pred_fallthru
          _
        // Predicated region
        $region57: #{tpu_custom_call.1} parent=31 // pred_check
          %p586 = pneg %p243
        $region58: #{tpu_custom_call.1} parent=31 // pred_check_branch
          %588 = sbr.rel (%p586) target = $region60
        $region59: #{tpu_custom_call.1} parent=31 // pred_region
          %s589 = sand.u32 %s25, 1
          %s590 = scalar_lea.sflag [#allocation4], %s589
          %s591 = sand.u32 %s233, 1
          %s592 = smul.addr %s591, 128
          %s593 = scalar_lea.vmem [#allocation11], %s592
          %s595 = ssub.s32 2048, 2048
          %596 = vsyncadd %s590, %s595
          %s597 = smul.addr %s25, 32
          %s598 = smul.addr %s597, 64
          %s599 = scalar_lea.hbm %s8, %s598
          %s600 = sshll.u32 %s593, 4
          %s601 = int_to_ptr.vmem [resolvable:$true] %s600
          %606 = dma.hbm_to_vmem [thread:$0]  %s599, 2048, %s601, %s590, 64, 64, 4
        $region60: #{tpu_custom_call.1} parent=31 // pred_fallthru
          _
        // Predicated region
        $region61: #{tpu_custom_call.1} parent=31 // pred_check
          %p607 = pneg %p269
        $region62: #{tpu_custom_call.1} parent=31 // pred_check_branch
          %609 = sbr.rel (%p607) target = $region64
        $region63: #{tpu_custom_call.1} parent=31 // pred_region
          %p610 = scmp.lt.s32.totalorder %s25, 1
          %s611 = scalar_select %p610, %s25, 1
          %s612 = scalar_lea.vmem %s9, %s611
        $region64: #{tpu_custom_call.1} parent=31 // pred_fallthru
          _
        // Predicated region
        $region65: #{tpu_custom_call.1} parent=31 // pred_check
          %p613 = pneg %p295
        $region66: #{tpu_custom_call.1} parent=31 // pred_check_branch
          %615 = sbr.rel (%p613) target = $region68
        $region67: #{tpu_custom_call.1} parent=31 // pred_region
          %p616 = scmp.lt.s32.totalorder %s25, 1
          %s617 = scalar_select %p616, %s25, 1
          %s618 = scalar_lea.vmem %s10, %s617
        $region68: #{tpu_custom_call.1} parent=31 // pred_fallthru
          _
        // Predicated region
        $region69: #{tpu_custom_call.1} parent=31 // pred_check
          %p619 = pneg %p321
        $region70: #{tpu_custom_call.1} parent=31 // pred_check_branch
          %621 = sbr.rel (%p619) target = $region72
        $region71: #{tpu_custom_call.1} parent=31 // pred_region
          %p622 = scmp.lt.s32.totalorder %s25, 1
          %s623 = scalar_select %p622, %s25, 1
          %s624 = scalar_lea.vmem %s11, %s623
        $region72: #{tpu_custom_call.1} parent=31 // pred_fallthru
          _
        // Predicated region
        $region73: #{tpu_custom_call.1} parent=31 // pred_check
          %p625 = pneg %p347
        $region74: #{tpu_custom_call.1} parent=31 // pred_check_branch
          %627 = sbr.rel (%p625) target = $region76
        $region75: #{tpu_custom_call.1} parent=31 // pred_region
          %p628 = scmp.lt.s32.totalorder %s25, 1
          %s629 = scalar_select %p628, %s25, 1
          %s630 = scalar_lea.vmem %s12, %s629
        $region76: #{tpu_custom_call.1} parent=31 // pred_fallthru
          _
        // Predicated region
        $region77: #{tpu_custom_call.1} parent=31 // pred_check
          %p631 = pneg %p373
        $region78: #{tpu_custom_call.1} parent=31 // pred_check_branch
          %633 = sbr.rel (%p631) target = $region80
        $region79: #{tpu_custom_call.1} parent=31 // pred_region
          %p634 = scmp.lt.s32.totalorder %s25, 1
          %s635 = scalar_select %p634, %s25, 1
          %s636 = scalar_lea.vmem %s13, %s635
        $region80: #{tpu_custom_call.1} parent=31 // pred_fallthru
          _
      $region32: #{tpu_custom_call.1} parent=5 // pred_fallthru
        _
      %p637 = scmp.le.s32.totalorder 1, %s25
      %p638 = scmp.lt.s32.totalorder %s25, 3
      %p639 = pnand %p637, %p638
      %p640 = pneg %p639
      // Predicated region
      $region81: #{tpu_custom_call.1} parent=5 // pred_check
        _
      $region82: #{tpu_custom_call.1} parent=5 // pred_check_branch
        %642 = sbr.rel (%p639) target = $region84
      $region83: #{tpu_custom_call.1} parent=5 // pred_region
        %s643 = ssub.s32 %s25, 1
        // Predicated region
        $region85: #{tpu_custom_call.1} parent=83 // pred_check
          %p644 = pneg %p46
        $region86: #{tpu_custom_call.1} parent=83 // pred_check_branch
          %646 = sbr.rel (%p644) target = $region88
        $region87: #{tpu_custom_call.1} parent=83 // pred_region
          %647 = dma.done [#allocation4], 256
        $region88: #{tpu_custom_call.1} parent=83 // pred_fallthru
          _
        // Predicated region
        $region89: #{tpu_custom_call.1} parent=83 // pred_check
          %p648 = pneg %p67
        $region90: #{tpu_custom_call.1} parent=83 // pred_check_branch
          %650 = sbr.rel (%p648) target = $region92
        $region91: #{tpu_custom_call.1} parent=83 // pred_region
          %651 = dma.done [#allocation7], 32
        $region92: #{tpu_custom_call.1} parent=83 // pred_fallthru
          _
        %s652 = sand.u32 %s30, 1
        %s653 = scalar_lea.sflag [#allocation4], %s652
        %s654 = sand.u32 %s80, 1
        %s655 = smul.addr %s654, 192
        %s656 = scalar_lea.vmem [#allocation8], %s655
        // Predicated region
        $region93: #{tpu_custom_call.1} parent=83 // pred_check
          %p657 = pneg %p93
        $region94: #{tpu_custom_call.1} parent=83 // pred_check_branch
          %659 = sbr.rel (%p657) target = $region96
        $region95: #{tpu_custom_call.1} parent=83 // pred_region
          %660 = dma.done %s653, 3072
        $region96: #{tpu_custom_call.1} parent=83 // pred_fallthru
          _
        %s661 = sand.u32 %s30, 1
        %s662 = scalar_lea.sflag [#allocation4], %s661
        %s663 = sand.u32 %s132, 1
        %s664 = smul.addr %s663, 64
        %s665 = scalar_lea.vmem [#allocation9], %s664
        // Predicated region
        $region97: #{tpu_custom_call.1} parent=83 // pred_check
          %p666 = pneg %p145
        $region98: #{tpu_custom_call.1} parent=83 // pred_check_branch
          %668 = sbr.rel (%p666) target = $region100
        $region99: #{tpu_custom_call.1} parent=83 // pred_region
          %669 = dma.done %s662, 1024
        $region100: #{tpu_custom_call.1} parent=83 // pred_fallthru
          _
        %s670 = sand.u32 %s30, 1
        %s671 = scalar_lea.sflag [#allocation4], %s670
        %s672 = sand.u32 %s184, 1
        %s673 = smul.addr %s672, 128
        %s674 = scalar_lea.vmem [#allocation10], %s673
        // Predicated region
        $region101: #{tpu_custom_call.1} parent=83 // pred_check
          %p675 = pneg %p197
        $region102: #{tpu_custom_call.1} parent=83 // pred_check_branch
          %677 = sbr.rel (%p675) target = $region104
        $region103: #{tpu_custom_call.1} parent=83 // pred_region
          %678 = dma.done %s671, 2048
        $region104: #{tpu_custom_call.1} parent=83 // pred_fallthru
          _
        %s679 = sand.u32 %s30, 1
        %s680 = scalar_lea.sflag [#allocation4], %s679
        %s681 = sand.u32 %s236, 1
        %s682 = smul.addr %s681, 128
        %s683 = scalar_lea.vmem [#allocation11], %s682
        // Predicated region
        $region105: #{tpu_custom_call.1} parent=83 // pred_check
          %p684 = pneg %p249
        $region106: #{tpu_custom_call.1} parent=83 // pred_check_branch
          %686 = sbr.rel (%p684) target = $region108
        $region107: #{tpu_custom_call.1} parent=83 // pred_region
          %687 = dma.done %s680, 2048
        $region108: #{tpu_custom_call.1} parent=83 // pred_fallthru
          _
        // Predicated region
        $region109: #{tpu_custom_call.1} parent=83 // pred_check
          %p688 = pneg %p400
        $region110: #{tpu_custom_call.1} parent=83 // pred_check_branch
          %690 = sbr.rel (%p688) target = $region112
        $region111: #{tpu_custom_call.1} parent=83 // pred_region
          %691 = dma.done [#allocation7], 1024
        $region112: #{tpu_custom_call.1} parent=83 // pred_fallthru
          _
        %p692 = pneg %p46
        %p693 = pneg %p43
        %p694 = pneg %p67
        %p695 = pneg %p64
        %s696 = sand.u32 %s30, 1
        %s697 = scalar_lea.sflag [#allocation4], %s696
        %s698 = sand.u32 %s80, 1
        %s699 = smul.addr %s698, 192
        %s700 = scalar_lea.vmem [#allocation8], %s699
        %p701 = pneg %p93
        %p702 = pneg %p90
        %p703 = scmp.lt.s32.totalorder %s30, 1
        %s704 = scalar_select %p703, %s30, 1
        %s705 = smul.addr %s704, 3
        %s706 = scalar_lea.vmem %s3, %s705
        %p707 = pneg %p119
        %p708 = pneg %p116
        %s709 = sand.u32 %s30, 1
        %s710 = scalar_lea.sflag [#allocation4], %s709
        %s711 = sand.u32 %s132, 1
        %s712 = smul.addr %s711, 64
        %s713 = scalar_lea.vmem [#allocation9], %s712
        %p714 = pneg %p145
        %p715 = pneg %p142
        %p716 = scmp.lt.s32.totalorder %s30, 1
        %s717 = scalar_select %p716, %s30, 1
        %s718 = scalar_lea.vmem %s5, %s717
        %p719 = pneg %p171
        %p720 = pneg %p168
        %s721 = sand.u32 %s30, 1
        %s722 = scalar_lea.sflag [#allocation4], %s721
        %s723 = sand.u32 %s184, 1
        %s724 = smul.addr %s723, 128
        %s725 = scalar_lea.vmem [#allocation10], %s724
        %p726 = pneg %p197
        %p727 = pneg %p194
        %p728 = scmp.lt.s32.totalorder %s30, 1
        %s729 = scalar_select %p728, %s30, 1
        %s730 = smul.addr %s729, 2
        %s731 = scalar_lea.vmem %s7, %s730
        %p732 = pneg %p223
        %p733 = pneg %p220
        %s734 = sand.u32 %s30, 1
        %s735 = scalar_lea.sflag [#allocation4], %s734
        %s736 = sand.u32 %s236, 1
        %s737 = smul.addr %s736, 128
        %s738 = scalar_lea.vmem [#allocation11], %s737
        %p739 = pneg %p249
        %p740 = pneg %p246
        %p741 = scmp.lt.s32.totalorder %s30, 1
        %s742 = scalar_select %p741, %s30, 1
        %s743 = scalar_lea.vmem %s9, %s742
        %p744 = pneg %p275
        %p745 = pneg %p272
        %p746 = scmp.lt.s32.totalorder %s30, 1
        %s747 = scalar_select %p746, %s30, 1
        %s748 = scalar_lea.vmem %s10, %s747
        %p749 = pneg %p301
        %p750 = pneg %p298
        %p751 = scmp.lt.s32.totalorder %s30, 1
        %s752 = scalar_select %p751, %s30, 1
        %s753 = scalar_lea.vmem %s11, %s752
        %p754 = pneg %p327
        %p755 = pneg %p324
        %p756 = scmp.lt.s32.totalorder %s30, 1
        %s757 = scalar_select %p756, %s30, 1
        %s758 = scalar_lea.vmem %s12, %s757
        %p759 = pneg %p353
        %p760 = pneg %p350
        %p761 = scmp.lt.s32.totalorder %s30, 1
        %s762 = scalar_select %p761, %s30, 1
        %s763 = scalar_lea.vmem %s13, %s762
        %p764 = pneg %p379
        %p765 = pneg %p376
        %p766 = pneg %p400
        %p767 = pneg %p397
        %p768 = pneg %p421
        %p769 = pneg %p418
        %p770 = pneg %p442
        %p771 = pneg %p439
        %p772 = scmp.lt.s32.totalorder %s30, 1
        %s773 = scalar_select %p772, %s30, 1
        %s774 = smul.addr %s773, 3
        %s775 = scalar_lea.vmem %s3, %s774
        %p776 = scmp.lt.s32.totalorder %s30, 1
        %s777 = scalar_select %p776, %s30, 1
        %s778 = scalar_lea.vmem %s5, %s777
        %p779 = scmp.lt.s32.totalorder %s30, 1
        %s780 = scalar_select %p779, %s30, 1
        %s781 = smul.addr %s780, 2
        %s782 = scalar_lea.vmem %s7, %s781
        %p783 = scmp.lt.s32.totalorder %s30, 1
        %s784 = scalar_select %p783, %s30, 1
        %s785 = scalar_lea.vmem %s9, %s784
        %p786 = scmp.lt.s32.totalorder %s30, 1
        %s787 = scalar_select %p786, %s30, 1
        %s788 = scalar_lea.vmem %s10, %s787
        %p789 = scmp.lt.s32.totalorder %s30, 1
        %s790 = scalar_select %p789, %s30, 1
        %s791 = scalar_lea.vmem %s11, %s790
        %p792 = scmp.lt.s32.totalorder %s30, 1
        %s793 = scalar_select %p792, %s30, 1
        %s794 = scalar_lea.vmem %s12, %s793
        %p795 = scmp.lt.s32.totalorder %s30, 1
        %s796 = scalar_select %p795, %s30, 1
        %s797 = scalar_lea.vmem %s13, %s796
        %p799 = scmp.eq.s32.totalorder %s30, 0
        // Predicated region
        $region113: #{tpu_custom_call.1} parent=83 // pred_check
          %p800 = pneg %p799
        $region114: #{tpu_custom_call.1} parent=83 // pred_check_branch
          %802 = sbr.rel (%p800) target = $region116
        $region115: #{tpu_custom_call.1} parent=83 // pred_region
          %v803 = vld [vmem:[#allocation3] sm:$0xff]
          %v804 = vld [vmem:[#allocation3 + $0x8] sm:$0xff]
          %805 = vst [vmem:[#allocation2] sm:$0xff] %v803
          %806 = vst [vmem:[#allocation2 + $0x8] sm:$0xff] %v804
        $region116: #{tpu_custom_call.1} parent=83 // pred_fallthru
          _
        %v807 = vld [vmem:[#allocation2] sm:$0xff]
        %v808 = vld [vmem:[#allocation2 + $0x8] sm:$0xff]
        %v809 = vpack.c.bf16 %v808, %v807
        %v810 = vld [vmem:[%s656] sm:$0xff]
        %v811 = vld [vmem:[%s656 + $0x8] sm:$0xf]
        %v812 = vld [vmem:[%s656 + $0xc] sm:$0xff]
        %v813 = vld [vmem:[%s656 + $0x14] sm:$0xf]
        %v814 = vld [vmem:[%s656 + $0x18] sm:$0xff]
        %v815 = vld [vmem:[%s656 + $0x20] sm:$0xf]
        %v816 = vld [vmem:[%s656 + $0x24] sm:$0xff]
        %v817 = vld [vmem:[%s656 + $0x2c] sm:$0xf]
        %v818 = vld [vmem:[%s656 + $0x30] sm:$0xff]
        %v819 = vld [vmem:[%s656 + $0x38] sm:$0xf]
        %v820 = vld [vmem:[%s656 + $0x3c] sm:$0xff]
        %v821 = vld [vmem:[%s656 + $0x44] sm:$0xf]
        %v822 = vld [vmem:[%s656 + $0x48] sm:$0xff]
        %v823 = vld [vmem:[%s656 + $0x50] sm:$0xf]
        %v824 = vld [vmem:[%s656 + $0x54] sm:$0xff]
        %v825 = vld [vmem:[%s656 + $0x5c] sm:$0xf]
        %v826 = vld [vmem:[%s656 + $0x60] sm:$0xff]
        %v827 = vld [vmem:[%s656 + $0x68] sm:$0xf]
        %v828 = vld [vmem:[%s656 + $0x6c] sm:$0xff]
        %v829 = vld [vmem:[%s656 + $0x74] sm:$0xf]
        %v830 = vld [vmem:[%s656 + $0x78] sm:$0xff]
        %v831 = vld [vmem:[%s656 + $0x80] sm:$0xf]
        %v832 = vld [vmem:[%s656 + $0x84] sm:$0xff]
        %v833 = vld [vmem:[%s656 + $0x8c] sm:$0xf]
        %v834 = vld [vmem:[%s656 + $0x90] sm:$0xff]
        %v835 = vld [vmem:[%s656 + $0x98] sm:$0xf]
        %v836 = vld [vmem:[%s656 + $0x9c] sm:$0xff]
        %v837 = vld [vmem:[%s656 + $0xa4] sm:$0xf]
        %v838 = vld [vmem:[%s656 + $0xa8] sm:$0xff]
        %v839 = vld [vmem:[%s656 + $0xb0] sm:$0xf]
        %v840 = vld [vmem:[%s656 + $0xb4] sm:$0xff]
        %v841 = vld [vmem:[%s656 + $0xbc] sm:$0xf]
        %v842 = vld [vmem:[%s775] sm:$0x7]
        %v844 = vlaneseq
        %v845 = vshrl.u32 %v844, 7
        %v846 = vsub.s32 0, %v845
        %v847 = vrot.slane %v842, %v846
        %v848 = vlaneseq
        %v849 = vshrl.u32 %v848, 7
        %v850 = vsub.s32 1, %v849
        %v851 = vrot.slane %v842, %v850
        %v852 = vlaneseq
        %v853 = vshrl.u32 %v852, 7
        %v854 = vsub.s32 2, %v853
        %v855 = vrot.slane %v842, %v854
        %v891 = vunpack.c.l.b16 %v810
        %v892 = vunpack.c.h.b16 %v810
        %v893 = vunpack.c.l.b16 %v811
        %v894 = vunpack.c.l.b16 %v812
        %v895 = vunpack.c.h.b16 %v812
        %v896 = vunpack.c.l.b16 %v813
        %v897 = vunpack.c.l.b16 %v814
        %v898 = vunpack.c.h.b16 %v814
        %v899 = vunpack.c.l.b16 %v815
        %v900 = vunpack.c.l.b16 %v816
        %v901 = vunpack.c.h.b16 %v816
        %v902 = vunpack.c.l.b16 %v817
        %v903 = vunpack.c.l.b16 %v818
        %v904 = vunpack.c.h.b16 %v818
        %v905 = vunpack.c.l.b16 %v819
        %v906 = vunpack.c.l.b16 %v820
        %v907 = vunpack.c.h.b16 %v820
        %v908 = vunpack.c.l.b16 %v821
        %v909 = vunpack.c.l.b16 %v822
        %v910 = vunpack.c.h.b16 %v822
        %v911 = vunpack.c.l.b16 %v823
        %v912 = vunpack.c.l.b16 %v824
        %v913 = vunpack.c.h.b16 %v824
        %v914 = vunpack.c.l.b16 %v825
        %v915 = vunpack.c.l.b16 %v826
        %v916 = vunpack.c.h.b16 %v826
        %v917 = vunpack.c.l.b16 %v827
        %v918 = vunpack.c.l.b16 %v828
        %v919 = vunpack.c.h.b16 %v828
        %v920 = vunpack.c.l.b16 %v829
        %v921 = vunpack.c.l.b16 %v830
        %v922 = vunpack.c.h.b16 %v830
        %v923 = vunpack.c.l.b16 %v831
        %v924 = vunpack.c.l.b16 %v832
        %v925 = vunpack.c.h.b16 %v832
        %v926 = vunpack.c.l.b16 %v833
        %v927 = vunpack.c.l.b16 %v834
        %v928 = vunpack.c.h.b16 %v834
        %v929 = vunpack.c.l.b16 %v835
        %v930 = vunpack.c.l.b16 %v836
        %v931 = vunpack.c.h.b16 %v836
        %v932 = vunpack.c.l.b16 %v837
        %v933 = vunpack.c.l.b16 %v838
        %v934 = vunpack.c.h.b16 %v838
        %v935 = vunpack.c.l.b16 %v839
        %v936 = vunpack.c.l.b16 %v840
        %v937 = vunpack.c.h.b16 %v840
        %v938 = vunpack.c.l.b16 %v841
        %v939 = vpack.c.b16 %v894, %v891
        %v940 = vpack.c.b16 %v895, %v892
        %v941 = vpack.c.b16 %v896, %v893
        %v942 = vpack.c.b16 %v900, %v897
        %v943 = vpack.c.b16 %v901, %v898
        %v944 = vpack.c.b16 %v902, %v899
        %v945 = vpack.c.b16 %v906, %v903
        %v946 = vpack.c.b16 %v907, %v904
        %v947 = vpack.c.b16 %v908, %v905
        %v948 = vpack.c.b16 %v912, %v909
        %v949 = vpack.c.b16 %v913, %v910
        %v950 = vpack.c.b16 %v914, %v911
        %v951 = vpack.c.b16 %v918, %v915
        %v952 = vpack.c.b16 %v919, %v916
        %v953 = vpack.c.b16 %v920, %v917
        %v954 = vpack.c.b16 %v924, %v921
        %v955 = vpack.c.b16 %v925, %v922
        %v956 = vpack.c.b16 %v926, %v923
        %v957 = vpack.c.b16 %v930, %v927
        %v958 = vpack.c.b16 %v931, %v928
        %v959 = vpack.c.b16 %v932, %v929
        %v960 = vpack.c.b16 %v936, %v933
        %v961 = vpack.c.b16 %v937, %v934
        %v962 = vpack.c.b16 %v938, %v935
        %987 = vmatprep.subr.bf16.mxu0 %v940
        %988 = vmatpush1.bf16.msra.mxu0 %v939
        %989 = vmatprep.subr.bf16.mxu0 %v943
        %990 = vmatpush1.bf16.msra.mxu0 %v942
        %991 = vmatprep.subr.bf16.mxu0 %v946
        %992 = vmatpush1.bf16.msra.mxu0 %v945
        %993 = vmatprep.subr.bf16.mxu0 %v949
        %994 = vmatpush1.bf16.msra.mxu0 %v948
        %995 = vmatprep.subr.bf16.mxu0 %v952
        %996 = vmatpush1.bf16.msra.mxu0 %v951
        %997 = vmatprep.subr.bf16.mxu0 %v955
        %998 = vmatpush1.bf16.msra.mxu0 %v954
        %999 = vmatprep.subr.bf16.mxu0 %v958
        %1000 = vmatpush1.bf16.msra.mxu0 %v957
        %1001 = vmatprep.subr.bf16.mxu0 %v961
        %1002 = vmatpush1.bf16.msra.mxu0 %v960
        %1003 = vmatprep.subr.bf16.mxu0 0
        %1004 = vmatpush1.bf16.msra.mxu0 0
        %1005 = vmatprep.subr.bf16.mxu0 0
        %1006 = vmatpush1.bf16.msra.mxu0 0
        %1007 = vmatprep.subr.bf16.mxu0 0
        %1008 = vmatpush1.bf16.msra.mxu0 0
        %1009 = vmatprep.subr.bf16.mxu0 0
        %1010 = vmatpush1.bf16.msra.mxu0 0
        %1011 = vmatprep.subr.bf16.mxu0 0
        %1012 = vmatpush1.bf16.msra.mxu0 0
        %1013 = vmatprep.subr.bf16.mxu0 0
        %1014 = vmatpush1.bf16.msra.mxu0 0
        %1015 = vmatprep.subr.bf16.mxu0 0
        %1016 = vmatpush1.bf16.msra.mxu0 0
        %1017 = vmatprep.subr.bf16.mxu0 0
        %1018 = vmatpush1.bf16.msra.mxu0 0
        %1019 = vmatprep.mubr.bf16.mxu0 0
        %1020 = vmatmul.mubr.bf16.gmra.mrb[0].mxu0 %v809
        %v1021 = vpop.f32.mrb[0].mxu0
        %v1022 = vadd.f32 %v847, %v1021
        %v1023 = vpop.f32.mrb[0].mxu0
        %v1024 = vadd.f32 %v851, %v1023
        %v1025 = vpop.f32.mrb[0].mxu0
        %v1026 = vadd.f32 %v847, %v1025
        %v1027 = vpop.f32.mrb[0].mxu0
        %v1028 = vadd.f32 %v851, %v1027
        %1029 = vdwg.mxu0
        %1030 = vmatprep.subr.bf16.mxu0 0
        %1031 = vmatpush1.bf16.msra.mxu0 %v941
        %1032 = vmatprep.subr.bf16.mxu0 0
        %1033 = vmatpush1.bf16.msra.mxu0 %v944
        %1034 = vmatprep.subr.bf16.mxu0 0
        %1035 = vmatpush1.bf16.msra.mxu0 %v947
        %1036 = vmatprep.subr.bf16.mxu0 0
        %1037 = vmatpush1.bf16.msra.mxu0 %v950
        %1038 = vmatprep.subr.bf16.mxu0 0
        %1039 = vmatpush1.bf16.msra.mxu0 %v953
        %1040 = vmatprep.subr.bf16.mxu0 0
        %1041 = vmatpush1.bf16.msra.mxu0 %v956
        %1042 = vmatprep.subr.bf16.mxu0 0
        %1043 = vmatpush1.bf16.msra.mxu0 %v959
        %1044 = vmatprep.subr.bf16.mxu0 0
        %1045 = vmatpush1.bf16.msra.mxu0 %v962
        %1046 = vmatprep.subr.bf16.mxu0 0
        %1047 = vmatpush1.bf16.msra.mxu0 0
        %1048 = vmatprep.subr.bf16.mxu0 0
        %1049 = vmatpush1.bf16.msra.mxu0 0
        %1050 = vmatprep.subr.bf16.mxu0 0
        %1051 = vmatpush1.bf16.msra.mxu0 0
        %1052 = vmatprep.subr.bf16.mxu0 0
        %1053 = vmatpush1.bf16.msra.mxu0 0
        %1054 = vmatprep.subr.bf16.mxu0 0
        %1055 = vmatpush1.bf16.msra.mxu0 0
        %1056 = vmatprep.subr.bf16.mxu0 0
        %1057 = vmatpush1.bf16.msra.mxu0 0
        %1058 = vmatprep.subr.bf16.mxu0 0
        %1059 = vmatpush1.bf16.msra.mxu0 0
        %1060 = vmatprep.subr.bf16.mxu0 0
        %1061 = vmatpush1.bf16.msra.mxu0 0
        %1062 = vmatprep.mubr.bf16.mxu0 0
        %1063 = vmatmul.mubr.bf16.gmra.mrb[0].mxu0 %v809
        %v1064 = vpop.f32.mrb[0].mxu0
        %v1065 = vadd.f32 %v855, %v1064
        %v1066 = vpop.f32.mrb[0].mxu0
        %v1067 = vpop.f32.mrb[0].mxu0
        %v1068 = vadd.f32 %v855, %v1067
        %v1069 = vpop.f32.mrb[0].mxu0
        %1070 = vdwg.mxu0
        %v1071 = vld [vmem:[#allocation6] sm:$0x1]
        %v1072 = vld [vmem:[#allocation6 + $0x1] sm:$0x1]
        %v1073 = vpack.c.bf16 %v1022, %v1022
        %v1074 = vpack.c.bf16 %v1026, %v1026
        %v1075 = vpack.c.bf16 %v1024, %v1024
        %v1076 = vpack.c.bf16 %v1028, %v1028
        %v1077 = vpack.c.bf16 %v1065, %v1065
        %v1078 = vpack.c.bf16 %v1068, %v1068
        %vm1079 = vcmask 261120
        %v1081 = vsel %vm1079, %v1073, 0
        %v1084 = vsel %vm1079, %v1075, 0
        %1086 = vmatprep.subr.bf16.mxu0 0
        %1087 = vmatpush1.bf16.xpose.msra.mxu0 %v1084
        %1088 = vmatprep.subr.bf16.mxu0 0
        %1089 = vmatpush1.bf16.xpose.msra.mxu0 0
        %1090 = vmatprep.subr.bf16.mxu0 0
        %1091 = vmatpush1.bf16.xpose.msra.mxu0 0
        %1092 = vmatprep.subr.bf16.mxu0 0
        %1093 = vmatpush1.bf16.xpose.msra.mxu0 0
        %1094 = vmatprep.subr.bf16.mxu0 0
        %1095 = vmatpush1.bf16.xpose.msra.mxu0 0
        %1096 = vmatprep.subr.bf16.mxu0 0
        %1097 = vmatpush1.bf16.xpose.msra.mxu0 0
        %1098 = vmatprep.subr.bf16.mxu0 0
        %1099 = vmatpush1.bf16.xpose.msra.mxu0 0
        %1100 = vmatprep.subr.bf16.mxu0 0
        %1101 = vmatpush1.bf16.xpose.msra.mxu0 0
        %1102 = vmatprep.subr.bf16.mxu0 0
        %1103 = vmatpush1.bf16.xpose.msra.mxu0 0
        %1104 = vmatprep.subr.bf16.mxu0 0
        %1105 = vmatpush1.bf16.xpose.msra.mxu0 0
        %1106 = vmatprep.subr.bf16.mxu0 0
        %1107 = vmatpush1.bf16.xpose.msra.mxu0 0
        %1108 = vmatprep.subr.bf16.mxu0 0
        %1109 = vmatpush1.bf16.xpose.msra.mxu0 0
        %1110 = vmatprep.subr.bf16.mxu0 0
        %1111 = vmatpush1.bf16.xpose.msra.mxu0 0
        %1112 = vmatprep.subr.bf16.mxu0 0
        %1113 = vmatpush1.bf16.xpose.msra.mxu0 0
        %1114 = vmatprep.subr.bf16.mxu0 0
        %1115 = vmatpush1.bf16.xpose.msra.mxu0 0
        %1116 = vmatprep.subr.bf16.mxu0 0
        %1117 = vmatpush1.bf16.xpose.msra.mxu0 0
        %1118 = vmatprep.mubr.bf16.mxu0 0
        %1119 = vmatmul.mubr.bf16.gmra.mrb[0].mxu0 %v1081
        %v1120 = vpop.f32.mrb[0].mxu0
        %v1121 = vadd.f32 0.0, %v1120
        %v1122 = vpop.f32.mrb[0].mxu0
        %v1123 = vpop.f32.mrb[0].mxu0
        %v1124 = vpop.f32.mrb[0].mxu0
        %1125 = vdwg.mxu0
        %v1127 = vsel %vm1079, %v1074, 0
        %v1130 = vsel %vm1079, %v1076, 0
        %1132 = vmatprep.subr.bf16.mxu0 0
        %1133 = vmatpush1.bf16.xpose.msra.mxu0 %v1130
        %1134 = vmatprep.subr.bf16.mxu0 0
        %1135 = vmatpush1.bf16.xpose.msra.mxu0 0
        %1136 = vmatprep.subr.bf16.mxu0 0
        %1137 = vmatpush1.bf16.xpose.msra.mxu0 0
        %1138 = vmatprep.subr.bf16.mxu0 0
        %1139 = vmatpush1.bf16.xpose.msra.mxu0 0
        %1140 = vmatprep.subr.bf16.mxu0 0
        %1141 = vmatpush1.bf16.xpose.msra.mxu0 0
        %1142 = vmatprep.subr.bf16.mxu0 0
        %1143 = vmatpush1.bf16.xpose.msra.mxu0 0
        %1144 = vmatprep.subr.bf16.mxu0 0
        %1145 = vmatpush1.bf16.xpose.msra.mxu0 0
        %1146 = vmatprep.subr.bf16.mxu0 0
        %1147 = vmatpush1.bf16.xpose.msra.mxu0 0
        %1148 = vmatprep.subr.bf16.mxu0 0
        %1149 = vmatpush1.bf16.xpose.msra.mxu0 0
        %1150 = vmatprep.subr.bf16.mxu0 0
        %1151 = vmatpush1.bf16.xpose.msra.mxu0 0
        %1152 = vmatprep.subr.bf16.mxu0 0
        %1153 = vmatpush1.bf16.xpose.msra.mxu0 0
        %1154 = vmatprep.subr.bf16.mxu0 0
        %1155 = vmatpush1.bf16.xpose.msra.mxu0 0
        %1156 = vmatprep.subr.bf16.mxu0 0
        %1157 = vmatpush1.bf16.xpose.msra.mxu0 0
        %1158 = vmatprep.subr.bf16.mxu0 0
        %1159 = vmatpush1.bf16.xpose.msra.mxu0 0
        %1160 = vmatprep.subr.bf16.mxu0 0
        %1161 = vmatpush1.bf16.xpose.msra.mxu0 0
        %1162 = vmatprep.subr.bf16.mxu0 0
        %1163 = vmatpush1.bf16.xpose.msra.mxu0 0
        %1164 = vmatprep.mubr.bf16.mxu0 0
        %1165 = vmatmul.mubr.bf16.gmra.mrb[0].mxu0 %v1127
        %v1166 = vpop.f32.mrb[0].mxu0
        %v1167 = vadd.f32 0.0, %v1166
        %v1168 = vpop.f32.mrb[0].mxu0
        %v1169 = vpop.f32.mrb[0].mxu0
        %v1170 = vpop.f32.mrb[0].mxu0
        %1171 = vdwg.mxu0
        %v1172 = vmul.f32 %v1121, 0.17677669
        %v1173 = vmul.f32 %v1167, 0.17677669
        %v1176 = vlaneseq
        %v1177 = vshrl.u32 %v1176, 7
        %v1178 = vsub.s32 0, %v1177
        %v1179 = vrot.slane %v1071, %v1178
        %v1180 = vlaneseq
        %v1181 = vshrl.u32 %v1180, 7
        %v1182 = vsub.s32 0, %v1181
        %v1183 = vrot.slane %v1072, %v1182
        %v1186 = vadd.f32 %v1172, %v1179
        %v1187 = vadd.f32 %v1173, %v1183
        %vm1188 = vcmask 64512
        %v1189 = vsel %vm1188, %v1186, -inf
        %1190 = vmax.xlane.f32.xlu0 %v1189
        %v1191 = vpop.xlane.xlu0 %1190
        %v1192 = vsel %vm1188, %v1187, -inf
        %1193 = vmax.xlane.f32.xlu0 %v1192
        %v1194 = vpop.xlane.xlu0 %1193
        %v1195 = vsub.f32 %v1186, %v1191
        %v1196 = vsub.f32 %v1187, %v1194
        %v1197 = vmul.f32 %v1195, 1.442695
        %v1198 = vpow.pop %v1197
        %v1199 = vmul.f32 %v1196, 1.442695
        %v1200 = vpow.pop %v1199
        %v1201 = vsel %vm1188, %v1198, 0.0
        %1202 = vadd.xlane.f32.xlu0 %v1201
        %v1203 = vpop.xlane.xlu0 %1202
        %v1204 = vsel %vm1188, %v1200, 0.0
        %1205 = vadd.xlane.f32.xlu0 %v1204
        %v1206 = vpop.xlane.xlu0 %1205
        %v1207 = vrcp.pop %v1203
        %v1208 = vrcp.pop %v1206
        %v1209 = vmul.f32 %v1198, %v1207
        %v1210 = vmul.f32 %v1200, %v1208
        %v1211 = vpack.c.bf16 %v1209, %v1209
        %v1212 = vpack.c.bf16 %v1210, %v1210
        %v1214 = vsel %vm1188, %v1211, 0
        %vm1216 = vcmask 1043456
        %v1218 = vsel %vm1216, %v1077, 0
        %1220 = vmatprep.subr.bf16.mxu0 0
        %1221 = vmatpush1.bf16.msra.mxu0 %v1218
        %1222 = vmatprep.subr.bf16.mxu0 0
        %1223 = vmatpush1.bf16.msra.mxu0 0
        %1224 = vmatprep.subr.bf16.mxu0 0
        %1225 = vmatpush1.bf16.msra.mxu0 0
        %1226 = vmatprep.subr.bf16.mxu0 0
        %1227 = vmatpush1.bf16.msra.mxu0 0
        %1228 = vmatprep.subr.bf16.mxu0 0
        %1229 = vmatpush1.bf16.msra.mxu0 0
        %1230 = vmatprep.subr.bf16.mxu0 0
        %1231 = vmatpush1.bf16.msra.mxu0 0
        %1232 = vmatprep.subr.bf16.mxu0 0
        %1233 = vmatpush1.bf16.msra.mxu0 0
        %1234 = vmatprep.subr.bf16.mxu0 0
        %1235 = vmatpush1.bf16.msra.mxu0 0
        %1236 = vmatprep.subr.bf16.mxu0 0
        %1237 = vmatpush1.bf16.msra.mxu0 0
        %1238 = vmatprep.subr.bf16.mxu0 0
        %1239 = vmatpush1.bf16.msra.mxu0 0
        %1240 = vmatprep.subr.bf16.mxu0 0
        %1241 = vmatpush1.bf16.msra.mxu0 0
        %1242 = vmatprep.subr.bf16.mxu0 0
        %1243 = vmatpush1.bf16.msra.mxu0 0
        %1244 = vmatprep.subr.bf16.mxu0 0
        %1245 = vmatpush1.bf16.msra.mxu0 0
        %1246 = vmatprep.subr.bf16.mxu0 0
        %1247 = vmatpush1.bf16.msra.mxu0 0
        %1248 = vmatprep.subr.bf16.mxu0 0
        %1249 = vmatpush1.bf16.msra.mxu0 0
        %1250 = vmatprep.subr.bf16.mxu0 0
        %1251 = vmatpush1.bf16.msra.mxu0 0
        %1252 = vmatprep.mubr.bf16.mxu0 0
        %1253 = vmatmul.mubr.bf16.gmra.mrb[0].mxu0 %v1214
        %v1254 = vpop.f32.mrb[0].mxu0
        %v1255 = vadd.f32 0.0, %v1254
        %v1256 = vpop.f32.mrb[0].mxu0
        %v1257 = vpop.f32.mrb[0].mxu0
        %v1258 = vpop.f32.mrb[0].mxu0
        %1259 = vdwg.mxu0
        %v1261 = vsel %vm1188, %v1212, 0
        %v1264 = vsel %vm1216, %v1078, 0
        %1266 = vmatprep.subr.bf16.mxu0 0
        %1267 = vmatpush1.bf16.msra.mxu0 %v1264
        %1268 = vmatprep.subr.bf16.mxu0 0
        %1269 = vmatpush1.bf16.msra.mxu0 0
        %1270 = vmatprep.subr.bf16.mxu0 0
        %1271 = vmatpush1.bf16.msra.mxu0 0
        %1272 = vmatprep.subr.bf16.mxu0 0
        %1273 = vmatpush1.bf16.msra.mxu0 0
        %1274 = vmatprep.subr.bf16.mxu0 0
        %1275 = vmatpush1.bf16.msra.mxu0 0
        %1276 = vmatprep.subr.bf16.mxu0 0
        %1277 = vmatpush1.bf16.msra.mxu0 0
        %1278 = vmatprep.subr.bf16.mxu0 0
        %1279 = vmatpush1.bf16.msra.mxu0 0
        %1280 = vmatprep.subr.bf16.mxu0 0
        %1281 = vmatpush1.bf16.msra.mxu0 0
        %1282 = vmatprep.subr.bf16.mxu0 0
        %1283 = vmatpush1.bf16.msra.mxu0 0
        %1284 = vmatprep.subr.bf16.mxu0 0
        %1285 = vmatpush1.bf16.msra.mxu0 0
        %1286 = vmatprep.subr.bf16.mxu0 0
        %1287 = vmatpush1.bf16.msra.mxu0 0
        %1288 = vmatprep.subr.bf16.mxu0 0
        %1289 = vmatpush1.bf16.msra.mxu0 0
        %1290 = vmatprep.subr.bf16.mxu0 0
        %1291 = vmatpush1.bf16.msra.mxu0 0
        %1292 = vmatprep.subr.bf16.mxu0 0
        %1293 = vmatpush1.bf16.msra.mxu0 0
        %1294 = vmatprep.subr.bf16.mxu0 0
        %1295 = vmatpush1.bf16.msra.mxu0 0
        %1296 = vmatprep.subr.bf16.mxu0 0
        %1297 = vmatpush1.bf16.msra.mxu0 0
        %1298 = vmatprep.mubr.bf16.mxu0 0
        %1299 = vmatmul.mubr.bf16.gmra.mrb[0].mxu0 %v1261
        %v1300 = vpop.f32.mrb[0].mxu0
        %v1301 = vadd.f32 0.0, %v1300
        %v1302 = vpop.f32.mrb[0].mxu0
        %v1303 = vpop.f32.mrb[0].mxu0
        %v1304 = vpop.f32.mrb[0].mxu0
        %1305 = vdwg.mxu0
        %1307 = vrot.lane.b32.xlu0 %v1073, 96
        %v1308 = vpop.permute.xlu0 %1307
        %1310 = vrot.lane.b32.xlu0 %v1075, 96
        %v1311 = vpop.permute.xlu0 %1310
        %v1313 = vsel %vm1079, %v1308, 0
        %v1316 = vsel %vm1079, %v1311, 0
        %1318 = vmatprep.subr.bf16.mxu0 0
        %1319 = vmatpush1.bf16.xpose.msra.mxu0 %v1316
        %1320 = vmatprep.subr.bf16.mxu0 0
        %1321 = vmatpush1.bf16.xpose.msra.mxu0 0
        %1322 = vmatprep.subr.bf16.mxu0 0
        %1323 = vmatpush1.bf16.xpose.msra.mxu0 0
        %1324 = vmatprep.subr.bf16.mxu0 0
        %1325 = vmatpush1.bf16.xpose.msra.mxu0 0
        %1326 = vmatprep.subr.bf16.mxu0 0
        %1327 = vmatpush1.bf16.xpose.msra.mxu0 0
        %1328 = vmatprep.subr.bf16.mxu0 0
        %1329 = vmatpush1.bf16.xpose.msra.mxu0 0
        %1330 = vmatprep.subr.bf16.mxu0 0
        %1331 = vmatpush1.bf16.xpose.msra.mxu0 0
        %1332 = vmatprep.subr.bf16.mxu0 0
        %1333 = vmatpush1.bf16.xpose.msra.mxu0 0
        %1334 = vmatprep.subr.bf16.mxu0 0
        %1335 = vmatpush1.bf16.xpose.msra.mxu0 0
        %1336 = vmatprep.subr.bf16.mxu0 0
        %1337 = vmatpush1.bf16.xpose.msra.mxu0 0
        %1338 = vmatprep.subr.bf16.mxu0 0
        %1339 = vmatpush1.bf16.xpose.msra.mxu0 0
        %1340 = vmatprep.subr.bf16.mxu0 0
        %1341 = vmatpush1.bf16.xpose.msra.mxu0 0
        %1342 = vmatprep.subr.bf16.mxu0 0
        %1343 = vmatpush1.bf16.xpose.msra.mxu0 0
        %1344 = vmatprep.subr.bf16.mxu0 0
        %1345 = vmatpush1.bf16.xpose.msra.mxu0 0
        %1346 = vmatprep.subr.bf16.mxu0 0
        %1347 = vmatpush1.bf16.xpose.msra.mxu0 0
        %1348 = vmatprep.subr.bf16.mxu0 0
        %1349 = vmatpush1.bf16.xpose.msra.mxu0 0
        %1350 = vmatprep.mubr.bf16.mxu0 0
        %1351 = vmatmul.mubr.bf16.gmra.mrb[0].mxu0 %v1313
        %v1352 = vpop.f32.mrb[0].mxu0
        %v1353 = vadd.f32 0.0, %v1352
        %v1354 = vpop.f32.mrb[0].mxu0
        %v1355 = vpop.f32.mrb[0].mxu0
        %v1356 = vpop.f32.mrb[0].mxu0
        %1357 = vdwg.mxu0
        %1359 = vrot.lane.b32.xlu0 %v1074, 96
        %v1360 = vpop.permute.xlu0 %1359
        %1362 = vrot.lane.b32.xlu0 %v1076, 96
        %v1363 = vpop.permute.xlu0 %1362
        %v1365 = vsel %vm1079, %v1360, 0
        %v1368 = vsel %vm1079, %v1363, 0
        %1370 = vmatprep.subr.bf16.mxu0 0
        %1371 = vmatpush1.bf16.xpose.msra.mxu0 %v1368
        %1372 = vmatprep.subr.bf16.mxu0 0
        %1373 = vmatpush1.bf16.xpose.msra.mxu0 0
        %1374 = vmatprep.subr.bf16.mxu0 0
        %1375 = vmatpush1.bf16.xpose.msra.mxu0 0
        %1376 = vmatprep.subr.bf16.mxu0 0
        %1377 = vmatpush1.bf16.xpose.msra.mxu0 0
        %1378 = vmatprep.subr.bf16.mxu0 0
        %1379 = vmatpush1.bf16.xpose.msra.mxu0 0
        %1380 = vmatprep.subr.bf16.mxu0 0
        %1381 = vmatpush1.bf16.xpose.msra.mxu0 0
        %1382 = vmatprep.subr.bf16.mxu0 0
        %1383 = vmatpush1.bf16.xpose.msra.mxu0 0
        %1384 = vmatprep.subr.bf16.mxu0 0
        %1385 = vmatpush1.bf16.xpose.msra.mxu0 0
        %1386 = vmatprep.subr.bf16.mxu0 0
        %1387 = vmatpush1.bf16.xpose.msra.mxu0 0
        %1388 = vmatprep.subr.bf16.mxu0 0
        %1389 = vmatpush1.bf16.xpose.msra.mxu0 0
        %1390 = vmatprep.subr.bf16.mxu0 0
        %1391 = vmatpush1.bf16.xpose.msra.mxu0 0
        %1392 = vmatprep.subr.bf16.mxu0 0
        %1393 = vmatpush1.bf16.xpose.msra.mxu0 0
        %1394 = vmatprep.subr.bf16.mxu0 0
        %1395 = vmatpush1.bf16.xpose.msra.mxu0 0
        %1396 = vmatprep.subr.bf16.mxu0 0
        %1397 = vmatpush1.bf16.xpose.msra.mxu0 0
        %1398 = vmatprep.subr.bf16.mxu0 0
        %1399 = vmatpush1.bf16.xpose.msra.mxu0 0
        %1400 = vmatprep.subr.bf16.mxu0 0
        %1401 = vmatpush1.bf16.xpose.msra.mxu0 0
        %1402 = vmatprep.mubr.bf16.mxu0 0
        %1403 = vmatmul.mubr.bf16.gmra.mrb[0].mxu0 %v1365
        %v1404 = vpop.f32.mrb[0].mxu0
        %v1405 = vadd.f32 0.0, %v1404
        %v1406 = vpop.f32.mrb[0].mxu0
        %v1407 = vpop.f32.mrb[0].mxu0
        %v1408 = vpop.f32.mrb[0].mxu0
        %1409 = vdwg.mxu0
        %v1410 = vmul.f32 %v1353, 0.17677669
        %v1411 = vmul.f32 %v1405, 0.17677669
        %v1412 = vadd.f32 %v1410, %v1179
        %v1413 = vadd.f32 %v1411, %v1183
        %v1414 = vsel %vm1188, %v1412, -inf
        %1415 = vmax.xlane.f32.xlu0 %v1414
        %v1416 = vpop.xlane.xlu0 %1415
        %v1417 = vsel %vm1188, %v1413, -inf
        %1418 = vmax.xlane.f32.xlu0 %v1417
        %v1419 = vpop.xlane.xlu0 %1418
        %v1420 = vsub.f32 %v1412, %v1416
        %v1421 = vsub.f32 %v1413, %v1419
        %v1422 = vmul.f32 %v1420, 1.442695
        %v1423 = vpow.pop %v1422
        %v1424 = vmul.f32 %v1421, 1.442695
        %v1425 = vpow.pop %v1424
        %v1426 = vsel %vm1188, %v1423, 0.0
        %1427 = vadd.xlane.f32.xlu0 %v1426
        %v1428 = vpop.xlane.xlu0 %1427
        %v1429 = vsel %vm1188, %v1425, 0.0
        %1430 = vadd.xlane.f32.xlu0 %v1429
        %v1431 = vpop.xlane.xlu0 %1430
        %v1432 = vrcp.pop %v1428
        %v1433 = vrcp.pop %v1431
        %v1434 = vmul.f32 %v1423, %v1432
        %v1435 = vmul.f32 %v1425, %v1433
        %v1436 = vpack.c.bf16 %v1434, %v1434
        %v1437 = vpack.c.bf16 %v1435, %v1435
        %1439 = vrot.lane.b32.xlu0 %v1077, 96
        %v1440 = vpop.permute.xlu0 %1439
        %v1442 = vsel %vm1188, %v1436, 0
        %v1445 = vsel %vm1216, %v1440, 0
        %1447 = vmatprep.subr.bf16.mxu0 0
        %1448 = vmatpush1.bf16.msra.mxu0 %v1445
        %1449 = vmatprep.subr.bf16.mxu0 0
        %1450 = vmatpush1.bf16.msra.mxu0 0
        %1451 = vmatprep.subr.bf16.mxu0 0
        %1452 = vmatpush1.bf16.msra.mxu0 0
        %1453 = vmatprep.subr.bf16.mxu0 0
        %1454 = vmatpush1.bf16.msra.mxu0 0
        %1455 = vmatprep.subr.bf16.mxu0 0
        %1456 = vmatpush1.bf16.msra.mxu0 0
        %1457 = vmatprep.subr.bf16.mxu0 0
        %1458 = vmatpush1.bf16.msra.mxu0 0
        %1459 = vmatprep.subr.bf16.mxu0 0
        %1460 = vmatpush1.bf16.msra.mxu0 0
        %1461 = vmatprep.subr.bf16.mxu0 0
        %1462 = vmatpush1.bf16.msra.mxu0 0
        %1463 = vmatprep.subr.bf16.mxu0 0
        %1464 = vmatpush1.bf16.msra.mxu0 0
        %1465 = vmatprep.subr.bf16.mxu0 0
        %1466 = vmatpush1.bf16.msra.mxu0 0
        %1467 = vmatprep.subr.bf16.mxu0 0
        %1468 = vmatpush1.bf16.msra.mxu0 0
        %1469 = vmatprep.subr.bf16.mxu0 0
        %1470 = vmatpush1.bf16.msra.mxu0 0
        %1471 = vmatprep.subr.bf16.mxu0 0
        %1472 = vmatpush1.bf16.msra.mxu0 0
        %1473 = vmatprep.subr.bf16.mxu0 0
        %1474 = vmatpush1.bf16.msra.mxu0 0
        %1475 = vmatprep.subr.bf16.mxu0 0
        %1476 = vmatpush1.bf16.msra.mxu0 0
        %1477 = vmatprep.subr.bf16.mxu0 0
        %1478 = vmatpush1.bf16.msra.mxu0 0
        %1479 = vmatprep.mubr.bf16.mxu0 0
        %1480 = vmatmul.mubr.bf16.gmra.mrb[0].mxu0 %v1442
        %v1481 = vpop.f32.mrb[0].mxu0
        %v1482 = vadd.f32 0.0, %v1481
        %v1483 = vpop.f32.mrb[0].mxu0
        %v1484 = vpop.f32.mrb[0].mxu0
        %v1485 = vpop.f32.mrb[0].mxu0
        %1486 = vdwg.mxu0
        %1488 = vrot.lane.b32.xlu0 %v1078, 96
        %v1489 = vpop.permute.xlu0 %1488
        %v1491 = vsel %vm1188, %v1437, 0
        %v1494 = vsel %vm1216, %v1489, 0
        %1496 = vmatprep.subr.bf16.mxu0 0
        %1497 = vmatpush1.bf16.msra.mxu0 %v1494
        %1498 = vmatprep.subr.bf16.mxu0 0
        %1499 = vmatpush1.bf16.msra.mxu0 0
        %1500 = vmatprep.subr.bf16.mxu0 0
        %1501 = vmatpush1.bf16.msra.mxu0 0
        %1502 = vmatprep.subr.bf16.mxu0 0
        %1503 = vmatpush1.bf16.msra.mxu0 0
        %1504 = vmatprep.subr.bf16.mxu0 0
        %1505 = vmatpush1.bf16.msra.mxu0 0
        %1506 = vmatprep.subr.bf16.mxu0 0
        %1507 = vmatpush1.bf16.msra.mxu0 0
        %1508 = vmatprep.subr.bf16.mxu0 0
        %1509 = vmatpush1.bf16.msra.mxu0 0
        %1510 = vmatprep.subr.bf16.mxu0 0
        %1511 = vmatpush1.bf16.msra.mxu0 0
        %1512 = vmatprep.subr.bf16.mxu0 0
        %1513 = vmatpush1.bf16.msra.mxu0 0
        %1514 = vmatprep.subr.bf16.mxu0 0
        %1515 = vmatpush1.bf16.msra.mxu0 0
        %1516 = vmatprep.subr.bf16.mxu0 0
        %1517 = vmatpush1.bf16.msra.mxu0 0
        %1518 = vmatprep.subr.bf16.mxu0 0
        %1519 = vmatpush1.bf16.msra.mxu0 0
        %1520 = vmatprep.subr.bf16.mxu0 0
        %1521 = vmatpush1.bf16.msra.mxu0 0
        %1522 = vmatprep.subr.bf16.mxu0 0
        %1523 = vmatpush1.bf16.msra.mxu0 0
        %1524 = vmatprep.subr.bf16.mxu0 0
        %1525 = vmatpush1.bf16.msra.mxu0 0
        %1526 = vmatprep.subr.bf16.mxu0 0
        %1527 = vmatpush1.bf16.msra.mxu0 0
        %1528 = vmatprep.mubr.bf16.mxu0 0
        %1529 = vmatmul.mubr.bf16.gmra.mrb[0].mxu0 %v1491
        %v1530 = vpop.f32.mrb[0].mxu0
        %v1531 = vadd.f32 0.0, %v1530
        %v1532 = vpop.f32.mrb[0].mxu0
        %v1533 = vpop.f32.mrb[0].mxu0
        %v1534 = vpop.f32.mrb[0].mxu0
        %1535 = vdwg.mxu0
        %1536 = vrot.lane.b32.xlu0 %v1073, 64
        %v1537 = vpop.permute.xlu0 %1536
        %1538 = vrot.lane.b32.xlu0 %v1075, 64
        %v1539 = vpop.permute.xlu0 %1538
        %v1541 = vsel %vm1079, %v1537, 0
        %v1544 = vsel %vm1079, %v1539, 0
        %1546 = vmatprep.subr.bf16.mxu0 0
        %1547 = vmatpush1.bf16.xpose.msra.mxu0 %v1544
        %1548 = vmatprep.subr.bf16.mxu0 0
        %1549 = vmatpush1.bf16.xpose.msra.mxu0 0
        %1550 = vmatprep.subr.bf16.mxu0 0
        %1551 = vmatpush1.bf16.xpose.msra.mxu0 0
        %1552 = vmatprep.subr.bf16.mxu0 0
        %1553 = vmatpush1.bf16.xpose.msra.mxu0 0
        %1554 = vmatprep.subr.bf16.mxu0 0
        %1555 = vmatpush1.bf16.xpose.msra.mxu0 0
        %1556 = vmatprep.subr.bf16.mxu0 0
        %1557 = vmatpush1.bf16.xpose.msra.mxu0 0
        %1558 = vmatprep.subr.bf16.mxu0 0
        %1559 = vmatpush1.bf16.xpose.msra.mxu0 0
        %1560 = vmatprep.subr.bf16.mxu0 0
        %1561 = vmatpush1.bf16.xpose.msra.mxu0 0
        %1562 = vmatprep.subr.bf16.mxu0 0
        %1563 = vmatpush1.bf16.xpose.msra.mxu0 0
        %1564 = vmatprep.subr.bf16.mxu0 0
        %1565 = vmatpush1.bf16.xpose.msra.mxu0 0
        %1566 = vmatprep.subr.bf16.mxu0 0
        %1567 = vmatpush1.bf16.xpose.msra.mxu0 0
        %1568 = vmatprep.subr.bf16.mxu0 0
        %1569 = vmatpush1.bf16.xpose.msra.mxu0 0
        %1570 = vmatprep.subr.bf16.mxu0 0
        %1571 = vmatpush1.bf16.xpose.msra.mxu0 0
        %1572 = vmatprep.subr.bf16.mxu0 0
        %1573 = vmatpush1.bf16.xpose.msra.mxu0 0
        %1574 = vmatprep.subr.bf16.mxu0 0
        %1575 = vmatpush1.bf16.xpose.msra.mxu0 0
        %1576 = vmatprep.subr.bf16.mxu0 0
        %1577 = vmatpush1.bf16.xpose.msra.mxu0 0
        %1578 = vmatprep.mubr.bf16.mxu0 0
        %1579 = vmatmul.mubr.bf16.gmra.mrb[0].mxu0 %v1541
        %v1580 = vpop.f32.mrb[0].mxu0
        %v1581 = vadd.f32 0.0, %v1580
        %v1582 = vpop.f32.mrb[0].mxu0
        %v1583 = vpop.f32.mrb[0].mxu0
        %v1584 = vpop.f32.mrb[0].mxu0
        %1585 = vdwg.mxu0
        %1586 = vrot.lane.b32.xlu0 %v1074, 64
        %v1587 = vpop.permute.xlu0 %1586
        %1588 = vrot.lane.b32.xlu0 %v1076, 64
        %v1589 = vpop.permute.xlu0 %1588
        %v1591 = vsel %vm1079, %v1587, 0
        %v1594 = vsel %vm1079, %v1589, 0
        %1596 = vmatprep.subr.bf16.mxu0 0
        %1597 = vmatpush1.bf16.xpose.msra.mxu0 %v1594
        %1598 = vmatprep.subr.bf16.mxu0 0
        %1599 = vmatpush1.bf16.xpose.msra.mxu0 0
        %1600 = vmatprep.subr.bf16.mxu0 0
        %1601 = vmatpush1.bf16.xpose.msra.mxu0 0
        %1602 = vmatprep.subr.bf16.mxu0 0
        %1603 = vmatpush1.bf16.xpose.msra.mxu0 0
        %1604 = vmatprep.subr.bf16.mxu0 0
        %1605 = vmatpush1.bf16.xpose.msra.mxu0 0
        %1606 = vmatprep.subr.bf16.mxu0 0
        %1607 = vmatpush1.bf16.xpose.msra.mxu0 0
        %1608 = vmatprep.subr.bf16.mxu0 0
        %1609 = vmatpush1.bf16.xpose.msra.mxu0 0
        %1610 = vmatprep.subr.bf16.mxu0 0
        %1611 = vmatpush1.bf16.xpose.msra.mxu0 0
        %1612 = vmatprep.subr.bf16.mxu0 0
        %1613 = vmatpush1.bf16.xpose.msra.mxu0 0
        %1614 = vmatprep.subr.bf16.mxu0 0
        %1615 = vmatpush1.bf16.xpose.msra.mxu0 0
        %1616 = vmatprep.subr.bf16.mxu0 0
        %1617 = vmatpush1.bf16.xpose.msra.mxu0 0
        %1618 = vmatprep.subr.bf16.mxu0 0
        %1619 = vmatpush1.bf16.xpose.msra.mxu0 0
        %1620 = vmatprep.subr.bf16.mxu0 0
        %1621 = vmatpush1.bf16.xpose.msra.mxu0 0
        %1622 = vmatprep.subr.bf16.mxu0 0
        %1623 = vmatpush1.bf16.xpose.msra.mxu0 0
        %1624 = vmatprep.subr.bf16.mxu0 0
        %1625 = vmatpush1.bf16.xpose.msra.mxu0 0
        %1626 = vmatprep.subr.bf16.mxu0 0
        %1627 = vmatpush1.bf16.xpose.msra.mxu0 0
        %1628 = vmatprep.mubr.bf16.mxu0 0
        %1629 = vmatmul.mubr.bf16.gmra.mrb[0].mxu0 %v1591
        %v1630 = vpop.f32.mrb[0].mxu0
        %v1631 = vadd.f32 0.0, %v1630
        %v1632 = vpop.f32.mrb[0].mxu0
        %v1633 = vpop.f32.mrb[0].mxu0
        %v1634 = vpop.f32.mrb[0].mxu0
        %1635 = vdwg.mxu0
        %v1636 = vmul.f32 %v1581, 0.17677669
        %v1637 = vmul.f32 %v1631, 0.17677669
        %v1638 = vadd.f32 %v1636, %v1179
        %v1639 = vadd.f32 %v1637, %v1183
        %v1640 = vsel %vm1188, %v1638, -inf
        %1641 = vmax.xlane.f32.xlu0 %v1640
        %v1642 = vpop.xlane.xlu0 %1641
        %v1643 = vsel %vm1188, %v1639, -inf
        %1644 = vmax.xlane.f32.xlu0 %v1643
        %v1645 = vpop.xlane.xlu0 %1644
        %v1646 = vsub.f32 %v1638, %v1642
        %v1647 = vsub.f32 %v1639, %v1645
        %v1648 = vmul.f32 %v1646, 1.442695
        %v1649 = vpow.pop %v1648
        %v1650 = vmul.f32 %v1647, 1.442695
        %v1651 = vpow.pop %v1650
        %v1652 = vsel %vm1188, %v1649, 0.0
        %1653 = vadd.xlane.f32.xlu0 %v1652
        %v1654 = vpop.xlane.xlu0 %1653
        %v1655 = vsel %vm1188, %v1651, 0.0
        %1656 = vadd.xlane.f32.xlu0 %v1655
        %v1657 = vpop.xlane.xlu0 %1656
        %v1658 = vrcp.pop %v1654
        %v1659 = vrcp.pop %v1657
        %v1660 = vmul.f32 %v1649, %v1658
        %v1661 = vmul.f32 %v1651, %v1659
        %v1662 = vpack.c.bf16 %v1660, %v1660
        %v1663 = vpack.c.bf16 %v1661, %v1661
        %1664 = vrot.lane.b32.xlu0 %v1077, 64
        %v1665 = vpop.permute.xlu0 %1664
        %v1667 = vsel %vm1188, %v1662, 0
        %v1670 = vsel %vm1216, %v1665, 0
        %1672 = vmatprep.subr.bf16.mxu0 0
        %1673 = vmatpush1.bf16.msra.mxu0 %v1670
        %1674 = vmatprep.subr.bf16.mxu0 0
        %1675 = vmatpush1.bf16.msra.mxu0 0
        %1676 = vmatprep.subr.bf16.mxu0 0
        %1677 = vmatpush1.bf16.msra.mxu0 0
        %1678 = vmatprep.subr.bf16.mxu0 0
        %1679 = vmatpush1.bf16.msra.mxu0 0
        %1680 = vmatprep.subr.bf16.mxu0 0
        %1681 = vmatpush1.bf16.msra.mxu0 0
        %1682 = vmatprep.subr.bf16.mxu0 0
        %1683 = vmatpush1.bf16.msra.mxu0 0
        %1684 = vmatprep.subr.bf16.mxu0 0
        %1685 = vmatpush1.bf16.msra.mxu0 0
        %1686 = vmatprep.subr.bf16.mxu0 0
        %1687 = vmatpush1.bf16.msra.mxu0 0
        %1688 = vmatprep.subr.bf16.mxu0 0
        %1689 = vmatpush1.bf16.msra.mxu0 0
        %1690 = vmatprep.subr.bf16.mxu0 0
        %1691 = vmatpush1.bf16.msra.mxu0 0
        %1692 = vmatprep.subr.bf16.mxu0 0
        %1693 = vmatpush1.bf16.msra.mxu0 0
        %1694 = vmatprep.subr.bf16.mxu0 0
        %1695 = vmatpush1.bf16.msra.mxu0 0
        %1696 = vmatprep.subr.bf16.mxu0 0
        %1697 = vmatpush1.bf16.msra.mxu0 0
        %1698 = vmatprep.subr.bf16.mxu0 0
        %1699 = vmatpush1.bf16.msra.mxu0 0
        %1700 = vmatprep.subr.bf16.mxu0 0
        %1701 = vmatpush1.bf16.msra.mxu0 0
        %1702 = vmatprep.subr.bf16.mxu0 0
        %1703 = vmatpush1.bf16.msra.mxu0 0
        %1704 = vmatprep.mubr.bf16.mxu0 0
        %1705 = vmatmul.mubr.bf16.gmra.mrb[0].mxu0 %v1667
        %v1706 = vpop.f32.mrb[0].mxu0
        %v1707 = vadd.f32 0.0, %v1706
        %v1708 = vpop.f32.mrb[0].mxu0
        %v1709 = vpop.f32.mrb[0].mxu0
        %v1710 = vpop.f32.mrb[0].mxu0
        %1711 = vdwg.mxu0
        %1712 = vrot.lane.b32.xlu0 %v1078, 64
        %v1713 = vpop.permute.xlu0 %1712
        %v1715 = vsel %vm1188, %v1663, 0
        %v1718 = vsel %vm1216, %v1713, 0
        %1720 = vmatprep.subr.bf16.mxu0 0
        %1721 = vmatpush1.bf16.msra.mxu0 %v1718
        %1722 = vmatprep.subr.bf16.mxu0 0
        %1723 = vmatpush1.bf16.msra.mxu0 0
        %1724 = vmatprep.subr.bf16.mxu0 0
        %1725 = vmatpush1.bf16.msra.mxu0 0
        %1726 = vmatprep.subr.bf16.mxu0 0
        %1727 = vmatpush1.bf16.msra.mxu0 0
        %1728 = vmatprep.subr.bf16.mxu0 0
        %1729 = vmatpush1.bf16.msra.mxu0 0
        %1730 = vmatprep.subr.bf16.mxu0 0
        %1731 = vmatpush1.bf16.msra.mxu0 0
        %1732 = vmatprep.subr.bf16.mxu0 0
        %1733 = vmatpush1.bf16.msra.mxu0 0
        %1734 = vmatprep.subr.bf16.mxu0 0
        %1735 = vmatpush1.bf16.msra.mxu0 0
        %1736 = vmatprep.subr.bf16.mxu0 0
        %1737 = vmatpush1.bf16.msra.mxu0 0
        %1738 = vmatprep.subr.bf16.mxu0 0
        %1739 = vmatpush1.bf16.msra.mxu0 0
        %1740 = vmatprep.subr.bf16.mxu0 0
        %1741 = vmatpush1.bf16.msra.mxu0 0
        %1742 = vmatprep.subr.bf16.mxu0 0
        %1743 = vmatpush1.bf16.msra.mxu0 0
        %1744 = vmatprep.subr.bf16.mxu0 0
        %1745 = vmatpush1.bf16.msra.mxu0 0
        %1746 = vmatprep.subr.bf16.mxu0 0
        %1747 = vmatpush1.bf16.msra.mxu0 0
        %1748 = vmatprep.subr.bf16.mxu0 0
        %1749 = vmatpush1.bf16.msra.mxu0 0
        %1750 = vmatprep.subr.bf16.mxu0 0
        %1751 = vmatpush1.bf16.msra.mxu0 0
        %1752 = vmatprep.mubr.bf16.mxu0 0
        %1753 = vmatmul.mubr.bf16.gmra.mrb[0].mxu0 %v1715
        %v1754 = vpop.f32.mrb[0].mxu0
        %v1755 = vadd.f32 0.0, %v1754
        %v1756 = vpop.f32.mrb[0].mxu0
        %v1757 = vpop.f32.mrb[0].mxu0
        %v1758 = vpop.f32.mrb[0].mxu0
        %1759 = vdwg.mxu0
        %1760 = vrot.lane.b32.xlu0 %v1073, 32
        %v1761 = vpop.permute.xlu0 %1760
        %1762 = vrot.lane.b32.xlu0 %v1075, 32
        %v1763 = vpop.permute.xlu0 %1762
        %v1765 = vsel %vm1079, %v1761, 0
        %v1768 = vsel %vm1079, %v1763, 0
        %1770 = vmatprep.subr.bf16.mxu0 0
        %1771 = vmatpush1.bf16.xpose.msra.mxu0 %v1768
        %1772 = vmatprep.subr.bf16.mxu0 0
        %1773 = vmatpush1.bf16.xpose.msra.mxu0 0
        %1774 = vmatprep.subr.bf16.mxu0 0
        %1775 = vmatpush1.bf16.xpose.msra.mxu0 0
        %1776 = vmatprep.subr.bf16.mxu0 0
        %1777 = vmatpush1.bf16.xpose.msra.mxu0 0
        %1778 = vmatprep.subr.bf16.mxu0 0
        %1779 = vmatpush1.bf16.xpose.msra.mxu0 0
        %1780 = vmatprep.subr.bf16.mxu0 0
        %1781 = vmatpush1.bf16.xpose.msra.mxu0 0
        %1782 = vmatprep.subr.bf16.mxu0 0
        %1783 = vmatpush1.bf16.xpose.msra.mxu0 0
        %1784 = vmatprep.subr.bf16.mxu0 0
        %1785 = vmatpush1.bf16.xpose.msra.mxu0 0
        %1786 = vmatprep.subr.bf16.mxu0 0
        %1787 = vmatpush1.bf16.xpose.msra.mxu0 0
        %1788 = vmatprep.subr.bf16.mxu0 0
        %1789 = vmatpush1.bf16.xpose.msra.mxu0 0
        %1790 = vmatprep.subr.bf16.mxu0 0
        %1791 = vmatpush1.bf16.xpose.msra.mxu0 0
        %1792 = vmatprep.subr.bf16.mxu0 0
        %1793 = vmatpush1.bf16.xpose.msra.mxu0 0
        %1794 = vmatprep.subr.bf16.mxu0 0
        %1795 = vmatpush1.bf16.xpose.msra.mxu0 0
        %1796 = vmatprep.subr.bf16.mxu0 0
        %1797 = vmatpush1.bf16.xpose.msra.mxu0 0
        %1798 = vmatprep.subr.bf16.mxu0 0
        %1799 = vmatpush1.bf16.xpose.msra.mxu0 0
        %1800 = vmatprep.subr.bf16.mxu0 0
        %1801 = vmatpush1.bf16.xpose.msra.mxu0 0
        %1802 = vmatprep.mubr.bf16.mxu0 0
        %1803 = vmatmul.mubr.bf16.gmra.mrb[0].mxu0 %v1765
        %v1804 = vpop.f32.mrb[0].mxu0
        %v1805 = vadd.f32 0.0, %v1804
        %v1806 = vpop.f32.mrb[0].mxu0
        %v1807 = vpop.f32.mrb[0].mxu0
        %v1808 = vpop.f32.mrb[0].mxu0
        %1809 = vdwg.mxu0
        %1810 = vrot.lane.b32.xlu0 %v1074, 32
        %v1811 = vpop.permute.xlu0 %1810
        %1812 = vrot.lane.b32.xlu0 %v1076, 32
        %v1813 = vpop.permute.xlu0 %1812
        %v1815 = vsel %vm1079, %v1811, 0
        %v1818 = vsel %vm1079, %v1813, 0
        %1820 = vmatprep.subr.bf16.mxu0 0
        %1821 = vmatpush1.bf16.xpose.msra.mxu0 %v1818
        %1822 = vmatprep.subr.bf16.mxu0 0
        %1823 = vmatpush1.bf16.xpose.msra.mxu0 0
        %1824 = vmatprep.subr.bf16.mxu0 0
        %1825 = vmatpush1.bf16.xpose.msra.mxu0 0
        %1826 = vmatprep.subr.bf16.mxu0 0
        %1827 = vmatpush1.bf16.xpose.msra.mxu0 0
        %1828 = vmatprep.subr.bf16.mxu0 0
        %1829 = vmatpush1.bf16.xpose.msra.mxu0 0
        %1830 = vmatprep.subr.bf16.mxu0 0
        %1831 = vmatpush1.bf16.xpose.msra.mxu0 0
        %1832 = vmatprep.subr.bf16.mxu0 0
        %1833 = vmatpush1.bf16.xpose.msra.mxu0 0
        %1834 = vmatprep.subr.bf16.mxu0 0
        %1835 = vmatpush1.bf16.xpose.msra.mxu0 0
        %1836 = vmatprep.subr.bf16.mxu0 0
        %1837 = vmatpush1.bf16.xpose.msra.mxu0 0
        %1838 = vmatprep.subr.bf16.mxu0 0
        %1839 = vmatpush1.bf16.xpose.msra.mxu0 0
        %1840 = vmatprep.subr.bf16.mxu0 0
        %1841 = vmatpush1.bf16.xpose.msra.mxu0 0
        %1842 = vmatprep.subr.bf16.mxu0 0
        %1843 = vmatpush1.bf16.xpose.msra.mxu0 0
        %1844 = vmatprep.subr.bf16.mxu0 0
        %1845 = vmatpush1.bf16.xpose.msra.mxu0 0
        %1846 = vmatprep.subr.bf16.mxu0 0
        %1847 = vmatpush1.bf16.xpose.msra.mxu0 0
        %1848 = vmatprep.subr.bf16.mxu0 0
        %1849 = vmatpush1.bf16.xpose.msra.mxu0 0
        %1850 = vmatprep.subr.bf16.mxu0 0
        %1851 = vmatpush1.bf16.xpose.msra.mxu0 0
        %1852 = vmatprep.mubr.bf16.mxu0 0
        %1853 = vmatmul.mubr.bf16.gmra.mrb[0].mxu0 %v1815
        %v1854 = vpop.f32.mrb[0].mxu0
        %v1855 = vadd.f32 0.0, %v1854
        %v1856 = vpop.f32.mrb[0].mxu0
        %v1857 = vpop.f32.mrb[0].mxu0
        %v1858 = vpop.f32.mrb[0].mxu0
        %1859 = vdwg.mxu0
        %v1860 = vmul.f32 %v1805, 0.17677669
        %v1861 = vmul.f32 %v1855, 0.17677669
        %v1862 = vadd.f32 %v1860, %v1179
        %v1863 = vadd.f32 %v1861, %v1183
        %v1864 = vsel %vm1188, %v1862, -inf
        %1865 = vmax.xlane.f32.xlu0 %v1864
        %v1866 = vpop.xlane.xlu0 %1865
        %v1867 = vsel %vm1188, %v1863, -inf
        %1868 = vmax.xlane.f32.xlu0 %v1867
        %v1869 = vpop.xlane.xlu0 %1868
        %v1870 = vsub.f32 %v1862, %v1866
        %v1871 = vsub.f32 %v1863, %v1869
        %v1872 = vmul.f32 %v1870, 1.442695
        %v1873 = vpow.pop %v1872
        %v1874 = vmul.f32 %v1871, 1.442695
        %v1875 = vpow.pop %v1874
        %v1876 = vsel %vm1188, %v1873, 0.0
        %1877 = vadd.xlane.f32.xlu0 %v1876
        %v1878 = vpop.xlane.xlu0 %1877
        %v1879 = vsel %vm1188, %v1875, 0.0
        %1880 = vadd.xlane.f32.xlu0 %v1879
        %v1881 = vpop.xlane.xlu0 %1880
        %v1882 = vrcp.pop %v1878
        %v1883 = vrcp.pop %v1881
        %v1884 = vmul.f32 %v1873, %v1882
        %v1885 = vmul.f32 %v1875, %v1883
        %v1886 = vpack.c.bf16 %v1884, %v1884
        %v1887 = vpack.c.bf16 %v1885, %v1885
        %1888 = vrot.lane.b32.xlu0 %v1077, 32
        %v1889 = vpop.permute.xlu0 %1888
        %v1891 = vsel %vm1188, %v1886, 0
        %v1894 = vsel %vm1216, %v1889, 0
        %1896 = vmatprep.subr.bf16.mxu0 0
        %1897 = vmatpush1.bf16.msra.mxu0 %v1894
        %1898 = vmatprep.subr.bf16.mxu0 0
        %1899 = vmatpush1.bf16.msra.mxu0 0
        %1900 = vmatprep.subr.bf16.mxu0 0
        %1901 = vmatpush1.bf16.msra.mxu0 0
        %1902 = vmatprep.subr.bf16.mxu0 0
        %1903 = vmatpush1.bf16.msra.mxu0 0
        %1904 = vmatprep.subr.bf16.mxu0 0
        %1905 = vmatpush1.bf16.msra.mxu0 0
        %1906 = vmatprep.subr.bf16.mxu0 0
        %1907 = vmatpush1.bf16.msra.mxu0 0
        %1908 = vmatprep.subr.bf16.mxu0 0
        %1909 = vmatpush1.bf16.msra.mxu0 0
        %1910 = vmatprep.subr.bf16.mxu0 0
        %1911 = vmatpush1.bf16.msra.mxu0 0
        %1912 = vmatprep.subr.bf16.mxu0 0
        %1913 = vmatpush1.bf16.msra.mxu0 0
        %1914 = vmatprep.subr.bf16.mxu0 0
        %1915 = vmatpush1.bf16.msra.mxu0 0
        %1916 = vmatprep.subr.bf16.mxu0 0
        %1917 = vmatpush1.bf16.msra.mxu0 0
        %1918 = vmatprep.subr.bf16.mxu0 0
        %1919 = vmatpush1.bf16.msra.mxu0 0
        %1920 = vmatprep.subr.bf16.mxu0 0
        %1921 = vmatpush1.bf16.msra.mxu0 0
        %1922 = vmatprep.subr.bf16.mxu0 0
        %1923 = vmatpush1.bf16.msra.mxu0 0
        %1924 = vmatprep.subr.bf16.mxu0 0
        %1925 = vmatpush1.bf16.msra.mxu0 0
        %1926 = vmatprep.subr.bf16.mxu0 0
        %1927 = vmatpush1.bf16.msra.mxu0 0
        %1928 = vmatprep.mubr.bf16.mxu0 0
        %1929 = vmatmul.mubr.bf16.gmra.mrb[0].mxu0 %v1891
        %v1930 = vpop.f32.mrb[0].mxu0
        %v1931 = vadd.f32 0.0, %v1930
        %v1932 = vpop.f32.mrb[0].mxu0
        %v1933 = vpop.f32.mrb[0].mxu0
        %v1934 = vpop.f32.mrb[0].mxu0
        %1935 = vdwg.mxu0
        %1936 = vrot.lane.b32.xlu0 %v1078, 32
        %v1937 = vpop.permute.xlu0 %1936
        %v1939 = vsel %vm1188, %v1887, 0
        %v1942 = vsel %vm1216, %v1937, 0
        %1944 = vmatprep.subr.bf16.mxu0 0
        %1945 = vmatpush1.bf16.msra.mxu0 %v1942
        %1946 = vmatprep.subr.bf16.mxu0 0
        %1947 = vmatpush1.bf16.msra.mxu0 0
        %1948 = vmatprep.subr.bf16.mxu0 0
        %1949 = vmatpush1.bf16.msra.mxu0 0
        %1950 = vmatprep.subr.bf16.mxu0 0
        %1951 = vmatpush1.bf16.msra.mxu0 0
        %1952 = vmatprep.subr.bf16.mxu0 0
        %1953 = vmatpush1.bf16.msra.mxu0 0
        %1954 = vmatprep.subr.bf16.mxu0 0
        %1955 = vmatpush1.bf16.msra.mxu0 0
        %1956 = vmatprep.subr.bf16.mxu0 0
        %1957 = vmatpush1.bf16.msra.mxu0 0
        %1958 = vmatprep.subr.bf16.mxu0 0
        %1959 = vmatpush1.bf16.msra.mxu0 0
        %1960 = vmatprep.subr.bf16.mxu0 0
        %1961 = vmatpush1.bf16.msra.mxu0 0
        %1962 = vmatprep.subr.bf16.mxu0 0
        %1963 = vmatpush1.bf16.msra.mxu0 0
        %1964 = vmatprep.subr.bf16.mxu0 0
        %1965 = vmatpush1.bf16.msra.mxu0 0
        %1966 = vmatprep.subr.bf16.mxu0 0
        %1967 = vmatpush1.bf16.msra.mxu0 0
        %1968 = vmatprep.subr.bf16.mxu0 0
        %1969 = vmatpush1.bf16.msra.mxu0 0
        %1970 = vmatprep.subr.bf16.mxu0 0
        %1971 = vmatpush1.bf16.msra.mxu0 0
        %1972 = vmatprep.subr.bf16.mxu0 0
        %1973 = vmatpush1.bf16.msra.mxu0 0
        %1974 = vmatprep.subr.bf16.mxu0 0
        %1975 = vmatpush1.bf16.msra.mxu0 0
        %1976 = vmatprep.mubr.bf16.mxu0 0
        %1977 = vmatmul.mubr.bf16.gmra.mrb[0].mxu0 %v1939
        %v1978 = vpop.f32.mrb[0].mxu0
        %v1979 = vadd.f32 0.0, %v1978
        %v1980 = vpop.f32.mrb[0].mxu0
        %v1981 = vpop.f32.mrb[0].mxu0
        %v1982 = vpop.f32.mrb[0].mxu0
        %1983 = vdwg.mxu0
        %1986 = vrot.lane.b32.xlu0 %v1482, 32
        %v1987 = vpop.permute.xlu0 %1986
        %1988 = vrot.lane.b32.xlu0 %v1531, 32
        %v1989 = vpop.permute.xlu0 %1988
        %1994 = vrot.lane.b32.xlu0 %v1707, 64
        %v1995 = vpop.permute.xlu0 %1994
        %1996 = vrot.lane.b32.xlu0 %v1755, 64
        %v1997 = vpop.permute.xlu0 %1996
        %2002 = vrot.lane.b32.xlu0 %v1931, 96
        %v2003 = vpop.permute.xlu0 %2002
        %2004 = vrot.lane.b32.xlu0 %v1979, 96
        %v2005 = vpop.permute.xlu0 %2004
        %v2008 = vsel %vm1079, %v1255, %v1987
        %v2009 = vsel %vm1079, %v1301, %v1989
        %vm2010 = vcmask 523264
        %v2011 = vsel %vm2010, %v2008, %v1995
        %v2012 = vsel %vm2010, %v2009, %v1997
        %vm2013 = vcmask 785408
        %v2014 = vsel %vm2013, %v2011, %v2003
        %v2015 = vsel %vm2013, %v2012, %v2005
        %v2016 = vpack.c.bf16 %v2015, %v2014
        %v2017 = vld [vmem:[%s665] sm:$0xf]
        %v2018 = vld [vmem:[%s665 + $0x4] sm:$0xf]
        %v2019 = vld [vmem:[%s665 + $0x8] sm:$0xf]
        %v2020 = vld [vmem:[%s665 + $0xc] sm:$0xf]
        %v2021 = vld [vmem:[%s665 + $0x10] sm:$0xf]
        %v2022 = vld [vmem:[%s665 + $0x14] sm:$0xf]
        %v2023 = vld [vmem:[%s665 + $0x18] sm:$0xf]
        %v2024 = vld [vmem:[%s665 + $0x1c] sm:$0xf]
        %v2025 = vld [vmem:[%s665 + $0x20] sm:$0xf]
        %v2026 = vld [vmem:[%s665 + $0x24] sm:$0xf]
        %v2027 = vld [vmem:[%s665 + $0x28] sm:$0xf]
        %v2028 = vld [vmem:[%s665 + $0x2c] sm:$0xf]
        %v2029 = vld [vmem:[%s665 + $0x30] sm:$0xf]
        %v2030 = vld [vmem:[%s665 + $0x34] sm:$0xf]
        %v2031 = vld [vmem:[%s665 + $0x38] sm:$0xf]
        %v2032 = vld [vmem:[%s665 + $0x3c] sm:$0xf]
        %v2033 = vld [vmem:[%s778] sm:$0x1]
        %v2035 = vlaneseq
        %v2036 = vshrl.u32 %v2035, 7
        %v2037 = vsub.s32 0, %v2036
        %v2038 = vrot.slane %v2033, %v2037
        %v2056 = vunpack.c.l.b16 %v2017
        %v2057 = vunpack.c.l.b16 %v2018
        %v2058 = vunpack.c.l.b16 %v2019
        %v2059 = vunpack.c.l.b16 %v2020
        %v2060 = vunpack.c.l.b16 %v2021
        %v2061 = vunpack.c.l.b16 %v2022
        %v2062 = vunpack.c.l.b16 %v2023
        %v2063 = vunpack.c.l.b16 %v2024
        %v2064 = vunpack.c.l.b16 %v2025
        %v2065 = vunpack.c.l.b16 %v2026
        %v2066 = vunpack.c.l.b16 %v2027
        %v2067 = vunpack.c.l.b16 %v2028
        %v2068 = vunpack.c.l.b16 %v2029
        %v2069 = vunpack.c.l.b16 %v2030
        %v2070 = vunpack.c.l.b16 %v2031
        %v2071 = vunpack.c.l.b16 %v2032
        %v2072 = vpack.c.b16 %v2057, %v2056
        %v2073 = vpack.c.b16 %v2059, %v2058
        %v2074 = vpack.c.b16 %v2061, %v2060
        %v2075 = vpack.c.b16 %v2063, %v2062
        %v2076 = vpack.c.b16 %v2065, %v2064
        %v2077 = vpack.c.b16 %v2067, %v2066
        %v2078 = vpack.c.b16 %v2069, %v2068
        %v2079 = vpack.c.b16 %v2071, %v2070
        %2088 = vmatprep.subr.bf16.mxu0 0
        %2089 = vmatpush1.bf16.msra.mxu0 %v2072
        %2090 = vmatprep.subr.bf16.mxu0 0
        %2091 = vmatpush1.bf16.msra.mxu0 %v2073
        %2092 = vmatprep.subr.bf16.mxu0 0
        %2093 = vmatpush1.bf16.msra.mxu0 %v2074
        %2094 = vmatprep.subr.bf16.mxu0 0
        %2095 = vmatpush1.bf16.msra.mxu0 %v2075
        %2096 = vmatprep.subr.bf16.mxu0 0
        %2097 = vmatpush1.bf16.msra.mxu0 %v2076
        %2098 = vmatprep.subr.bf16.mxu0 0
        %2099 = vmatpush1.bf16.msra.mxu0 %v2077
        %2100 = vmatprep.subr.bf16.mxu0 0
        %2101 = vmatpush1.bf16.msra.mxu0 %v2078
        %2102 = vmatprep.subr.bf16.mxu0 0
        %2103 = vmatpush1.bf16.msra.mxu0 %v2079
        %2104 = vmatprep.subr.bf16.mxu0 0
        %2105 = vmatpush1.bf16.msra.mxu0 0
        %2106 = vmatprep.subr.bf16.mxu0 0
        %2107 = vmatpush1.bf16.msra.mxu0 0
        %2108 = vmatprep.subr.bf16.mxu0 0
        %2109 = vmatpush1.bf16.msra.mxu0 0
        %2110 = vmatprep.subr.bf16.mxu0 0
        %2111 = vmatpush1.bf16.msra.mxu0 0
        %2112 = vmatprep.subr.bf16.mxu0 0
        %2113 = vmatpush1.bf16.msra.mxu0 0
        %2114 = vmatprep.subr.bf16.mxu0 0
        %2115 = vmatpush1.bf16.msra.mxu0 0
        %2116 = vmatprep.subr.bf16.mxu0 0
        %2117 = vmatpush1.bf16.msra.mxu0 0
        %2118 = vmatprep.subr.bf16.mxu0 0
        %2119 = vmatpush1.bf16.msra.mxu0 0
        %2120 = vmatprep.mubr.bf16.mxu0 0
        %2121 = vmatmul.mubr.bf16.gmra.mrb[0].mxu0 %v2016
        %v2122 = vpop.f32.mrb[0].mxu0
        %v2123 = vadd.f32 %v2038, %v2122
        %v2124 = vpop.f32.mrb[0].mxu0
        %v2125 = vpop.f32.mrb[0].mxu0
        %v2126 = vadd.f32 %v2038, %v2125
        %v2127 = vpop.f32.mrb[0].mxu0
        %2128 = vdwg.mxu0
        %v2129 = vadd.f32 %v807, %v2123
        %v2130 = vadd.f32 %v808, %v2126
        %v2131 = vld [vmem:[%s788] sm:$0x1]
        %v2132 = vld [vmem:[%s791] sm:$0x1]
        %2133 = vadd.xlane.f32.xlu0 %v2129
        %v2134 = vpop.xlane.xlu0 %2133
        %2135 = vadd.xlane.f32.xlu0 %v2130
        %v2136 = vpop.xlane.xlu0 %2135
        %v2137 = vrcp.pop 128.0
        %v2138 = vmul.f32 %v2134, %v2137
        %v2139 = vmul.f32 %v2136, %v2137
        %v2140 = vsub.f32 %v2129, %v2138
        %v2141 = vsub.f32 %v2130, %v2139
        %v2142 = vmul.f32 %v2140, %v2140
        %v2143 = vmul.f32 %v2141, %v2141
        %2144 = vadd.xlane.f32.xlu0 %v2142
        %v2145 = vpop.xlane.xlu0 %2144
        %2146 = vadd.xlane.f32.xlu0 %v2143
        %v2147 = vpop.xlane.xlu0 %2146
        %v2148 = vmul.f32 %v2145, %v2137
        %v2149 = vmul.f32 %v2147, %v2137
        %v2150 = vadd.f32 %v2148, 1e-05
        %v2151 = vadd.f32 %v2149, 1e-05
        %v2152 = vrsqrt.pop %v2150
        %v2153 = vrsqrt.pop %v2151
        %v2154 = vmul.f32 %v2140, %v2152
        %v2155 = vmul.f32 %v2141, %v2153
        %v2157 = vlaneseq
        %v2158 = vshrl.u32 %v2157, 7
        %v2159 = vsub.s32 0, %v2158
        %v2160 = vrot.slane %v2131, %v2159
        %v2162 = vmul.f32 %v2154, %v2160
        %v2163 = vmul.f32 %v2155, %v2160
        %v2165 = vlaneseq
        %v2166 = vshrl.u32 %v2165, 7
        %v2167 = vsub.s32 0, %v2166
        %v2168 = vrot.slane %v2132, %v2167
        %v2170 = vadd.f32 %v2162, %v2168
        %v2171 = vadd.f32 %v2163, %v2168
        %v2172 = vpack.c.bf16 %v2171, %v2170
        %v2173 = vld [vmem:[%s674] sm:$0xff]
        %v2174 = vld [vmem:[%s674 + $0x8] sm:$0xff]
        %v2175 = vld [vmem:[%s674 + $0x10] sm:$0xff]
        %v2176 = vld [vmem:[%s674 + $0x18] sm:$0xff]
        %v2177 = vld [vmem:[%s674 + $0x20] sm:$0xff]
        %v2178 = vld [vmem:[%s674 + $0x28] sm:$0xff]
        %v2179 = vld [vmem:[%s674 + $0x30] sm:$0xff]
        %v2180 = vld [vmem:[%s674 + $0x38] sm:$0xff]
        %v2181 = vld [vmem:[%s674 + $0x40] sm:$0xff]
        %v2182 = vld [vmem:[%s674 + $0x48] sm:$0xff]
        %v2183 = vld [vmem:[%s674 + $0x50] sm:$0xff]
        %v2184 = vld [vmem:[%s674 + $0x58] sm:$0xff]
        %v2185 = vld [vmem:[%s674 + $0x60] sm:$0xff]
        %v2186 = vld [vmem:[%s674 + $0x68] sm:$0xff]
        %v2187 = vld [vmem:[%s674 + $0x70] sm:$0xff]
        %v2188 = vld [vmem:[%s674 + $0x78] sm:$0xff]
        %v2189 = vld [vmem:[%s782] sm:$0x3]
        %v2191 = vlaneseq
        %v2192 = vshrl.u32 %v2191, 7
        %v2193 = vsub.s32 0, %v2192
        %v2194 = vrot.slane %v2189, %v2193
        %v2195 = vlaneseq
        %v2196 = vshrl.u32 %v2195, 7
        %v2197 = vsub.s32 1, %v2196
        %v2198 = vrot.slane %v2189, %v2197
        %v2217 = vunpack.c.l.b16 %v2173
        %v2218 = vunpack.c.h.b16 %v2173
        %v2219 = vunpack.c.l.b16 %v2174
        %v2220 = vunpack.c.h.b16 %v2174
        %v2221 = vunpack.c.l.b16 %v2175
        %v2222 = vunpack.c.h.b16 %v2175
        %v2223 = vunpack.c.l.b16 %v2176
        %v2224 = vunpack.c.h.b16 %v2176
        %v2225 = vunpack.c.l.b16 %v2177
        %v2226 = vunpack.c.h.b16 %v2177
        %v2227 = vunpack.c.l.b16 %v2178
        %v2228 = vunpack.c.h.b16 %v2178
        %v2229 = vunpack.c.l.b16 %v2179
        %v2230 = vunpack.c.h.b16 %v2179
        %v2231 = vunpack.c.l.b16 %v2180
        %v2232 = vunpack.c.h.b16 %v2180
        %v2233 = vunpack.c.l.b16 %v2181
        %v2234 = vunpack.c.h.b16 %v2181
        %v2235 = vunpack.c.l.b16 %v2182
        %v2236 = vunpack.c.h.b16 %v2182
        %v2237 = vunpack.c.l.b16 %v2183
        %v2238 = vunpack.c.h.b16 %v2183
        %v2239 = vunpack.c.l.b16 %v2184
        %v2240 = vunpack.c.h.b16 %v2184
        %v2241 = vunpack.c.l.b16 %v2185
        %v2242 = vunpack.c.h.b16 %v2185
        %v2243 = vunpack.c.l.b16 %v2186
        %v2244 = vunpack.c.h.b16 %v2186
        %v2245 = vunpack.c.l.b16 %v2187
        %v2246 = vunpack.c.h.b16 %v2187
        %v2247 = vunpack.c.l.b16 %v2188
        %v2248 = vunpack.c.h.b16 %v2188
        %v2249 = vpack.c.b16 %v2219, %v2217
        %v2250 = vpack.c.b16 %v2220, %v2218
        %v2251 = vpack.c.b16 %v2223, %v2221
        %v2252 = vpack.c.b16 %v2224, %v2222
        %v2253 = vpack.c.b16 %v2227, %v2225
        %v2254 = vpack.c.b16 %v2228, %v2226
        %v2255 = vpack.c.b16 %v2231, %v2229
        %v2256 = vpack.c.b16 %v2232, %v2230
        %v2257 = vpack.c.b16 %v2235, %v2233
        %v2258 = vpack.c.b16 %v2236, %v2234
        %v2259 = vpack.c.b16 %v2239, %v2237
        %v2260 = vpack.c.b16 %v2240, %v2238
        %v2261 = vpack.c.b16 %v2243, %v2241
        %v2262 = vpack.c.b16 %v2244, %v2242
        %v2263 = vpack.c.b16 %v2247, %v2245
        %v2264 = vpack.c.b16 %v2248, %v2246
        %2281 = vmatprep.subr.bf16.mxu0 %v2250
        %2282 = vmatpush1.bf16.msra.mxu0 %v2249
        %2283 = vmatprep.subr.bf16.mxu0 %v2252
        %2284 = vmatpush1.bf16.msra.mxu0 %v2251
        %2285 = vmatprep.subr.bf16.mxu0 %v2254
        %2286 = vmatpush1.bf16.msra.mxu0 %v2253
        %2287 = vmatprep.subr.bf16.mxu0 %v2256
        %2288 = vmatpush1.bf16.msra.mxu0 %v2255
        %2289 = vmatprep.subr.bf16.mxu0 %v2258
        %2290 = vmatpush1.bf16.msra.mxu0 %v2257
        %2291 = vmatprep.subr.bf16.mxu0 %v2260
        %2292 = vmatpush1.bf16.msra.mxu0 %v2259
        %2293 = vmatprep.subr.bf16.mxu0 %v2262
        %2294 = vmatpush1.bf16.msra.mxu0 %v2261
        %2295 = vmatprep.subr.bf16.mxu0 %v2264
        %2296 = vmatpush1.bf16.msra.mxu0 %v2263
        %2297 = vmatprep.subr.bf16.mxu0 0
        %2298 = vmatpush1.bf16.msra.mxu0 0
        %2299 = vmatprep.subr.bf16.mxu0 0
        %2300 = vmatpush1.bf16.msra.mxu0 0
        %2301 = vmatprep.subr.bf16.mxu0 0
        %2302 = vmatpush1.bf16.msra.mxu0 0
        %2303 = vmatprep.subr.bf16.mxu0 0
        %2304 = vmatpush1.bf16.msra.mxu0 0
        %2305 = vmatprep.subr.bf16.mxu0 0
        %2306 = vmatpush1.bf16.msra.mxu0 0
        %2307 = vmatprep.subr.bf16.mxu0 0
        %2308 = vmatpush1.bf16.msra.mxu0 0
        %2309 = vmatprep.subr.bf16.mxu0 0
        %2310 = vmatpush1.bf16.msra.mxu0 0
        %2311 = vmatprep.subr.bf16.mxu0 0
        %2312 = vmatpush1.bf16.msra.mxu0 0
        %2313 = vmatprep.mubr.bf16.mxu0 0
        %2314 = vmatmul.mubr.bf16.gmra.mrb[0].mxu0 %v2172
        %v2315 = vpop.f32.mrb[0].mxu0
        %v2316 = vadd.f32 %v2194, %v2315
        %v2317 = vpop.f32.mrb[0].mxu0
        %v2318 = vadd.f32 %v2198, %v2317
        %v2319 = vpop.f32.mrb[0].mxu0
        %v2320 = vadd.f32 %v2194, %v2319
        %v2321 = vpop.f32.mrb[0].mxu0
        %v2322 = vadd.f32 %v2198, %v2321
        %2323 = vdwg.mxu0
        %v2324 = vmax.f32 %v2316, 0.0
        %v2325 = vmax.f32 %v2318, 0.0
        %v2326 = vmax.f32 %v2320, 0.0
        %v2327 = vmax.f32 %v2322, 0.0
        %v2328 = vpack.c.bf16 %v2326, %v2324
        %v2329 = vpack.c.bf16 %v2327, %v2325
        %v2330 = vld [vmem:[%s683] sm:$0xf]
        %v2331 = vld [vmem:[%s683 + $0x4] sm:$0xf]
        %v2332 = vld [vmem:[%s683 + $0x8] sm:$0xf]
        %v2333 = vld [vmem:[%s683 + $0xc] sm:$0xf]
        %v2334 = vld [vmem:[%s683 + $0x10] sm:$0xf]
        %v2335 = vld [vmem:[%s683 + $0x14] sm:$0xf]
        %v2336 = vld [vmem:[%s683 + $0x18] sm:$0xf]
        %v2337 = vld [vmem:[%s683 + $0x1c] sm:$0xf]
        %v2338 = vld [vmem:[%s683 + $0x20] sm:$0xf]
        %v2339 = vld [vmem:[%s683 + $0x24] sm:$0xf]
        %v2340 = vld [vmem:[%s683 + $0x28] sm:$0xf]
        %v2341 = vld [vmem:[%s683 + $0x2c] sm:$0xf]
        %v2342 = vld [vmem:[%s683 + $0x30] sm:$0xf]
        %v2343 = vld [vmem:[%s683 + $0x34] sm:$0xf]
        %v2344 = vld [vmem:[%s683 + $0x38] sm:$0xf]
        %v2345 = vld [vmem:[%s683 + $0x3c] sm:$0xf]
        %v2346 = vld [vmem:[%s683 + $0x40] sm:$0xf]
        %v2347 = vld [vmem:[%s683 + $0x44] sm:$0xf]
        %v2348 = vld [vmem:[%s683 + $0x48] sm:$0xf]
        %v2349 = vld [vmem:[%s683 + $0x4c] sm:$0xf]
        %v2350 = vld [vmem:[%s683 + $0x50] sm:$0xf]
        %v2351 = vld [vmem:[%s683 + $0x54] sm:$0xf]
        %v2352 = vld [vmem:[%s683 + $0x58] sm:$0xf]
        %v2353 = vld [vmem:[%s683 + $0x5c] sm:$0xf]
        %v2354 = vld [vmem:[%s683 + $0x60] sm:$0xf]
        %v2355 = vld [vmem:[%s683 + $0x64] sm:$0xf]
        %v2356 = vld [vmem:[%s683 + $0x68] sm:$0xf]
        %v2357 = vld [vmem:[%s683 + $0x6c] sm:$0xf]
        %v2358 = vld [vmem:[%s683 + $0x70] sm:$0xf]
        %v2359 = vld [vmem:[%s683 + $0x74] sm:$0xf]
        %v2360 = vld [vmem:[%s683 + $0x78] sm:$0xf]
        %v2361 = vld [vmem:[%s683 + $0x7c] sm:$0xf]
        %v2362 = vld [vmem:[%s785] sm:$0x1]
        %v2364 = vlaneseq
        %v2365 = vshrl.u32 %v2364, 7
        %v2366 = vsub.s32 0, %v2365
        %v2367 = vrot.slane %v2362, %v2366
        %v2401 = vunpack.c.l.b16 %v2330
        %v2402 = vunpack.c.l.b16 %v2331
        %v2403 = vunpack.c.l.b16 %v2332
        %v2404 = vunpack.c.l.b16 %v2333
        %v2405 = vunpack.c.l.b16 %v2334
        %v2406 = vunpack.c.l.b16 %v2335
        %v2407 = vunpack.c.l.b16 %v2336
        %v2408 = vunpack.c.l.b16 %v2337
        %v2409 = vunpack.c.l.b16 %v2338
        %v2410 = vunpack.c.l.b16 %v2339
        %v2411 = vunpack.c.l.b16 %v2340
        %v2412 = vunpack.c.l.b16 %v2341
        %v2413 = vunpack.c.l.b16 %v2342
        %v2414 = vunpack.c.l.b16 %v2343
        %v2415 = vunpack.c.l.b16 %v2344
        %v2416 = vunpack.c.l.b16 %v2345
        %v2417 = vunpack.c.l.b16 %v2346
        %v2418 = vunpack.c.l.b16 %v2347
        %v2419 = vunpack.c.l.b16 %v2348
        %v2420 = vunpack.c.l.b16 %v2349
        %v2421 = vunpack.c.l.b16 %v2350
        %v2422 = vunpack.c.l.b16 %v2351
        %v2423 = vunpack.c.l.b16 %v2352
        %v2424 = vunpack.c.l.b16 %v2353
        %v2425 = vunpack.c.l.b16 %v2354
        %v2426 = vunpack.c.l.b16 %v2355
        %v2427 = vunpack.c.l.b16 %v2356
        %v2428 = vunpack.c.l.b16 %v2357
        %v2429 = vunpack.c.l.b16 %v2358
        %v2430 = vunpack.c.l.b16 %v2359
        %v2431 = vunpack.c.l.b16 %v2360
        %v2432 = vunpack.c.l.b16 %v2361
        %v2433 = vpack.c.b16 %v2402, %v2401
        %v2434 = vpack.c.b16 %v2404, %v2403
        %v2435 = vpack.c.b16 %v2406, %v2405
        %v2436 = vpack.c.b16 %v2408, %v2407
        %v2437 = vpack.c.b16 %v2410, %v2409
        %v2438 = vpack.c.b16 %v2412, %v2411
        %v2439 = vpack.c.b16 %v2414, %v2413
        %v2440 = vpack.c.b16 %v2416, %v2415
        %v2441 = vpack.c.b16 %v2418, %v2417
        %v2442 = vpack.c.b16 %v2420, %v2419
        %v2443 = vpack.c.b16 %v2422, %v2421
        %v2444 = vpack.c.b16 %v2424, %v2423
        %v2445 = vpack.c.b16 %v2426, %v2425
        %v2446 = vpack.c.b16 %v2428, %v2427
        %v2447 = vpack.c.b16 %v2430, %v2429
        %v2448 = vpack.c.b16 %v2432, %v2431
        %2465 = vmatprep.subr.bf16.mxu0 0
        %2466 = vmatpush1.bf16.msra.mxu0 %v2433
        %2467 = vmatprep.subr.bf16.mxu0 0
        %2468 = vmatpush1.bf16.msra.mxu0 %v2434
        %2469 = vmatprep.subr.bf16.mxu0 0
        %2470 = vmatpush1.bf16.msra.mxu0 %v2435
        %2471 = vmatprep.subr.bf16.mxu0 0
        %2472 = vmatpush1.bf16.msra.mxu0 %v2436
        %2473 = vmatprep.subr.bf16.mxu0 0
        %2474 = vmatpush1.bf16.msra.mxu0 %v2437
        %2475 = vmatprep.subr.bf16.mxu0 0
        %2476 = vmatpush1.bf16.msra.mxu0 %v2438
        %2477 = vmatprep.subr.bf16.mxu0 0
        %2478 = vmatpush1.bf16.msra.mxu0 %v2439
        %2479 = vmatprep.subr.bf16.mxu0 0
        %2480 = vmatpush1.bf16.msra.mxu0 %v2440
        %2481 = vmatprep.subr.bf16.mxu0 0
        %2482 = vmatpush1.bf16.msra.mxu0 %v2441
        %2483 = vmatprep.subr.bf16.mxu0 0
        %2484 = vmatpush1.bf16.msra.mxu0 %v2442
        %2485 = vmatprep.subr.bf16.mxu0 0
        %2486 = vmatpush1.bf16.msra.mxu0 %v2443
        %2487 = vmatprep.subr.bf16.mxu0 0
        %2488 = vmatpush1.bf16.msra.mxu0 %v2444
        %2489 = vmatprep.subr.bf16.mxu0 0
        %2490 = vmatpush1.bf16.msra.mxu0 %v2445
        %2491 = vmatprep.subr.bf16.mxu0 0
        %2492 = vmatpush1.bf16.msra.mxu0 %v2446
        %2493 = vmatprep.subr.bf16.mxu0 0
        %2494 = vmatpush1.bf16.msra.mxu0 %v2447
        %2495 = vmatprep.subr.bf16.mxu0 0
        %2496 = vmatpush1.bf16.msra.mxu0 %v2448
        %2497 = vmatprep.mubr.bf16.mxu0 %v2329
        %2498 = vmatmul.mubr.bf16.gmra.mrb[0].mxu0 %v2328
        %v2499 = vpop.f32.mrb[0].mxu0
        %v2500 = vadd.f32 %v2367, %v2499
        %v2501 = vpop.f32.mrb[0].mxu0
        %v2502 = vpop.f32.mrb[0].mxu0
        %v2503 = vadd.f32 %v2367, %v2502
        %v2504 = vpop.f32.mrb[0].mxu0
        %2505 = vdwg.mxu0
        %v2506 = vadd.f32 %v2170, %v2500
        %v2507 = vadd.f32 %v2171, %v2503
        %v2508 = vld [vmem:[%s794] sm:$0x1]
        %v2509 = vld [vmem:[%s797] sm:$0x1]
        %2510 = vadd.xlane.f32.xlu0 %v2506
        %v2511 = vpop.xlane.xlu0 %2510
        %2512 = vadd.xlane.f32.xlu0 %v2507
        %v2513 = vpop.xlane.xlu0 %2512
        %v2514 = vmul.f32 %v2511, %v2137
        %v2515 = vmul.f32 %v2513, %v2137
        %v2516 = vsub.f32 %v2506, %v2514
        %v2517 = vsub.f32 %v2507, %v2515
        %v2518 = vmul.f32 %v2516, %v2516
        %v2519 = vmul.f32 %v2517, %v2517
        %2520 = vadd.xlane.f32.xlu0 %v2518
        %v2521 = vpop.xlane.xlu0 %2520
        %2522 = vadd.xlane.f32.xlu0 %v2519
        %v2523 = vpop.xlane.xlu0 %2522
        %v2524 = vmul.f32 %v2521, %v2137
        %v2525 = vmul.f32 %v2523, %v2137
        %v2526 = vadd.f32 %v2524, 1e-05
        %v2527 = vadd.f32 %v2525, 1e-05
        %v2528 = vrsqrt.pop %v2526
        %v2529 = vrsqrt.pop %v2527
        %v2530 = vmul.f32 %v2516, %v2528
        %v2531 = vmul.f32 %v2517, %v2529
        %v2533 = vlaneseq
        %v2534 = vshrl.u32 %v2533, 7
        %v2535 = vsub.s32 0, %v2534
        %v2536 = vrot.slane %v2508, %v2535
        %v2538 = vmul.f32 %v2530, %v2536
        %v2539 = vmul.f32 %v2531, %v2536
        %v2541 = vlaneseq
        %v2542 = vshrl.u32 %v2541, 7
        %v2543 = vsub.s32 0, %v2542
        %v2544 = vrot.slane %v2509, %v2543
        %v2546 = vadd.f32 %v2538, %v2544
        %v2547 = vadd.f32 %v2539, %v2544
        %2548 = vst [vmem:[#allocation2] sm:$0xff] %v2546
        %2549 = vst [vmem:[#allocation2 + $0x8] sm:$0xff] %v2547
        %p2550 = scmp.eq.s32.totalorder %s30, 1
        // Predicated region
        $region117: #{tpu_custom_call.1} parent=83 // pred_check
          %p2551 = pneg %p2550
        $region118: #{tpu_custom_call.1} parent=83 // pred_check_branch
          %2553 = sbr.rel (%p2551) target = $region120
        $region119: #{tpu_custom_call.1} parent=83 // pred_region
          %v2554 = vpack.c.bf16 %v2547, %v2546
          %v2555 = vld [vmem:[#allocation12] sm:$0xf]
          %v2556 = vld [vmem:[#allocation12 + $0x4] sm:$0xf]
          %v2557 = vld [vmem:[#allocation12 + $0x8] sm:$0xf]
          %v2558 = vld [vmem:[#allocation12 + $0xc] sm:$0xf]
          %v2559 = vld [vmem:[#allocation12 + $0x10] sm:$0xf]
          %v2560 = vld [vmem:[#allocation12 + $0x14] sm:$0xf]
          %v2561 = vld [vmem:[#allocation12 + $0x18] sm:$0xf]
          %v2562 = vld [vmem:[#allocation12 + $0x1c] sm:$0xf]
          %v2563 = vld [vmem:[#allocation12 + $0x20] sm:$0xf]
          %v2564 = vld [vmem:[#allocation12 + $0x24] sm:$0xf]
          %v2565 = vld [vmem:[#allocation12 + $0x28] sm:$0xf]
          %v2566 = vld [vmem:[#allocation12 + $0x2c] sm:$0xf]
          %v2567 = vld [vmem:[#allocation12 + $0x30] sm:$0xf]
          %v2568 = vld [vmem:[#allocation12 + $0x34] sm:$0xf]
          %v2569 = vld [vmem:[#allocation12 + $0x38] sm:$0xf]
          %v2570 = vld [vmem:[#allocation12 + $0x3c] sm:$0xf]
          %v2571 = vld [vmem:[%s15] sm:$0x1]
          %v2573 = vlaneseq
          %v2574 = vshrl.u32 %v2573, 7
          %v2575 = vsub.s32 0, %v2574
          %v2576 = vrot.slane %v2571, %v2575
          %v2594 = vunpack.c.l.b16 %v2555
          %v2595 = vunpack.c.l.b16 %v2556
          %v2596 = vunpack.c.l.b16 %v2557
          %v2597 = vunpack.c.l.b16 %v2558
          %v2598 = vunpack.c.l.b16 %v2559
          %v2599 = vunpack.c.l.b16 %v2560
          %v2600 = vunpack.c.l.b16 %v2561
          %v2601 = vunpack.c.l.b16 %v2562
          %v2602 = vunpack.c.l.b16 %v2563
          %v2603 = vunpack.c.l.b16 %v2564
          %v2604 = vunpack.c.l.b16 %v2565
          %v2605 = vunpack.c.l.b16 %v2566
          %v2606 = vunpack.c.l.b16 %v2567
          %v2607 = vunpack.c.l.b16 %v2568
          %v2608 = vunpack.c.l.b16 %v2569
          %v2609 = vunpack.c.l.b16 %v2570
          %v2610 = vpack.c.b16 %v2595, %v2594
          %v2611 = vpack.c.b16 %v2597, %v2596
          %v2612 = vpack.c.b16 %v2599, %v2598
          %v2613 = vpack.c.b16 %v2601, %v2600
          %v2614 = vpack.c.b16 %v2603, %v2602
          %v2615 = vpack.c.b16 %v2605, %v2604
          %v2616 = vpack.c.b16 %v2607, %v2606
          %v2617 = vpack.c.b16 %v2609, %v2608
          %2626 = vmatprep.subr.bf16.mxu0 0
          %2627 = vmatpush1.bf16.msra.mxu0 %v2610
          %2628 = vmatprep.subr.bf16.mxu0 0
          %2629 = vmatpush1.bf16.msra.mxu0 %v2611
          %2630 = vmatprep.subr.bf16.mxu0 0
          %2631 = vmatpush1.bf16.msra.mxu0 %v2612
          %2632 = vmatprep.subr.bf16.mxu0 0
          %2633 = vmatpush1.bf16.msra.mxu0 %v2613
          %2634 = vmatprep.subr.bf16.mxu0 0
          %2635 = vmatpush1.bf16.msra.mxu0 %v2614
          %2636 = vmatprep.subr.bf16.mxu0 0
          %2637 = vmatpush1.bf16.msra.mxu0 %v2615
          %2638 = vmatprep.subr.bf16.mxu0 0
          %2639 = vmatpush1.bf16.msra.mxu0 %v2616
          %2640 = vmatprep.subr.bf16.mxu0 0
          %2641 = vmatpush1.bf16.msra.mxu0 %v2617
          %2642 = vmatprep.subr.bf16.mxu0 0
          %2643 = vmatpush1.bf16.msra.mxu0 0
          %2644 = vmatprep.subr.bf16.mxu0 0
          %2645 = vmatpush1.bf16.msra.mxu0 0
          %2646 = vmatprep.subr.bf16.mxu0 0
          %2647 = vmatpush1.bf16.msra.mxu0 0
          %2648 = vmatprep.subr.bf16.mxu0 0
          %2649 = vmatpush1.bf16.msra.mxu0 0
          %2650 = vmatprep.subr.bf16.mxu0 0
          %2651 = vmatpush1.bf16.msra.mxu0 0
          %2652 = vmatprep.subr.bf16.mxu0 0
          %2653 = vmatpush1.bf16.msra.mxu0 0
          %2654 = vmatprep.subr.bf16.mxu0 0
          %2655 = vmatpush1.bf16.msra.mxu0 0
          %2656 = vmatprep.subr.bf16.mxu0 0
          %2657 = vmatpush1.bf16.msra.mxu0 0
          %2658 = vmatprep.mubr.bf16.mxu0 0
          %2659 = vmatmul.mubr.bf16.gmra.mrb[0].mxu0 %v2554
          %v2660 = vpop.f32.mrb[0].mxu0
          %v2661 = vadd.f32 %v2576, %v2660
          %v2662 = vpop.f32.mrb[0].mxu0
          %v2663 = vpop.f32.mrb[0].mxu0
          %v2664 = vadd.f32 %v2576, %v2663
          %v2665 = vpop.f32.mrb[0].mxu0
          %2666 = vdwg.mxu0
          %2667 = vst [vmem:[#allocation13] sm:$0xff] %v2661
          %2668 = vst [vmem:[#allocation13 + $0x8] sm:$0xff] %v2664
        $region120: #{tpu_custom_call.1} parent=83 // pred_fallthru
          _
        // Predicated region
        $region121: #{tpu_custom_call.1} parent=83 // pred_check
          %p2669 = pneg %p439
        $region122: #{tpu_custom_call.1} parent=83 // pred_check_branch
          %2671 = sbr.rel (%p2669) target = $region124
        $region123: #{tpu_custom_call.1} parent=83 // pred_region
          %s2673 = ssub.s32 256, 256
          %2674 = vsyncadd [#allocation5], %s2673
          %s2675 = sshll.u32 [#allocation13], 4
          %s2676 = int_to_ptr.vmem [resolvable:$true] %s2675
          %2681 = dma.vmem_to_hbm [thread:$0]  %s2676, 256, %s16, [#allocation5], 128, 128, 8
        $region124: #{tpu_custom_call.1} parent=83 // pred_fallthru
          _
        // Predicated region
        $region125: #{tpu_custom_call.1} parent=83 // pred_check
          %p2682 = pneg %p439
        $region126: #{tpu_custom_call.1} parent=83 // pred_check_branch
          %2684 = sbr.rel (%p2682) target = $region128
        $region127: #{tpu_custom_call.1} parent=83 // pred_region
          %2685 = dma.done [#allocation5], 256
        $region128: #{tpu_custom_call.1} parent=83 // pred_fallthru
          _
      $region84: #{tpu_custom_call.1} parent=5 // pred_fallthru
        _
      %p2686 = scmp.le.s32.totalorder 2, %s25
      // Predicated region
      $region129: #{tpu_custom_call.1} parent=5 // pred_check
        %p2687 = pneg %p2686
      $region130: #{tpu_custom_call.1} parent=5 // pred_check_branch
        %2689 = sbr.rel (%p2687) target = $region132
      $region131: #{tpu_custom_call.1} parent=5 // pred_region
        %s2690 = ssub.s32 %s25, 2
      $region132: #{tpu_custom_call.1} parent=5 // pred_fallthru
        _
    $region6: #{tpu_custom_call.1} parent=1 // loop_footer
      %s29 = sadd.s32 1, %s25
    $region7: #{tpu_custom_call.1} parent=1 // loop_footer_branch
      %24 = sbr.rel target = $region3
    $region8: #{tpu_custom_call.1} parent=1 // loop_exit
      _
    %2691 = vsyncpa [#allocation4], 1
    %s2692 = scalar_lea.sflag [#allocation4], 1
    %2693 = vsyncpa %s2692, 1
    %2694 = vsyncpa [#allocation7], 1
    %2695 = vsyncpa [#allocation5], 1
    %s2696 = scalar_lea.sflag [#allocation5], 1
    %2697 = vsyncpa %s2696, 1

</llo_original>
